<compile_context>
chip_gen: v7x
topology: tpu7x:2x2x1
jax: 0.10.0
libtpu: 0.0.40
codegen_flags: <defaults>
</compile_context>

<pallas_src>
import functools

import jax
import jax.numpy as jnp
from jax.experimental import pallas as pl
from jax.experimental.pallas import tpu as pltpu


def _round_up(x, m):
    return ((x + m - 1) // m) * m


def _vmem_capacity_bytes():
    """Per-core VMEM capacity; conservative 64 MiB fallback (v7x per-TC)."""
    try:
        info = pltpu.get_tpu_info()
        cap = int(getattr(info, "vmem_capacity_bytes", 0) or 0)
        if cap > 0:
            return min(cap, 128 * 1024 * 1024)
    except Exception:
        pass
    return 64 * 1024 * 1024


def _default_split_directions():
    """Direction-parallel grid only pays off on chips with >1 TensorCore."""
    try:
        kind = jax.devices()[0].device_kind.lower()
    except Exception:
        return False
    return any(tag in kind for tag in ("v7", "7x", "v5p", "v4"))


def _pad_gate_axis(w, h, hp):
    """Pad the trailing (4*h) gate axis to (4*hp), padding each gate block."""
    if hp == h:
        return w
    lead = w.shape[:-1]
    w = w.reshape(lead + (4, h))
    pad = [(0, 0)] * len(lead) + [(0, 0), (0, hp - h)]
    w = jnp.pad(w, pad)
    return w.reshape(lead + (4 * hp,))


# ----------------------------------------------------------------------------
# In-kernel LSTM cell math (f32).
# ----------------------------------------------------------------------------
def _sigmoid_via_tanh(x):
    # sigmoid(x) == 0.5 * tanh(0.5 * x) + 0.5  -> one EUP op per gate.
    return 0.5 * jnp.tanh(0.5 * x) + 0.5


def _lstm_cell(pre, c, hp):
    """pre: (B, 4*hp) f32 gate pre-activations, c: (B, hp) f32 cell state."""
    i_g = _sigmoid_via_tanh(pre[:, 0 * hp:1 * hp])
    f_g = _sigmoid_via_tanh(pre[:, 1 * hp:2 * hp])
    g_g = jnp.tanh(pre[:, 2 * hp:3 * hp])
    o_g = _sigmoid_via_tanh(pre[:, 3 * hp:4 * hp])
    c_new = f_g * c + i_g * g_g
    h_new = o_g * jnp.tanh(c_new)
    return h_new, c_new


# ----------------------------------------------------------------------------
# Fused kernel (single-TC chips): both directions advance in one time loop per
# grid step.  grid = (time-block,), h/c carries live in registers inside the
# tile and in VMEM scratch across tiles.
# ----------------------------------------------------------------------------
def _bilstm_fused_kernel(gf_ref, gr_ref, whf_ref, whr_ref,
                         yf_ref, yr_ref, hnf_ref, hnr_ref,
                         h_sc, c_sc,
                         *, t_tile, n_blocks, t_real, hp, unroll):
    pt = pl.program_id(0)

    @pl.when(pt == 0)
    def _():
        h_sc[...] = jnp.zeros_like(h_sc)
        c_sc[...] = jnp.zeros_like(c_sc)

    whf = whf_ref[...]
    whr = whr_ref[...]
    base_f = pt * t_tile                     # forward block start (orig time)
    base_r = (n_blocks - 1 - pt) * t_tile    # reverse block start (orig time)

    carry0 = (h_sc[0], c_sc[0], h_sc[1], c_sc[1])

    def step(lt, carry):
        hf, cf, hr, cr = carry
        rlt = t_tile - 1 - lt
        valid_f = (base_f + lt) < t_real
        valid_r = (base_r + rlt) < t_real

        pre_f = jnp.dot(hf, whf, preferred_element_type=jnp.float32)
        pre_f = pre_f + gf_ref[lt].astype(jnp.float32)
        pre_r = jnp.dot(hr, whr, preferred_element_type=jnp.float32)
        pre_r = pre_r + gr_ref[rlt].astype(jnp.float32)

        hf_new, cf_new = _lstm_cell(pre_f, cf, hp)
        hr_new, cr_new = _lstm_cell(pre_r, cr, hp)

        hf = jnp.where(valid_f, hf_new.astype(hf.dtype), hf)
        cf = jnp.where(valid_f, cf_new, cf)
        hr = jnp.where(valid_r, hr_new.astype(hr.dtype), hr)
        cr = jnp.where(valid_r, cr_new, cr)

        yf_ref[lt] = hf
        yr_ref[rlt] = hr
        return (hf, cf, hr, cr)

    hf, cf, hr, cr = jax.lax.fori_loop(0, t_tile, step, carry0, unroll=unroll)

    h_sc[0] = hf
    c_sc[0] = cf
    h_sc[1] = hr
    c_sc[1] = cr

    @pl.when(pt == n_blocks - 1)
    def _():
        hnf_ref[...] = hf.astype(hnf_ref.dtype)
        hnr_ref[...] = hr.astype(hnr_ref.dtype)


# ----------------------------------------------------------------------------
# Split kernel (multi-TC chips, e.g. v7x): grid = (direction, time-block) with
# the direction axis "parallel" so each TensorCore owns one direction.
# ----------------------------------------------------------------------------
def _bilstm_split_kernel(gates_ref, whh_ref, y_ref, hn_ref, h_sc, c_sc,
                         *, t_tile, n_blocks, t_real, hp, unroll):
    d = pl.program_id(0)           # 0 = forward, 1 = reverse
    pt = pl.program_id(1)          # time-block counter (processing order)

    @pl.when(pt == 0)
    def _():
        h_sc[...] = jnp.zeros_like(h_sc)
        c_sc[...] = jnp.zeros_like(c_sc)

    block_idx = jnp.where(d == 0, pt, n_blocks - 1 - pt)
    whh = whh_ref[...]

    def step(lt, carry):
        h, c = carry
        ridx = jnp.where(d == 0, lt, t_tile - 1 - lt)
        valid = (block_idx * t_tile + ridx) < t_real

        pre = jnp.dot(h, whh, preferred_element_type=jnp.float32)
        pre = pre + gates_ref[ridx].astype(jnp.float32)
        h_new, c_new = _lstm_cell(pre, c, hp)

        h = jnp.where(valid, h_new.astype(h.dtype), h)
        c = jnp.where(valid, c_new, c)
        y_ref[ridx] = h
        return (h, c)

    h, c = jax.lax.fori_loop(0, t_tile, step, (h_sc[...], c_sc[...]),
                             unroll=unroll)
    h_sc[...] = h
    c_sc[...] = c

    @pl.when(pt == n_blocks - 1)
    def _():
        hn_ref[...] = h.astype(hn_ref.dtype)


def _pick_t_tile(t_total, bp, hp, itemsize, split_directions):
    """Largest time tile whose double-buffered streams fit the VMEM budget."""
    cap = _vmem_capacity_bytes()
    dirs = 1 if split_directions else 2
    budget = max(int(cap * 0.5), 24 * 1024 * 1024)
    fixed = (2 * 2 * hp * 4 * hp * itemsize          # W_hh (both dirs, 2 buf)
             + 2 * bp * hp * (itemsize + 4)          # h/c scratch
             + 2 * 2 * bp * hp * 4                   # resident hn outputs
             + (2 << 20))                            # compiler headroom
    stream_budget = max(budget - fixed, 2 << 20)
    per_step = 2 * dirs * bp * (4 * hp + hp) * itemsize  # gates + y, x2 buf
    t = max(int(stream_budget // per_step), 8)
    t_cap = 256 if cap >= (96 << 20) else 128
    return int(min(t, t_cap, max(int(t_total), 1)))


def _bilstm_layer(gates, whh_s, *, t_real, t_tile, out_dtype, split_directions):
    """gates: (2, Tpad, Bp, 4*Hp), whh_s: (2, Hp, 4*Hp).
    Returns y: (2, Tpad, Bp, Hp) in out_dtype, hn: (2, Bp, Hp) f32."""
    _, t_pad, bp, h4 = gates.shape
    hp = h4 // 4
    nb = t_pad // t_tile
    unroll = True if t_tile <= 16 else 8

    g_isz = gates.dtype.itemsize
    y_isz = jnp.dtype(out_dtype).itemsize
    w_isz = whh_s.dtype.itemsize
    dirs = 1 if split_directions else 2
    vmem_est = (2 * dirs * t_tile * bp * (4 * hp * g_isz + hp * y_isz)  # streams
                + 2 * 2 * hp * 4 * hp * w_isz                          # W_hh
                + 2 * bp * hp * (y_isz + 4)                            # scratch
                + 2 * 2 * bp * hp * 4)                                 # hn
    cap = _vmem_capacity_bytes()
    vmem_limit = int(min(int(cap * 0.75),
                         max(32 * 1024 * 1024, vmem_est + (8 << 20))))

    if split_directions:
        kernel = functools.partial(
            _bilstm_split_kernel, t_tile=t_tile, n_blocks=nb, t_real=t_real,
            hp=hp, unroll=unroll)

        def time_map(dd, tt):
            return (dd, jnp.where(dd == 0, tt, nb - 1 - tt), 0, 0)

        y, hn = pl.pallas_call(
            kernel,
            grid=(2, nb),
            out_shape=(
                jax.ShapeDtypeStruct((2, t_pad, bp, hp), out_dtype),
                jax.ShapeDtypeStruct((2, bp, hp), jnp.float32),
            ),
            in_specs=[
                pl.BlockSpec((None, t_tile, bp, h4), time_map),
                pl.BlockSpec((None, hp, h4), lambda dd, tt: (dd, 0, 0)),
            ],
            out_specs=(
                pl.BlockSpec((None, t_tile, bp, hp), time_map),
                pl.BlockSpec((None, bp, hp), lambda dd, tt: (dd, 0, 0)),
            ),
            scratch_shapes=[
                pltpu.VMEM((bp, hp), out_dtype),     # h carry (compute dtype)
                pltpu.VMEM((bp, hp), jnp.float32),   # c carry (f32)
            ],
            compiler_params=pltpu.CompilerParams(
                dimension_semantics=("parallel", "arbitrary"),
                vmem_limit_bytes=vmem_limit,
            ),
        )(gates, whh_s)
        return y, hn

    # Fused path: both directions in one kernel instance per time block.  The
    # same stacked gates / W_hh arrays are passed twice with per-direction
    # index maps (forward walks time blocks 0..nb-1, reverse nb-1..0).
    kernel = functools.partial(
        _bilstm_fused_kernel, t_tile=t_tile, n_blocks=nb, t_real=t_real,
        hp=hp, unroll=unroll)

    yf, yr, hnf, hnr = pl.pallas_call(
        kernel,
        grid=(nb,),
        out_shape=(
            jax.ShapeDtypeStruct((t_pad, bp, hp), out_dtype),
            jax.ShapeDtypeStruct((t_pad, bp, hp), out_dtype),
            jax.ShapeDtypeStruct((bp, hp), jnp.float32),
            jax.ShapeDtypeStruct((bp, hp), jnp.float32),
        ),
        in_specs=[
            pl.BlockSpec((None, t_tile, bp, h4), lambda tt: (0, tt, 0, 0)),
            pl.BlockSpec((None, t_tile, bp, h4),
                         lambda tt: (1, nb - 1 - tt, 0, 0)),
            pl.BlockSpec((None, hp, h4), lambda tt: (0, 0, 0)),
            pl.BlockSpec((None, hp, h4), lambda tt: (1, 0, 0)),
        ],
        out_specs=(
            pl.BlockSpec((t_tile, bp, hp), lambda tt: (tt, 0, 0)),
            pl.BlockSpec((t_tile, bp, hp), lambda tt: (nb - 1 - tt, 0, 0)),
            pl.BlockSpec((bp, hp), lambda tt: (0, 0)),
            pl.BlockSpec((bp, hp), lambda tt: (0, 0)),
        ),
        scratch_shapes=[
            pltpu.VMEM((2, bp, hp), out_dtype),      # h carries (fwd, rev)
            pltpu.VMEM((2, bp, hp), jnp.float32),    # c carries (fwd, rev)
        ],
        compiler_params=pltpu.CompilerParams(
            dimension_semantics=("arbitrary",),
            vmem_limit_bytes=vmem_limit,
        ),
    )(gates, gates, whh_s, whh_s)

    y = jnp.stack((yf, yr), axis=0)
    hn = jnp.stack((hnf, hnr), axis=0)
    return y, hn


def _prep_layer_weights(fwd_p, rev_p, h, hp, in_dim, in_dim_padded, cdtype):
    """Stack + pad the per-direction weights of one layer.

    Returns wih_s (2, in_dim_padded, 4*Hp) cdtype, whh_s (2, Hp, 4*Hp) cdtype,
    bias_s (2, 4*Hp) f32 (b_ih + b_hh, folded into the input projection)."""
    wih_l, whh_l, b_l = [], [], []
    for p in (fwd_p, rev_p):
        wih = _pad_gate_axis(jnp.transpose(p["w_ih"]).astype(jnp.float32), h, hp)
        wih = jnp.pad(wih, ((0, in_dim_padded - in_dim), (0, 0)))
        whh = _pad_gate_axis(jnp.transpose(p["w_hh"]).astype(jnp.float32), h, hp)
        whh = jnp.pad(whh, ((0, hp - h), (0, 0)))
        b = _pad_gate_axis((p["b_ih"] + p["b_hh"]).astype(jnp.float32), h, hp)
        wih_l.append(wih)
        whh_l.append(whh)
        b_l.append(b)
    return (jnp.stack(wih_l).astype(cdtype),
            jnp.stack(whh_l).astype(cdtype),
            jnp.stack(b_l))


def _encoder_impl(params, inputs, compute_dtype, t_tile, split_directions):
    fwd_params = params["forward_lstm"]
    rev_params = params["reverse_lstm"]
    num_layers = len(fwd_params)
    b, t, d_in = inputs.shape
    h = fwd_params[0]["w_hh"].shape[1]

    cdtype = jnp.dtype(compute_dtype)
    if split_directions is None:
        split_directions = _default_split_directions()
    bp = _round_up(b, 16 if cdtype.itemsize < 4 else 8)   # bf16 packs 16 rows
    hp = _round_up(h, 128)                                # lane-aligned gates
    if t_tile is None:
        t_tile = _pick_t_tile(t, bp, hp, cdtype.itemsize, split_directions)
    t_tile = max(1, int(t_tile))
    t_pad = _round_up(t, t_tile)

    # Time-major once for the whole encoder; zero-pad T and B.  Padded
    # timesteps are skipped inside the kernel, padded batch rows are sliced
    # off at the end; padded hidden columns stay exactly zero.
    x_tm = jnp.transpose(inputs, (1, 0, 2)).astype(jnp.float32)    # (T, B, D)
    x_tm = jnp.pad(x_tm, ((0, t_pad - t), (0, bp - b), (0, 0)))

    prec = jax.lax.Precision.HIGHEST if cdtype == jnp.float32 else None
    fwd_pooled, rev_pooled = [], []
    y = None
    for layer in range(num_layers):
        in_dim = d_in if layer == 0 else h
        in_dim_p = d_in if layer == 0 else hp
        wih_s, whh_s, bias_s = _prep_layer_weights(
            fwd_params[layer], rev_params[layer], h, hp, in_dim, in_dim_p,
            cdtype)

        # Hoisted input projection: one large batched GEMM over all timesteps
        # (bias folded in here, nothing broadcast inside the recurrence).
        if layer == 0:
            gates = jnp.einsum("tbi,dio->dtbo", x_tm.astype(cdtype), wih_s,
                               preferred_element_type=jnp.float32,
                               precision=prec)
        else:
            gates = jnp.einsum("dtbi,dio->dtbo", y, wih_s,
                               preferred_element_type=jnp.float32,
                               precision=prec)
        gates = (gates + bias_s[:, None, None, :]).astype(cdtype)

        # Dropout between layers is identity in eval mode -> omitted.
        y, hn = _bilstm_layer(gates, whh_s, t_real=t, t_tile=t_tile,
                              out_dtype=cdtype,
                              split_directions=split_directions)
        fwd_pooled.append(hn[0, :b, :h])
        rev_pooled.append(hn[1, :b, :h])

    out_fwd = y[0, :t, :b, :h]
    out_rev = y[1, :t, :b, :h]          # already in original time order
    output = jnp.concatenate((out_fwd, out_rev), axis=-1)
    output = jnp.transpose(output, (1, 0, 2)).astype(jnp.float32)   # (B, T, 2H)

    # torch: pooled = stack(fwd h_n + rev h_n, dim=3).squeeze(0) -> (B, H, 2L)
    pooled = jnp.stack(fwd_pooled + rev_pooled, axis=2)
    return output, pooled


@functools.partial(jax.jit,
                   static_argnames=("compute_dtype", "t_tile",
                                    "split_directions"))
def protein_lstm_encoder(params, inputs, compute_dtype=jnp.bfloat16,
                         t_tile=None, split_directions=None):
    """inputs: (B, T, input_size) -> (output (B, T, 2H), pooled (B, H, 2L))."""
    return _encoder_impl(params, inputs, compute_dtype, t_tile,
                         split_directions)


# ----------------------------------------------------------------------------
# Parameter construction (deterministic, PyTorch-style uniform init).
# ----------------------------------------------------------------------------
def make_lstm_params(key, input_size, hidden_size):
    k = 1.0 / jnp.sqrt(hidden_size)
    ks = jax.random.split(key, 4)
    return {
        "w_ih": jax.random.uniform(ks[0], (4 * hidden_size, input_size),
                                   jnp.float32, -k, k),
        "w_hh": jax.random.uniform(ks[1], (4 * hidden_size, hidden_size),
                                   jnp.float32, -k, k),
        "b_ih": jax.random.uniform(ks[2], (4 * hidden_size,),
                                   jnp.float32, -k, k),
        "b_hh": jax.random.uniform(ks[3], (4 * hidden_size,),
                                   jnp.float32, -k, k),
    }


def make_encoder_params(key, input_size, hidden_size, num_hidden_layers):
    fkeys = jax.random.split(jax.random.fold_in(key, 0), num_hidden_layers)
    rkeys = jax.random.split(jax.random.fold_in(key, 1), num_hidden_layers)
    fwd, rev = [], []
    for layer in range(num_hidden_layers):
        d_in = input_size if layer == 0 else hidden_size
        fwd.append(make_lstm_params(fkeys[layer], d_in, hidden_size))
        rev.append(make_lstm_params(rkeys[layer], d_in, hidden_size))
    return {"forward_lstm": fwd, "reverse_lstm": rev}


# ----------------------------------------------------------------------------
# Pure-JAX f32 reference (mirrors the PyTorch module) for correctness checks.
# ----------------------------------------------------------------------------
def _lstm_layer_ref(x, w_ih, w_hh, b_ih, b_hh):
    B, T, D = x.shape
    H = w_hh.shape[1]
    hi = jax.lax.Precision.HIGHEST

    def step(carry, x_t):
        h, c = carry
        gates = (jnp.dot(x_t, w_ih.T, precision=hi)
                 + jnp.dot(h, w_hh.T, precision=hi) + b_ih + b_hh)
        i = jax.nn.sigmoid(gates[:, 0 * H:1 * H])
        f = jax.nn.sigmoid(gates[:, 1 * H:2 * H])
        g = jnp.tanh(gates[:, 2 * H:3 * H])
        o = jax.nn.sigmoid(gates[:, 3 * H:4 * H])
        c = f * c + i * g
        h = o * jnp.tanh(c)
        return (h, c), h

    init = (jnp.zeros((B, H), jnp.float32), jnp.zeros((B, H), jnp.float32))
    (h_n, _), ys = jax.lax.scan(step, init, jnp.transpose(x, (1, 0, 2)))
    return jnp.transpose(ys, (1, 0, 2)), h_n


def _encoder_ref(params, inputs):
    fwd_out = inputs
    fwd_pooled = []
    for lp in params["forward_lstm"]:
        fwd_out, h_n = _lstm_layer_ref(fwd_out, lp["w_ih"], lp["w_hh"],
                                       lp["b_ih"], lp["b_hh"])
        fwd_pooled.append(h_n)
    rev_out = jnp.flip(inputs, axis=1)
    rev_pooled = []
    for lp in params["reverse_lstm"]:
        rev_out, h_n = _lstm_layer_ref(rev_out, lp["w_ih"], lp["w_hh"],
                                       lp["b_ih"], lp["b_hh"])
        rev_pooled.append(h_n)
    rev_out = jnp.flip(rev_out, axis=1)
    output = jnp.concatenate((fwd_out, rev_out), axis=2)
    pooled = jnp.stack(fwd_pooled + rev_pooled, axis=2)
    return output, pooled


if __name__ == "__main__":
    # Small shapes consistent with the module (scaled-down config).
    batch, seq_len = 2, 12
    input_size, hidden_size, num_hidden_layers = 32, 32, 3

    key = jax.random.PRNGKey(0)
    pkey, xkey = jax.random.split(key)
    params = make_encoder_params(pkey, input_size, hidden_size,
                                 num_hidden_layers)
    inputs = jax.random.normal(xkey, (batch, seq_len, input_size), jnp.float32)

    ref_out, ref_pooled = _encoder_ref(params, inputs)

    # 1) Strict f32 check, fused-direction kernel (v5e/v6e path), small time
    #    tile to exercise multi-block streaming, time padding (15 > 12) and
    #    the reversed-order index maps.
    out_a, pooled_a = jax.block_until_ready(
        protein_lstm_encoder(params, inputs, compute_dtype=jnp.float32,
                             t_tile=5, split_directions=False))
    assert out_a.shape == (batch, seq_len, 2 * hidden_size), out_a.shape
    assert pooled_a.shape == (batch, hidden_size, 2 * num_hidden_layers), \
        pooled_a.shape
    assert jnp.allclose(out_a, ref_out, atol=5e-3, rtol=5e-3), \
        float(jnp.max(jnp.abs(out_a - ref_out)))
    assert jnp.allclose(pooled_a, ref_pooled, atol=5e-3, rtol=5e-3), \
        float(jnp.max(jnp.abs(pooled_a - ref_pooled)))

    # 2) Strict f32 check, direction-parallel kernel (v7x path).
    out_b, pooled_b = jax.block_until_ready(
        protein_lstm_encoder(params, inputs, compute_dtype=jnp.float32,
                             t_tile=5, split_directions=True))
    assert jnp.allclose(out_b, ref_out, atol=5e-3, rtol=5e-3), \
        float(jnp.max(jnp.abs(out_b - ref_out)))
    assert jnp.allclose(pooled_b, ref_pooled, atol=5e-3, rtol=5e-3), \
        float(jnp.max(jnp.abs(pooled_b - ref_pooled)))

    # 3) Default production path: bf16 matmul operands / streamed gates,
    #    auto-sized time tile, auto direction layout; f32 accumulation ->
    #    loose tolerance.
    out_bf, pooled_bf = jax.block_until_ready(
        protein_lstm_encoder(params, inputs))
    assert out_bf.shape == (batch, seq_len, 2 * hidden_size)
    assert pooled_bf.shape == (batch, hidden_size, 2 * num_hidden_layers)
    assert jnp.allclose(out_bf, ref_out, atol=2.5e-1), \
        float(jnp.max(jnp.abs(out_bf - ref_out)))
    assert jnp.allclose(pooled_bf, ref_pooled, atol=2.5e-1), \
        float(jnp.max(jnp.abs(pooled_bf - ref_pooled)))

    print("KERNEL_OK")
</pallas_src>

<mosaic_0001>
module attributes {stable_mosaic.version = 11 : i64} {
  func.func @_bilstm_fused_kernel(%arg0: i32, %arg1: memref<1x5x8x512xf32, #tpu.memory_space<vmem>>, %arg2: memref<1x5x8x512xf32, #tpu.memory_space<vmem>>, %arg3: memref<1x128x512xf32, #tpu.memory_space<vmem>>, %arg4: memref<1x128x512xf32, #tpu.memory_space<vmem>>, %arg5: memref<5x8x128xf32, #tpu.memory_space<vmem>>, %arg6: memref<5x8x128xf32, #tpu.memory_space<vmem>>, %arg7: memref<8x128xf32, #tpu.memory_space<vmem>>, %arg8: memref<8x128xf32, #tpu.memory_space<vmem>>, %arg9: memref<2x8x128xf32, #tpu.memory_space<vmem>>, %arg10: memref<2x8x128xf32, #tpu.memory_space<vmem>>) attributes {dimension_semantics = [#tpu.dimension_semantics<arbitrary>], iteration_bounds = array<i64: 3>, scalar_prefetch = 0 : i64, scratch_operands = 2 : i64, tpu.core_type = #tpu.core_type<tc>, window_params = [{transform_indices = @transform_0, window_bounds = array<i64: 1, 5, 8, 512>}, {transform_indices = @transform_1, window_bounds = array<i64: 1, 5, 8, 512>}, {transform_indices = @transform_2, window_bounds = array<i64: 1, 128, 512>}, {transform_indices = @transform_3, window_bounds = array<i64: 1, 128, 512>}, {transform_indices = @transform_4, window_bounds = array<i64: 5, 8, 128>}, {transform_indices = @transform_5, window_bounds = array<i64: 5, 8, 128>}, {pipeline_mode = #tpu.pipeline_mode<synchronous>, transform_indices = @transform_6, window_bounds = array<i64: 8, 128>}, {pipeline_mode = #tpu.pipeline_mode<synchronous>, transform_indices = @transform_7, window_bounds = array<i64: 8, 128>}]} {
    %c0_i32 = arith.constant 0 : i32
    %0 = arith.cmpi eq, %arg0, %c0_i32 : i32
    %1 = arith.extui %0 : i1 to i32
    %c0_i32_0 = arith.constant 0 : i32
    %2 = arith.cmpi ne, %1, %c0_i32_0 : i32
    scf.if %2 {
      %cst_198 = arith.constant 0.000000e+00 : f32
      %478 = vector.broadcast %cst_198 : f32 to vector<2x8x128xf32>
      %c0_199 = arith.constant 0 : index
      %c0_200 = arith.constant 0 : index
      %c0_201 = arith.constant 0 : index
      %479 = vector.load %arg9[%c0_199, %c0_200, %c0_201] : memref<2x8x128xf32, #tpu.memory_space<vmem>>, vector<2x8x128xf32>
      tpu.vector_store %arg9[%c0_199, %c0_200, %c0_201], %478 {strides = array<i32>} : memref<2x8x128xf32, #tpu.memory_space<vmem>>, vector<2x8x128xf32>,
      %cst_202 = arith.constant 0.000000e+00 : f32
      %480 = vector.broadcast %cst_202 : f32 to vector<2x8x128xf32>
      %c0_203 = arith.constant 0 : index
      %c0_204 = arith.constant 0 : index
      %c0_205 = arith.constant 0 : index
      %481 = vector.load %arg10[%c0_203, %c0_204, %c0_205] : memref<2x8x128xf32, #tpu.memory_space<vmem>>, vector<2x8x128xf32>
      tpu.vector_store %arg10[%c0_203, %c0_204, %c0_205], %480 {strides = array<i32>} : memref<2x8x128xf32, #tpu.memory_space<vmem>>, vector<2x8x128xf32>,
    } else {
    }
    %c0 = arith.constant 0 : index
    %c0_1 = arith.constant 0 : index
    %c0_2 = arith.constant 0 : index
    %3 = vector.load %arg3[%c0, %c0_1, %c0_2] : memref<1x128x512xf32, #tpu.memory_space<vmem>>, vector<1x128x512xf32>
    %4 = vector.shape_cast %3 : vector<1x128x512xf32> to vector<128x512xf32>
    %c0_3 = arith.constant 0 : index
    %c0_4 = arith.constant 0 : index
    %c0_5 = arith.constant 0 : index
    %5 = vector.load %arg4[%c0_3, %c0_4, %c0_5] : memref<1x128x512xf32, #tpu.memory_space<vmem>>, vector<1x128x512xf32>
    %6 = vector.shape_cast %5 : vector<1x128x512xf32> to vector<128x512xf32>
    %c5_i32 = arith.constant 5 : i32
    %7 = arith.muli %arg0, %c5_i32 : i32
    %c2_i32 = arith.constant 2 : i32
    %8 = arith.subi %c2_i32, %arg0 : i32
    %c5_i32_6 = arith.constant 5 : i32
    %9 = arith.muli %8, %c5_i32_6 : i32
    %c0_7 = arith.constant 0 : index
    %c0_8 = arith.constant 0 : index
    %c0_9 = arith.constant 0 : index
    %10 = vector.load %arg9[%c0_7, %c0_8, %c0_9] : memref<2x8x128xf32, #tpu.memory_space<vmem>>, vector<1x8x128xf32>
    %11 = vector.shape_cast %10 : vector<1x8x128xf32> to vector<8x128xf32>
    %c0_10 = arith.constant 0 : index
    %c0_11 = arith.constant 0 : index
    %c0_12 = arith.constant 0 : index
    %12 = vector.load %arg10[%c0_10, %c0_11, %c0_12] : memref<2x8x128xf32, #tpu.memory_space<vmem>>, vector<1x8x128xf32>
    %13 = vector.shape_cast %12 : vector<1x8x128xf32> to vector<8x128xf32>
    %c1 = arith.constant 1 : index
    %c0_13 = arith.constant 0 : index
    %c0_14 = arith.constant 0 : index
    %14 = vector.load %arg9[%c1, %c0_13, %c0_14] : memref<2x8x128xf32, #tpu.memory_space<vmem>>, vector<1x8x128xf32>
    %15 = vector.shape_cast %14 : vector<1x8x128xf32> to vector<8x128xf32>
    %c1_15 = arith.constant 1 : index
    %c0_16 = arith.constant 0 : index
    %c0_17 = arith.constant 0 : index
    %16 = vector.load %arg10[%c1_15, %c0_16, %c0_17] : memref<2x8x128xf32, #tpu.memory_space<vmem>>, vector<1x8x128xf32>
    %17 = vector.shape_cast %16 : vector<1x8x128xf32> to vector<8x128xf32>
    %c0_i32_18 = arith.constant 0 : i32
    %c4_i32 = arith.constant 4 : i32
    %18 = arith.subi %c4_i32, %c0_i32_18 : i32
    %19 = arith.addi %7, %c0_i32_18 : i32
    %c12_i32 = arith.constant 12 : i32
    %20 = arith.cmpi slt, %19, %c12_i32 : i32
    %21 = arith.addi %9, %18 : i32
    %c12_i32_19 = arith.constant 12 : i32
    %22 = arith.cmpi slt, %21, %c12_i32_19 : i32
    %cst = arith.constant dense<0.000000e+00> : vector<8x512xf32>
    %23 = tpu.matmul %11, %4, %cst {dimension_numbers = #tpu.dot_dimension_numbers<[1], [0], [0], [1], [0, 0, 1, 1], [], []>} : vector<8x128xf32>, vector<128x512xf32>, vector<8x512xf32> -> vector<8x512xf32>
    %c0_20 = arith.constant 0 : index
    %24 = arith.index_cast %c0_i32_18 : i32 to index
    %c0_21 = arith.constant 0 : index
    %c0_22 = arith.constant 0 : index
    %25 = vector.load %arg1[%c0_20, %24, %c0_21, %c0_22] : memref<1x5x8x512xf32, #tpu.memory_space<vmem>>, vector<1x1x8x512xf32>
    %26 = vector.shape_cast %25 : vector<1x1x8x512xf32> to vector<8x512xf32>
    %27 = arith.addf %23, %26 : vector<8x512xf32>
    %cst_23 = arith.constant dense<0.000000e+00> : vector<8x512xf32>
    %28 = tpu.matmul %15, %6, %cst_23 {dimension_numbers = #tpu.dot_dimension_numbers<[1], [0], [0], [1], [0, 0, 1, 1], [], []>} : vector<8x128xf32>, vector<128x512xf32>, vector<8x512xf32> -> vector<8x512xf32>
    %c0_24 = arith.constant 0 : index
    %29 = arith.index_cast %18 : i32 to index
    %c0_25 = arith.constant 0 : index
    %c0_26 = arith.constant 0 : index
    %30 = vector.load %arg2[%c0_24, %29, %c0_25, %c0_26] : memref<1x5x8x512xf32, #tpu.memory_space<vmem>>, vector<1x1x8x512xf32>
    %31 = vector.shape_cast %30 : vector<1x1x8x512xf32> to vector<8x512xf32>
    %32 = arith.addf %28, %31 : vector<8x512xf32>
    %33 = vector.extract_strided_slice %27 {offsets = [0, 0], sizes = [8, 128], strides = [1, 1]} : vector<8x512xf32> to vector<8x128xf32>
    %cst_27 = arith.constant 5.000000e-01 : f32
    %34 = vector.broadcast %cst_27 : f32 to vector<8x128xf32>
    %35 = arith.mulf %34, %33 : vector<8x128xf32>
    %36 = math.tanh %35 : vector<8x128xf32>
    %cst_28 = arith.constant 5.000000e-01 : f32
    %37 = vector.broadcast %cst_28 : f32 to vector<8x128xf32>
    %38 = arith.mulf %37, %36 : vector<8x128xf32>
    %cst_29 = arith.constant 5.000000e-01 : f32
    %39 = vector.broadcast %cst_29 : f32 to vector<8x128xf32>
    %40 = arith.addf %38, %39 : vector<8x128xf32>
    %41 = vector.extract_strided_slice %27 {offsets = [0, 128], sizes = [8, 128], strides = [1, 1]} : vector<8x512xf32> to vector<8x128xf32>
    %cst_30 = arith.constant 5.000000e-01 : f32
    %42 = vector.broadcast %cst_30 : f32 to vector<8x128xf32>
    %43 = arith.mulf %42, %41 : vector<8x128xf32>
    %44 = math.tanh %43 : vector<8x128xf32>
    %cst_31 = arith.constant 5.000000e-01 : f32
    %45 = vector.broadcast %cst_31 : f32 to vector<8x128xf32>
    %46 = arith.mulf %45, %44 : vector<8x128xf32>
    %cst_32 = arith.constant 5.000000e-01 : f32
    %47 = vector.broadcast %cst_32 : f32 to vector<8x128xf32>
    %48 = arith.addf %46, %47 : vector<8x128xf32>
    %49 = vector.extract_strided_slice %27 {offsets = [0, 256], sizes = [8, 128], strides = [1, 1]} : vector<8x512xf32> to vector<8x128xf32>
    %50 = math.tanh %49 : vector<8x128xf32>
    %51 = vector.extract_strided_slice %27 {offsets = [0, 384], sizes = [8, 128], strides = [1, 1]} : vector<8x512xf32> to vector<8x128xf32>
    %cst_33 = arith.constant 5.000000e-01 : f32
    %52 = vector.broadcast %cst_33 : f32 to vector<8x128xf32>
    %53 = arith.mulf %52, %51 : vector<8x128xf32>
    %54 = math.tanh %53 : vector<8x128xf32>
    %cst_34 = arith.constant 5.000000e-01 : f32
    %55 = vector.broadcast %cst_34 : f32 to vector<8x128xf32>
    %56 = arith.mulf %55, %54 : vector<8x128xf32>
    %cst_35 = arith.constant 5.000000e-01 : f32
    %57 = vector.broadcast %cst_35 : f32 to vector<8x128xf32>
    %58 = arith.addf %56, %57 : vector<8x128xf32>
    %59 = arith.mulf %48, %13 : vector<8x128xf32>
    %60 = arith.mulf %40, %50 : vector<8x128xf32>
    %61 = arith.addf %59, %60 : vector<8x128xf32>
    %62 = math.tanh %61 : vector<8x128xf32>
    %63 = arith.mulf %58, %62 : vector<8x128xf32>
    %64 = vector.extract_strided_slice %32 {offsets = [0, 0], sizes = [8, 128], strides = [1, 1]} : vector<8x512xf32> to vector<8x128xf32>
    %cst_36 = arith.constant 5.000000e-01 : f32
    %65 = vector.broadcast %cst_36 : f32 to vector<8x128xf32>
    %66 = arith.mulf %65, %64 : vector<8x128xf32>
    %67 = math.tanh %66 : vector<8x128xf32>
    %cst_37 = arith.constant 5.000000e-01 : f32
    %68 = vector.broadcast %cst_37 : f32 to vector<8x128xf32>
    %69 = arith.mulf %68, %67 : vector<8x128xf32>
    %cst_38 = arith.constant 5.000000e-01 : f32
    %70 = vector.broadcast %cst_38 : f32 to vector<8x128xf32>
    %71 = arith.addf %69, %70 : vector<8x128xf32>
    %72 = vector.extract_strided_slice %32 {offsets = [0, 128], sizes = [8, 128], strides = [1, 1]} : vector<8x512xf32> to vector<8x128xf32>
    %cst_39 = arith.constant 5.000000e-01 : f32
    %73 = vector.broadcast %cst_39 : f32 to vector<8x128xf32>
    %74 = arith.mulf %73, %72 : vector<8x128xf32>
    %75 = math.tanh %74 : vector<8x128xf32>
    %cst_40 = arith.constant 5.000000e-01 : f32
    %76 = vector.broadcast %cst_40 : f32 to vector<8x128xf32>
    %77 = arith.mulf %76, %75 : vector<8x128xf32>
    %cst_41 = arith.constant 5.000000e-01 : f32
    %78 = vector.broadcast %cst_41 : f32 to vector<8x128xf32>
    %79 = arith.addf %77, %78 : vector<8x128xf32>
    %80 = vector.extract_strided_slice %32 {offsets = [0, 256], sizes = [8, 128], strides = [1, 1]} : vector<8x512xf32> to vector<8x128xf32>
    %81 = math.tanh %80 : vector<8x128xf32>
    %82 = vector.extract_strided_slice %32 {offsets = [0, 384], sizes = [8, 128], strides = [1, 1]} : vector<8x512xf32> to vector<8x128xf32>
    %cst_42 = arith.constant 5.000000e-01 : f32
    %83 = vector.broadcast %cst_42 : f32 to vector<8x128xf32>
    %84 = arith.mulf %83, %82 : vector<8x128xf32>
    %85 = math.tanh %84 : vector<8x128xf32>
    %cst_43 = arith.constant 5.000000e-01 : f32
    %86 = vector.broadcast %cst_43 : f32 to vector<8x128xf32>
    %87 = arith.mulf %86, %85 : vector<8x128xf32>
    %cst_44 = arith.constant 5.000000e-01 : f32
    %88 = vector.broadcast %cst_44 : f32 to vector<8x128xf32>
    %89 = arith.addf %87, %88 : vector<8x128xf32>
    %90 = arith.mulf %79, %17 : vector<8x128xf32>
    %91 = arith.mulf %71, %81 : vector<8x128xf32>
    %92 = arith.addf %90, %91 : vector<8x128xf32>
    %93 = math.tanh %92 : vector<8x128xf32>
    %94 = arith.mulf %89, %93 : vector<8x128xf32>
    %95 = arith.select %20, %63, %11 : vector<8x128xf32>
    %96 = arith.select %20, %61, %13 : vector<8x128xf32>
    %97 = arith.select %22, %94, %15 : vector<8x128xf32>
    %98 = arith.select %22, %92, %17 : vector<8x128xf32>
    %99 = arith.index_cast %c0_i32_18 : i32 to index
    %c0_45 = arith.constant 0 : index
    %c0_46 = arith.constant 0 : index
    %100 = vector.load %arg5[%99, %c0_45, %c0_46] : memref<5x8x128xf32, #tpu.memory_space<vmem>>, vector<1x8x128xf32>
    %101 = vector.shape_cast %100 : vector<1x8x128xf32> to vector<8x128xf32>
    %102 = vector.shape_cast %95 : vector<8x128xf32> to vector<1x8x128xf32>
    tpu.vector_store %arg5[%99, %c0_45, %c0_46], %102 {strides = array<i32>} : memref<5x8x128xf32, #tpu.memory_space<vmem>>, vector<1x8x128xf32>,
    %103 = arith.index_cast %18 : i32 to index
    %c0_47 = arith.constant 0 : index
    %c0_48 = arith.constant 0 : index
    %104 = vector.load %arg6[%103, %c0_47, %c0_48] : memref<5x8x128xf32, #tpu.memory_space<vmem>>, vector<1x8x128xf32>
    %105 = vector.shape_cast %104 : vector<1x8x128xf32> to vector<8x128xf32>
    %106 = vector.shape_cast %97 : vector<8x128xf32> to vector<1x8x128xf32>
    tpu.vector_store %arg6[%103, %c0_47, %c0_48], %106 {strides = array<i32>} : memref<5x8x128xf32, #tpu.memory_space<vmem>>, vector<1x8x128xf32>,
    %c1_i32 = arith.constant 1 : i32
    %c4_i32_49 = arith.constant 4 : i32
    %107 = arith.subi %c4_i32_49, %c1_i32 : i32
    %108 = arith.addi %7, %c1_i32 : i32
    %c12_i32_50 = arith.constant 12 : i32
    %109 = arith.cmpi slt, %108, %c12_i32_50 : i32
    %110 = arith.addi %9, %107 : i32
    %c12_i32_51 = arith.constant 12 : i32
    %111 = arith.cmpi slt, %110, %c12_i32_51 : i32
    %cst_52 = arith.constant dense<0.000000e+00> : vector<8x512xf32>
    %112 = tpu.matmul %95, %4, %cst_52 {dimension_numbers = #tpu.dot_dimension_numbers<[1], [0], [0], [1], [0, 0, 1, 1], [], []>} : vector<8x128xf32>, vector<128x512xf32>, vector<8x512xf32> -> vector<8x512xf32>
    %c0_53 = arith.constant 0 : index
    %113 = arith.index_cast %c1_i32 : i32 to index
    %c0_54 = arith.constant 0 : index
    %c0_55 = arith.constant 0 : index
    %114 = vector.load %arg1[%c0_53, %113, %c0_54, %c0_55] : memref<1x5x8x512xf32, #tpu.memory_space<vmem>>, vector<1x1x8x512xf32>
    %115 = vector.shape_cast %114 : vector<1x1x8x512xf32> to vector<8x512xf32>
    %116 = arith.addf %112, %115 : vector<8x512xf32>
    %cst_56 = arith.constant dense<0.000000e+00> : vector<8x512xf32>
    %117 = tpu.matmul %97, %6, %cst_56 {dimension_numbers = #tpu.dot_dimension_numbers<[1], [0], [0], [1], [0, 0, 1, 1], [], []>} : vector<8x128xf32>, vector<128x512xf32>, vector<8x512xf32> -> vector<8x512xf32>
    %c0_57 = arith.constant 0 : index
    %118 = arith.index_cast %107 : i32 to index
    %c0_58 = arith.constant 0 : index
    %c0_59 = arith.constant 0 : index
    %119 = vector.load %arg2[%c0_57, %118, %c0_58, %c0_59] : memref<1x5x8x512xf32, #tpu.memory_space<vmem>>, vector<1x1x8x512xf32>
    %120 = vector.shape_cast %119 : vector<1x1x8x512xf32> to vector<8x512xf32>
    %121 = arith.addf %117, %120 : vector<8x512xf32>
    %122 = vector.extract_strided_slice %116 {offsets = [0, 0], sizes = [8, 128], strides = [1, 1]} : vector<8x512xf32> to vector<8x128xf32>
    %cst_60 = arith.constant 5.000000e-01 : f32
    %123 = vector.broadcast %cst_60 : f32 to vector<8x128xf32>
    %124 = arith.mulf %123, %122 : vector<8x128xf32>
    %125 = math.tanh %124 : vector<8x128xf32>
    %cst_61 = arith.constant 5.000000e-01 : f32
    %126 = vector.broadcast %cst_61 : f32 to vector<8x128xf32>
    %127 = arith.mulf %126, %125 : vector<8x128xf32>
    %cst_62 = arith.constant 5.000000e-01 : f32
    %128 = vector.broadcast %cst_62 : f32 to vector<8x128xf32>
    %129 = arith.addf %127, %128 : vector<8x128xf32>
    %130 = vector.extract_strided_slice %116 {offsets = [0, 128], sizes = [8, 128], strides = [1, 1]} : vector<8x512xf32> to vector<8x128xf32>
    %cst_63 = arith.constant 5.000000e-01 : f32
    %131 = vector.broadcast %cst_63 : f32 to vector<8x128xf32>
    %132 = arith.mulf %131, %130 : vector<8x128xf32>
    %133 = math.tanh %132 : vector<8x128xf32>
    %cst_64 = arith.constant 5.000000e-01 : f32
    %134 = vector.broadcast %cst_64 : f32 to vector<8x128xf32>
    %135 = arith.mulf %134, %133 : vector<8x128xf32>
    %cst_65 = arith.constant 5.000000e-01 : f32
    %136 = vector.broadcast %cst_65 : f32 to vector<8x128xf32>
    %137 = arith.addf %135, %136 : vector<8x128xf32>
    %138 = vector.extract_strided_slice %116 {offsets = [0, 256], sizes = [8, 128], strides = [1, 1]} : vector<8x512xf32> to vector<8x128xf32>
    %139 = math.tanh %138 : vector<8x128xf32>
    %140 = vector.extract_strided_slice %116 {offsets = [0, 384], sizes = [8, 128], strides = [1, 1]} : vector<8x512xf32> to vector<8x128xf32>
    %cst_66 = arith.constant 5.000000e-01 : f32
    %141 = vector.broadcast %cst_66 : f32 to vector<8x128xf32>
    %142 = arith.mulf %141, %140 : vector<8x128xf32>
    %143 = math.tanh %142 : vector<8x128xf32>
    %cst_67 = arith.constant 5.000000e-01 : f32
    %144 = vector.broadcast %cst_67 : f32 to vector<8x128xf32>
    %145 = arith.mulf %144, %143 : vector<8x128xf32>
    %cst_68 = arith.constant 5.000000e-01 : f32
    %146 = vector.broadcast %cst_68 : f32 to vector<8x128xf32>
    %147 = arith.addf %145, %146 : vector<8x128xf32>
    %148 = arith.mulf %137, %96 : vector<8x128xf32>
    %149 = arith.mulf %129, %139 : vector<8x128xf32>
    %150 = arith.addf %148, %149 : vector<8x128xf32>
    %151 = math.tanh %150 : vector<8x128xf32>
    %152 = arith.mulf %147, %151 : vector<8x128xf32>
    %153 = vector.extract_strided_slice %121 {offsets = [0, 0], sizes = [8, 128], strides = [1, 1]} : vector<8x512xf32> to vector<8x128xf32>
    %cst_69 = arith.constant 5.000000e-01 : f32
    %154 = vector.broadcast %cst_69 : f32 to vector<8x128xf32>
    %155 = arith.mulf %154, %153 : vector<8x128xf32>
    %156 = math.tanh %155 : vector<8x128xf32>
    %cst_70 = arith.constant 5.000000e-01 : f32
    %157 = vector.broadcast %cst_70 : f32 to vector<8x128xf32>
    %158 = arith.mulf %157, %156 : vector<8x128xf32>
    %cst_71 = arith.constant 5.000000e-01 : f32
    %159 = vector.broadcast %cst_71 : f32 to vector<8x128xf32>
    %160 = arith.addf %158, %159 : vector<8x128xf32>
    %161 = vector.extract_strided_slice %121 {offsets = [0, 128], sizes = [8, 128], strides = [1, 1]} : vector<8x512xf32> to vector<8x128xf32>
    %cst_72 = arith.constant 5.000000e-01 : f32
    %162 = vector.broadcast %cst_72 : f32 to vector<8x128xf32>
    %163 = arith.mulf %162, %161 : vector<8x128xf32>
    %164 = math.tanh %163 : vector<8x128xf32>
    %cst_73 = arith.constant 5.000000e-01 : f32
    %165 = vector.broadcast %cst_73 : f32 to vector<8x128xf32>
    %166 = arith.mulf %165, %164 : vector<8x128xf32>
    %cst_74 = arith.constant 5.000000e-01 : f32
    %167 = vector.broadcast %cst_74 : f32 to vector<8x128xf32>
    %168 = arith.addf %166, %167 : vector<8x128xf32>
    %169 = vector.extract_strided_slice %121 {offsets = [0, 256], sizes = [8, 128], strides = [1, 1]} : vector<8x512xf32> to vector<8x128xf32>
    %170 = math.tanh %169 : vector<8x128xf32>
    %171 = vector.extract_strided_slice %121 {offsets = [0, 384], sizes = [8, 128], strides = [1, 1]} : vector<8x512xf32> to vector<8x128xf32>
    %cst_75 = arith.constant 5.000000e-01 : f32
    %172 = vector.broadcast %cst_75 : f32 to vector<8x128xf32>
    %173 = arith.mulf %172, %171 : vector<8x128xf32>
    %174 = math.tanh %173 : vector<8x128xf32>
    %cst_76 = arith.constant 5.000000e-01 : f32
    %175 = vector.broadcast %cst_76 : f32 to vector<8x128xf32>
    %176 = arith.mulf %175, %174 : vector<8x128xf32>
    %cst_77 = arith.constant 5.000000e-01 : f32
    %177 = vector.broadcast %cst_77 : f32 to vector<8x128xf32>
    %178 = arith.addf %176, %177 : vector<8x128xf32>
    %179 = arith.mulf %168, %98 : vector<8x128xf32>
    %180 = arith.mulf %160, %170 : vector<8x128xf32>
    %181 = arith.addf %179, %180 : vector<8x128xf32>
    %182 = math.tanh %181 : vector<8x128xf32>
    %183 = arith.mulf %178, %182 : vector<8x128xf32>
    %184 = arith.select %109, %152, %95 : vector<8x128xf32>
    %185 = arith.select %109, %150, %96 : vector<8x128xf32>
    %186 = arith.select %111, %183, %97 : vector<8x128xf32>
    %187 = arith.select %111, %181, %98 : vector<8x128xf32>
    %188 = arith.index_cast %c1_i32 : i32 to index
    %c0_78 = arith.constant 0 : index
    %c0_79 = arith.constant 0 : index
    %189 = vector.load %arg5[%188, %c0_78, %c0_79] : memref<5x8x128xf32, #tpu.memory_space<vmem>>, vector<1x8x128xf32>
    %190 = vector.shape_cast %189 : vector<1x8x128xf32> to vector<8x128xf32>
    %191 = vector.shape_cast %184 : vector<8x128xf32> to vector<1x8x128xf32>
    tpu.vector_store %arg5[%188, %c0_78, %c0_79], %191 {strides = array<i32>} : memref<5x8x128xf32, #tpu.memory_space<vmem>>, vector<1x8x128xf32>,
    %192 = arith.index_cast %107 : i32 to index
    %c0_80 = arith.constant 0 : index
    %c0_81 = arith.constant 0 : index
    %193 = vector.load %arg6[%192, %c0_80, %c0_81] : memref<5x8x128xf32, #tpu.memory_space<vmem>>, vector<1x8x128xf32>
    %194 = vector.shape_cast %193 : vector<1x8x128xf32> to vector<8x128xf32>
    %195 = vector.shape_cast %186 : vector<8x128xf32> to vector<1x8x128xf32>
    tpu.vector_store %arg6[%192, %c0_80, %c0_81], %195 {strides = array<i32>} : memref<5x8x128xf32, #tpu.memory_space<vmem>>, vector<1x8x128xf32>,
    %c2_i32_82 = arith.constant 2 : i32
    %c4_i32_83 = arith.constant 4 : i32
    %196 = arith.subi %c4_i32_83, %c2_i32_82 : i32
    %197 = arith.addi %7, %c2_i32_82 : i32
    %c12_i32_84 = arith.constant 12 : i32
    %198 = arith.cmpi slt, %197, %c12_i32_84 : i32
    %199 = arith.addi %9, %196 : i32
    %c12_i32_85 = arith.constant 12 : i32
    %200 = arith.cmpi slt, %199, %c12_i32_85 : i32
    %cst_86 = arith.constant dense<0.000000e+00> : vector<8x512xf32>
    %201 = tpu.matmul %184, %4, %cst_86 {dimension_numbers = #tpu.dot_dimension_numbers<[1], [0], [0], [1], [0, 0, 1, 1], [], []>} : vector<8x128xf32>, vector<128x512xf32>, vector<8x512xf32> -> vector<8x512xf32>
    %c0_87 = arith.constant 0 : index
    %202 = arith.index_cast %c2_i32_82 : i32 to index
    %c0_88 = arith.constant 0 : index
    %c0_89 = arith.constant 0 : index
    %203 = vector.load %arg1[%c0_87, %202, %c0_88, %c0_89] : memref<1x5x8x512xf32, #tpu.memory_space<vmem>>, vector<1x1x8x512xf32>
    %204 = vector.shape_cast %203 : vector<1x1x8x512xf32> to vector<8x512xf32>
    %205 = arith.addf %201, %204 : vector<8x512xf32>
    %cst_90 = arith.constant dense<0.000000e+00> : vector<8x512xf32>
    %206 = tpu.matmul %186, %6, %cst_90 {dimension_numbers = #tpu.dot_dimension_numbers<[1], [0], [0], [1], [0, 0, 1, 1], [], []>} : vector<8x128xf32>, vector<128x512xf32>, vector<8x512xf32> -> vector<8x512xf32>
    %c0_91 = arith.constant 0 : index
    %207 = arith.index_cast %196 : i32 to index
    %c0_92 = arith.constant 0 : index
    %c0_93 = arith.constant 0 : index
    %208 = vector.load %arg2[%c0_91, %207, %c0_92, %c0_93] : memref<1x5x8x512xf32, #tpu.memory_space<vmem>>, vector<1x1x8x512xf32>
    %209 = vector.shape_cast %208 : vector<1x1x8x512xf32> to vector<8x512xf32>
    %210 = arith.addf %206, %209 : vector<8x512xf32>
    %211 = vector.extract_strided_slice %205 {offsets = [0, 0], sizes = [8, 128], strides = [1, 1]} : vector<8x512xf32> to vector<8x128xf32>
    %cst_94 = arith.constant 5.000000e-01 : f32
    %212 = vector.broadcast %cst_94 : f32 to vector<8x128xf32>
    %213 = arith.mulf %212, %211 : vector<8x128xf32>
    %214 = math.tanh %213 : vector<8x128xf32>
    %cst_95 = arith.constant 5.000000e-01 : f32
    %215 = vector.broadcast %cst_95 : f32 to vector<8x128xf32>
    %216 = arith.mulf %215, %214 : vector<8x128xf32>
    %cst_96 = arith.constant 5.000000e-01 : f32
    %217 = vector.broadcast %cst_96 : f32 to vector<8x128xf32>
    %218 = arith.addf %216, %217 : vector<8x128xf32>
    %219 = vector.extract_strided_slice %205 {offsets = [0, 128], sizes = [8, 128], strides = [1, 1]} : vector<8x512xf32> to vector<8x128xf32>
    %cst_97 = arith.constant 5.000000e-01 : f32
    %220 = vector.broadcast %cst_97 : f32 to vector<8x128xf32>
    %221 = arith.mulf %220, %219 : vector<8x128xf32>
    %222 = math.tanh %221 : vector<8x128xf32>
    %cst_98 = arith.constant 5.000000e-01 : f32
    %223 = vector.broadcast %cst_98 : f32 to vector<8x128xf32>
    %224 = arith.mulf %223, %222 : vector<8x128xf32>
    %cst_99 = arith.constant 5.000000e-01 : f32
    %225 = vector.broadcast %cst_99 : f32 to vector<8x128xf32>
    %226 = arith.addf %224, %225 : vector<8x128xf32>
    %227 = vector.extract_strided_slice %205 {offsets = [0, 256], sizes = [8, 128], strides = [1, 1]} : vector<8x512xf32> to vector<8x128xf32>
    %228 = math.tanh %227 : vector<8x128xf32>
    %229 = vector.extract_strided_slice %205 {offsets = [0, 384], sizes = [8, 128], strides = [1, 1]} : vector<8x512xf32> to vector<8x128xf32>
    %cst_100 = arith.constant 5.000000e-01 : f32
    %230 = vector.broadcast %cst_100 : f32 to vector<8x128xf32>
    %231 = arith.mulf %230, %229 : vector<8x128xf32>
    %232 = math.tanh %231 : vector<8x128xf32>
    %cst_101 = arith.constant 5.000000e-01 : f32
    %233 = vector.broadcast %cst_101 : f32 to vector<8x128xf32>
    %234 = arith.mulf %233, %232 : vector<8x128xf32>
    %cst_102 = arith.constant 5.000000e-01 : f32
    %235 = vector.broadcast %cst_102 : f32 to vector<8x128xf32>
    %236 = arith.addf %234, %235 : vector<8x128xf32>
    %237 = arith.mulf %226, %185 : vector<8x128xf32>
    %238 = arith.mulf %218, %228 : vector<8x128xf32>
    %239 = arith.addf %237, %238 : vector<8x128xf32>
    %240 = math.tanh %239 : vector<8x128xf32>
    %241 = arith.mulf %236, %240 : vector<8x128xf32>
    %242 = vector.extract_strided_slice %210 {offsets = [0, 0], sizes = [8, 128], strides = [1, 1]} : vector<8x512xf32> to vector<8x128xf32>
    %cst_103 = arith.constant 5.000000e-01 : f32
    %243 = vector.broadcast %cst_103 : f32 to vector<8x128xf32>
    %244 = arith.mulf %243, %242 : vector<8x128xf32>
    %245 = math.tanh %244 : vector<8x128xf32>
    %cst_104 = arith.constant 5.000000e-01 : f32
    %246 = vector.broadcast %cst_104 : f32 to vector<8x128xf32>
    %247 = arith.mulf %246, %245 : vector<8x128xf32>
    %cst_105 = arith.constant 5.000000e-01 : f32
    %248 = vector.broadcast %cst_105 : f32 to vector<8x128xf32>
    %249 = arith.addf %247, %248 : vector<8x128xf32>
    %250 = vector.extract_strided_slice %210 {offsets = [0, 128], sizes = [8, 128], strides = [1, 1]} : vector<8x512xf32> to vector<8x128xf32>
    %cst_106 = arith.constant 5.000000e-01 : f32
    %251 = vector.broadcast %cst_106 : f32 to vector<8x128xf32>
    %252 = arith.mulf %251, %250 : vector<8x128xf32>
    %253 = math.tanh %252 : vector<8x128xf32>
    %cst_107 = arith.constant 5.000000e-01 : f32
    %254 = vector.broadcast %cst_107 : f32 to vector<8x128xf32>
    %255 = arith.mulf %254, %253 : vector<8x128xf32>
    %cst_108 = arith.constant 5.000000e-01 : f32
    %256 = vector.broadcast %cst_108 : f32 to vector<8x128xf32>
    %257 = arith.addf %255, %256 : vector<8x128xf32>
    %258 = vector.extract_strided_slice %210 {offsets = [0, 256], sizes = [8, 128], strides = [1, 1]} : vector<8x512xf32> to vector<8x128xf32>
    %259 = math.tanh %258 : vector<8x128xf32>
    %260 = vector.extract_strided_slice %210 {offsets = [0, 384], sizes = [8, 128], strides = [1, 1]} : vector<8x512xf32> to vector<8x128xf32>
    %cst_109 = arith.constant 5.000000e-01 : f32
    %261 = vector.broadcast %cst_109 : f32 to vector<8x128xf32>
    %262 = arith.mulf %261, %260 : vector<8x128xf32>
    %263 = math.tanh %262 : vector<8x128xf32>
    %cst_110 = arith.constant 5.000000e-01 : f32
    %264 = vector.broadcast %cst_110 : f32 to vector<8x128xf32>
    %265 = arith.mulf %264, %263 : vector<8x128xf32>
    %cst_111 = arith.constant 5.000000e-01 : f32
    %266 = vector.broadcast %cst_111 : f32 to vector<8x128xf32>
    %267 = arith.addf %265, %266 : vector<8x128xf32>
    %268 = arith.mulf %257, %187 : vector<8x128xf32>
    %269 = arith.mulf %249, %259 : vector<8x128xf32>
    %270 = arith.addf %268, %269 : vector<8x128xf32>
    %271 = math.tanh %270 : vector<8x128xf32>
    %272 = arith.mulf %267, %271 : vector<8x128xf32>
    %273 = arith.select %198, %241, %184 : vector<8x128xf32>
    %274 = arith.select %198, %239, %185 : vector<8x128xf32>
    %275 = arith.select %200, %272, %186 : vector<8x128xf32>
    %276 = arith.select %200, %270, %187 : vector<8x128xf32>
    %277 = arith.index_cast %c2_i32_82 : i32 to index
    %c0_112 = arith.constant 0 : index
    %c0_113 = arith.constant 0 : index
    %278 = vector.load %arg5[%277, %c0_112, %c0_113] : memref<5x8x128xf32, #tpu.memory_space<vmem>>, vector<1x8x128xf32>
    %279 = vector.shape_cast %278 : vector<1x8x128xf32> to vector<8x128xf32>
    %280 = vector.shape_cast %273 : vector<8x128xf32> to vector<1x8x128xf32>
    tpu.vector_store %arg5[%277, %c0_112, %c0_113], %280 {strides = array<i32>} : memref<5x8x128xf32, #tpu.memory_space<vmem>>, vector<1x8x128xf32>,
    %281 = arith.index_cast %196 : i32 to index
    %c0_114 = arith.constant 0 : index
    %c0_115 = arith.constant 0 : index
    %282 = vector.load %arg6[%281, %c0_114, %c0_115] : memref<5x8x128xf32, #tpu.memory_space<vmem>>, vector<1x8x128xf32>
    %283 = vector.shape_cast %282 : vector<1x8x128xf32> to vector<8x128xf32>
    %284 = vector.shape_cast %275 : vector<8x128xf32> to vector<1x8x128xf32>
    tpu.vector_store %arg6[%281, %c0_114, %c0_115], %284 {strides = array<i32>} : memref<5x8x128xf32, #tpu.memory_space<vmem>>, vector<1x8x128xf32>,
    %c3_i32 = arith.constant 3 : i32
    %c4_i32_116 = arith.constant 4 : i32
    %285 = arith.subi %c4_i32_116, %c3_i32 : i32
    %286 = arith.addi %7, %c3_i32 : i32
    %c12_i32_117 = arith.constant 12 : i32
    %287 = arith.cmpi slt, %286, %c12_i32_117 : i32
    %288 = arith.addi %9, %285 : i32
    %c12_i32_118 = arith.constant 12 : i32
    %289 = arith.cmpi slt, %288, %c12_i32_118 : i32
    %cst_119 = arith.constant dense<0.000000e+00> : vector<8x512xf32>
    %290 = tpu.matmul %273, %4, %cst_119 {dimension_numbers = #tpu.dot_dimension_numbers<[1], [0], [0], [1], [0, 0, 1, 1], [], []>} : vector<8x128xf32>, vector<128x512xf32>, vector<8x512xf32> -> vector<8x512xf32>
    %c0_120 = arith.constant 0 : index
    %291 = arith.index_cast %c3_i32 : i32 to index
    %c0_121 = arith.constant 0 : index
    %c0_122 = arith.constant 0 : index
    %292 = vector.load %arg1[%c0_120, %291, %c0_121, %c0_122] : memref<1x5x8x512xf32, #tpu.memory_space<vmem>>, vector<1x1x8x512xf32>
    %293 = vector.shape_cast %292 : vector<1x1x8x512xf32> to vector<8x512xf32>
    %294 = arith.addf %290, %293 : vector<8x512xf32>
    %cst_123 = arith.constant dense<0.000000e+00> : vector<8x512xf32>
    %295 = tpu.matmul %275, %6, %cst_123 {dimension_numbers = #tpu.dot_dimension_numbers<[1], [0], [0], [1], [0, 0, 1, 1], [], []>} : vector<8x128xf32>, vector<128x512xf32>, vector<8x512xf32> -> vector<8x512xf32>
    %c0_124 = arith.constant 0 : index
    %296 = arith.index_cast %285 : i32 to index
    %c0_125 = arith.constant 0 : index
    %c0_126 = arith.constant 0 : index
    %297 = vector.load %arg2[%c0_124, %296, %c0_125, %c0_126] : memref<1x5x8x512xf32, #tpu.memory_space<vmem>>, vector<1x1x8x512xf32>
    %298 = vector.shape_cast %297 : vector<1x1x8x512xf32> to vector<8x512xf32>
    %299 = arith.addf %295, %298 : vector<8x512xf32>
    %300 = vector.extract_strided_slice %294 {offsets = [0, 0], sizes = [8, 128], strides = [1, 1]} : vector<8x512xf32> to vector<8x128xf32>
    %cst_127 = arith.constant 5.000000e-01 : f32
    %301 = vector.broadcast %cst_127 : f32 to vector<8x128xf32>
    %302 = arith.mulf %301, %300 : vector<8x128xf32>
    %303 = math.tanh %302 : vector<8x128xf32>
    %cst_128 = arith.constant 5.000000e-01 : f32
    %304 = vector.broadcast %cst_128 : f32 to vector<8x128xf32>
    %305 = arith.mulf %304, %303 : vector<8x128xf32>
    %cst_129 = arith.constant 5.000000e-01 : f32
    %306 = vector.broadcast %cst_129 : f32 to vector<8x128xf32>
    %307 = arith.addf %305, %306 : vector<8x128xf32>
    %308 = vector.extract_strided_slice %294 {offsets = [0, 128], sizes = [8, 128], strides = [1, 1]} : vector<8x512xf32> to vector<8x128xf32>
    %cst_130 = arith.constant 5.000000e-01 : f32
    %309 = vector.broadcast %cst_130 : f32 to vector<8x128xf32>
    %310 = arith.mulf %309, %308 : vector<8x128xf32>
    %311 = math.tanh %310 : vector<8x128xf32>
    %cst_131 = arith.constant 5.000000e-01 : f32
    %312 = vector.broadcast %cst_131 : f32 to vector<8x128xf32>
    %313 = arith.mulf %312, %311 : vector<8x128xf32>
    %cst_132 = arith.constant 5.000000e-01 : f32
    %314 = vector.broadcast %cst_132 : f32 to vector<8x128xf32>
    %315 = arith.addf %313, %314 : vector<8x128xf32>
    %316 = vector.extract_strided_slice %294 {offsets = [0, 256], sizes = [8, 128], strides = [1, 1]} : vector<8x512xf32> to vector<8x128xf32>
    %317 = math.tanh %316 : vector<8x128xf32>
    %318 = vector.extract_strided_slice %294 {offsets = [0, 384], sizes = [8, 128], strides = [1, 1]} : vector<8x512xf32> to vector<8x128xf32>
    %cst_133 = arith.constant 5.000000e-01 : f32
    %319 = vector.broadcast %cst_133 : f32 to vector<8x128xf32>
    %320 = arith.mulf %319, %318 : vector<8x128xf32>
    %321 = math.tanh %320 : vector<8x128xf32>
    %cst_134 = arith.constant 5.000000e-01 : f32
    %322 = vector.broadcast %cst_134 : f32 to vector<8x128xf32>
    %323 = arith.mulf %322, %321 : vector<8x128xf32>
    %cst_135 = arith.constant 5.000000e-01 : f32
    %324 = vector.broadcast %cst_135 : f32 to vector<8x128xf32>
    %325 = arith.addf %323, %324 : vector<8x128xf32>
    %326 = arith.mulf %315, %274 : vector<8x128xf32>
    %327 = arith.mulf %307, %317 : vector<8x128xf32>
    %328 = arith.addf %326, %327 : vector<8x128xf32>
    %329 = math.tanh %328 : vector<8x128xf32>
    %330 = arith.mulf %325, %329 : vector<8x128xf32>
    %331 = vector.extract_strided_slice %299 {offsets = [0, 0], sizes = [8, 128], strides = [1, 1]} : vector<8x512xf32> to vector<8x128xf32>
    %cst_136 = arith.constant 5.000000e-01 : f32
    %332 = vector.broadcast %cst_136 : f32 to vector<8x128xf32>
    %333 = arith.mulf %332, %331 : vector<8x128xf32>
    %334 = math.tanh %333 : vector<8x128xf32>
    %cst_137 = arith.constant 5.000000e-01 : f32
    %335 = vector.broadcast %cst_137 : f32 to vector<8x128xf32>
    %336 = arith.mulf %335, %334 : vector<8x128xf32>
    %cst_138 = arith.constant 5.000000e-01 : f32
    %337 = vector.broadcast %cst_138 : f32 to vector<8x128xf32>
    %338 = arith.addf %336, %337 : vector<8x128xf32>
    %339 = vector.extract_strided_slice %299 {offsets = [0, 128], sizes = [8, 128], strides = [1, 1]} : vector<8x512xf32> to vector<8x128xf32>
    %cst_139 = arith.constant 5.000000e-01 : f32
    %340 = vector.broadcast %cst_139 : f32 to vector<8x128xf32>
    %341 = arith.mulf %340, %339 : vector<8x128xf32>
    %342 = math.tanh %341 : vector<8x128xf32>
    %cst_140 = arith.constant 5.000000e-01 : f32
    %343 = vector.broadcast %cst_140 : f32 to vector<8x128xf32>
    %344 = arith.mulf %343, %342 : vector<8x128xf32>
    %cst_141 = arith.constant 5.000000e-01 : f32
    %345 = vector.broadcast %cst_141 : f32 to vector<8x128xf32>
    %346 = arith.addf %344, %345 : vector<8x128xf32>
    %347 = vector.extract_strided_slice %299 {offsets = [0, 256], sizes = [8, 128], strides = [1, 1]} : vector<8x512xf32> to vector<8x128xf32>
    %348 = math.tanh %347 : vector<8x128xf32>
    %349 = vector.extract_strided_slice %299 {offsets = [0, 384], sizes = [8, 128], strides = [1, 1]} : vector<8x512xf32> to vector<8x128xf32>
    %cst_142 = arith.constant 5.000000e-01 : f32
    %350 = vector.broadcast %cst_142 : f32 to vector<8x128xf32>
    %351 = arith.mulf %350, %349 : vector<8x128xf32>
    %352 = math.tanh %351 : vector<8x128xf32>
    %cst_143 = arith.constant 5.000000e-01 : f32
    %353 = vector.broadcast %cst_143 : f32 to vector<8x128xf32>
    %354 = arith.mulf %353, %352 : vector<8x128xf32>
    %cst_144 = arith.constant 5.000000e-01 : f32
    %355 = vector.broadcast %cst_144 : f32 to vector<8x128xf32>
    %356 = arith.addf %354, %355 : vector<8x128xf32>
    %357 = arith.mulf %346, %276 : vector<8x128xf32>
    %358 = arith.mulf %338, %348 : vector<8x128xf32>
    %359 = arith.addf %357, %358 : vector<8x128xf32>
    %360 = math.tanh %359 : vector<8x128xf32>
    %361 = arith.mulf %356, %360 : vector<8x128xf32>
    %362 = arith.select %287, %330, %273 : vector<8x128xf32>
    %363 = arith.select %287, %328, %274 : vector<8x128xf32>
    %364 = arith.select %289, %361, %275 : vector<8x128xf32>
    %365 = arith.select %289, %359, %276 : vector<8x128xf32>
    %366 = arith.index_cast %c3_i32 : i32 to index
    %c0_145 = arith.constant 0 : index
    %c0_146 = arith.constant 0 : index
    %367 = vector.load %arg5[%366, %c0_145, %c0_146] : memref<5x8x128xf32, #tpu.memory_space<vmem>>, vector<1x8x128xf32>
    %368 = vector.shape_cast %367 : vector<1x8x128xf32> to vector<8x128xf32>
    %369 = vector.shape_cast %362 : vector<8x128xf32> to vector<1x8x128xf32>
    tpu.vector_store %arg5[%366, %c0_145, %c0_146], %369 {strides = array<i32>} : memref<5x8x128xf32, #tpu.memory_space<vmem>>, vector<1x8x128xf32>,
    %370 = arith.index_cast %285 : i32 to index
    %c0_147 = arith.constant 0 : index
    %c0_148 = arith.constant 0 : index
    %371 = vector.load %arg6[%370, %c0_147, %c0_148] : memref<5x8x128xf32, #tpu.memory_space<vmem>>, vector<1x8x128xf32>
    %372 = vector.shape_cast %371 : vector<1x8x128xf32> to vector<8x128xf32>
    %373 = vector.shape_cast %364 : vector<8x128xf32> to vector<1x8x128xf32>
    tpu.vector_store %arg6[%370, %c0_147, %c0_148], %373 {strides = array<i32>} : memref<5x8x128xf32, #tpu.memory_space<vmem>>, vector<1x8x128xf32>,
    %c4_i32_149 = arith.constant 4 : i32
    %c4_i32_150 = arith.constant 4 : i32
    %374 = arith.subi %c4_i32_150, %c4_i32_149 : i32
    %375 = arith.addi %7, %c4_i32_149 : i32
    %c12_i32_151 = arith.constant 12 : i32
    %376 = arith.cmpi slt, %375, %c12_i32_151 : i32
    %377 = arith.addi %9, %374 : i32
    %c12_i32_152 = arith.constant 12 : i32
    %378 = arith.cmpi slt, %377, %c12_i32_152 : i32
    %cst_153 = arith.constant dense<0.000000e+00> : vector<8x512xf32>
    %379 = tpu.matmul %362, %4, %cst_153 {dimension_numbers = #tpu.dot_dimension_numbers<[1], [0], [0], [1], [0, 0, 1, 1], [], []>} : vector<8x128xf32>, vector<128x512xf32>, vector<8x512xf32> -> vector<8x512xf32>
    %c0_154 = arith.constant 0 : index
    %380 = arith.index_cast %c4_i32_149 : i32 to index
    %c0_155 = arith.constant 0 : index
    %c0_156 = arith.constant 0 : index
    %381 = vector.load %arg1[%c0_154, %380, %c0_155, %c0_156] : memref<1x5x8x512xf32, #tpu.memory_space<vmem>>, vector<1x1x8x512xf32>
    %382 = vector.shape_cast %381 : vector<1x1x8x512xf32> to vector<8x512xf32>
    %383 = arith.addf %379, %382 : vector<8x512xf32>
    %cst_157 = arith.constant dense<0.000000e+00> : vector<8x512xf32>
    %384 = tpu.matmul %364, %6, %cst_157 {dimension_numbers = #tpu.dot_dimension_numbers<[1], [0], [0], [1], [0, 0, 1, 1], [], []>} : vector<8x128xf32>, vector<128x512xf32>, vector<8x512xf32> -> vector<8x512xf32>
    %c0_158 = arith.constant 0 : index
    %385 = arith.index_cast %374 : i32 to index
    %c0_159 = arith.constant 0 : index
    %c0_160 = arith.constant 0 : index
    %386 = vector.load %arg2[%c0_158, %385, %c0_159, %c0_160] : memref<1x5x8x512xf32, #tpu.memory_space<vmem>>, vector<1x1x8x512xf32>
    %387 = vector.shape_cast %386 : vector<1x1x8x512xf32> to vector<8x512xf32>
    %388 = arith.addf %384, %387 : vector<8x512xf32>
    %389 = vector.extract_strided_slice %383 {offsets = [0, 0], sizes = [8, 128], strides = [1, 1]} : vector<8x512xf32> to vector<8x128xf32>
    %cst_161 = arith.constant 5.000000e-01 : f32
    %390 = vector.broadcast %cst_161 : f32 to vector<8x128xf32>
    %391 = arith.mulf %390, %389 : vector<8x128xf32>
    %392 = math.tanh %391 : vector<8x128xf32>
    %cst_162 = arith.constant 5.000000e-01 : f32
    %393 = vector.broadcast %cst_162 : f32 to vector<8x128xf32>
    %394 = arith.mulf %393, %392 : vector<8x128xf32>
    %cst_163 = arith.constant 5.000000e-01 : f32
    %395 = vector.broadcast %cst_163 : f32 to vector<8x128xf32>
    %396 = arith.addf %394, %395 : vector<8x128xf32>
    %397 = vector.extract_strided_slice %383 {offsets = [0, 128], sizes = [8, 128], strides = [1, 1]} : vector<8x512xf32> to vector<8x128xf32>
    %cst_164 = arith.constant 5.000000e-01 : f32
    %398 = vector.broadcast %cst_164 : f32 to vector<8x128xf32>
    %399 = arith.mulf %398, %397 : vector<8x128xf32>
    %400 = math.tanh %399 : vector<8x128xf32>
    %cst_165 = arith.constant 5.000000e-01 : f32
    %401 = vector.broadcast %cst_165 : f32 to vector<8x128xf32>
    %402 = arith.mulf %401, %400 : vector<8x128xf32>
    %cst_166 = arith.constant 5.000000e-01 : f32
    %403 = vector.broadcast %cst_166 : f32 to vector<8x128xf32>
    %404 = arith.addf %402, %403 : vector<8x128xf32>
    %405 = vector.extract_strided_slice %383 {offsets = [0, 256], sizes = [8, 128], strides = [1, 1]} : vector<8x512xf32> to vector<8x128xf32>
    %406 = math.tanh %405 : vector<8x128xf32>
    %407 = vector.extract_strided_slice %383 {offsets = [0, 384], sizes = [8, 128], strides = [1, 1]} : vector<8x512xf32> to vector<8x128xf32>
    %cst_167 = arith.constant 5.000000e-01 : f32
    %408 = vector.broadcast %cst_167 : f32 to vector<8x128xf32>
    %409 = arith.mulf %408, %407 : vector<8x128xf32>
    %410 = math.tanh %409 : vector<8x128xf32>
    %cst_168 = arith.constant 5.000000e-01 : f32
    %411 = vector.broadcast %cst_168 : f32 to vector<8x128xf32>
    %412 = arith.mulf %411, %410 : vector<8x128xf32>
    %cst_169 = arith.constant 5.000000e-01 : f32
    %413 = vector.broadcast %cst_169 : f32 to vector<8x128xf32>
    %414 = arith.addf %412, %413 : vector<8x128xf32>
    %415 = arith.mulf %404, %363 : vector<8x128xf32>
    %416 = arith.mulf %396, %406 : vector<8x128xf32>
    %417 = arith.addf %415, %416 : vector<8x128xf32>
    %418 = math.tanh %417 : vector<8x128xf32>
    %419 = arith.mulf %414, %418 : vector<8x128xf32>
    %420 = vector.extract_strided_slice %388 {offsets = [0, 0], sizes = [8, 128], strides = [1, 1]} : vector<8x512xf32> to vector<8x128xf32>
    %cst_170 = arith.constant 5.000000e-01 : f32
    %421 = vector.broadcast %cst_170 : f32 to vector<8x128xf32>
    %422 = arith.mulf %421, %420 : vector<8x128xf32>
    %423 = math.tanh %422 : vector<8x128xf32>
    %cst_171 = arith.constant 5.000000e-01 : f32
    %424 = vector.broadcast %cst_171 : f32 to vector<8x128xf32>
    %425 = arith.mulf %424, %423 : vector<8x128xf32>
    %cst_172 = arith.constant 5.000000e-01 : f32
    %426 = vector.broadcast %cst_172 : f32 to vector<8x128xf32>
    %427 = arith.addf %425, %426 : vector<8x128xf32>
    %428 = vector.extract_strided_slice %388 {offsets = [0, 128], sizes = [8, 128], strides = [1, 1]} : vector<8x512xf32> to vector<8x128xf32>
    %cst_173 = arith.constant 5.000000e-01 : f32
    %429 = vector.broadcast %cst_173 : f32 to vector<8x128xf32>
    %430 = arith.mulf %429, %428 : vector<8x128xf32>
    %431 = math.tanh %430 : vector<8x128xf32>
    %cst_174 = arith.constant 5.000000e-01 : f32
    %432 = vector.broadcast %cst_174 : f32 to vector<8x128xf32>
    %433 = arith.mulf %432, %431 : vector<8x128xf32>
    %cst_175 = arith.constant 5.000000e-01 : f32
    %434 = vector.broadcast %cst_175 : f32 to vector<8x128xf32>
    %435 = arith.addf %433, %434 : vector<8x128xf32>
    %436 = vector.extract_strided_slice %388 {offsets = [0, 256], sizes = [8, 128], strides = [1, 1]} : vector<8x512xf32> to vector<8x128xf32>
    %437 = math.tanh %436 : vector<8x128xf32>
    %438 = vector.extract_strided_slice %388 {offsets = [0, 384], sizes = [8, 128], strides = [1, 1]} : vector<8x512xf32> to vector<8x128xf32>
    %cst_176 = arith.constant 5.000000e-01 : f32
    %439 = vector.broadcast %cst_176 : f32 to vector<8x128xf32>
    %440 = arith.mulf %439, %438 : vector<8x128xf32>
    %441 = math.tanh %440 : vector<8x128xf32>
    %cst_177 = arith.constant 5.000000e-01 : f32
    %442 = vector.broadcast %cst_177 : f32 to vector<8x128xf32>
    %443 = arith.mulf %442, %441 : vector<8x128xf32>
    %cst_178 = arith.constant 5.000000e-01 : f32
    %444 = vector.broadcast %cst_178 : f32 to vector<8x128xf32>
    %445 = arith.addf %443, %444 : vector<8x128xf32>
    %446 = arith.mulf %435, %365 : vector<8x128xf32>
    %447 = arith.mulf %427, %437 : vector<8x128xf32>
    %448 = arith.addf %446, %447 : vector<8x128xf32>
    %449 = math.tanh %448 : vector<8x128xf32>
    %450 = arith.mulf %445, %449 : vector<8x128xf32>
    %451 = arith.select %376, %419, %362 : vector<8x128xf32>
    %452 = arith.select %376, %417, %363 : vector<8x128xf32>
    %453 = arith.select %378, %450, %364 : vector<8x128xf32>
    %454 = arith.select %378, %448, %365 : vector<8x128xf32>
    %455 = arith.index_cast %c4_i32_149 : i32 to index
    %c0_179 = arith.constant 0 : index
    %c0_180 = arith.constant 0 : index
    %456 = vector.load %arg5[%455, %c0_179, %c0_180] : memref<5x8x128xf32, #tpu.memory_space<vmem>>, vector<1x8x128xf32>
    %457 = vector.shape_cast %456 : vector<1x8x128xf32> to vector<8x128xf32>
    %458 = vector.shape_cast %451 : vector<8x128xf32> to vector<1x8x128xf32>
    tpu.vector_store %arg5[%455, %c0_179, %c0_180], %458 {strides = array<i32>} : memref<5x8x128xf32, #tpu.memory_space<vmem>>, vector<1x8x128xf32>,
    %459 = arith.index_cast %374 : i32 to index
    %c0_181 = arith.constant 0 : index
    %c0_182 = arith.constant 0 : index
    %460 = vector.load %arg6[%459, %c0_181, %c0_182] : memref<5x8x128xf32, #tpu.memory_space<vmem>>, vector<1x8x128xf32>
    %461 = vector.shape_cast %460 : vector<1x8x128xf32> to vector<8x128xf32>
    %462 = vector.shape_cast %453 : vector<8x128xf32> to vector<1x8x128xf32>
    tpu.vector_store %arg6[%459, %c0_181, %c0_182], %462 {strides = array<i32>} : memref<5x8x128xf32, #tpu.memory_space<vmem>>, vector<1x8x128xf32>,
    %c5_i32_183 = arith.constant 5 : i32
    %c0_184 = arith.constant 0 : index
    %c0_185 = arith.constant 0 : index
    %c0_186 = arith.constant 0 : index
    %463 = vector.load %arg9[%c0_184, %c0_185, %c0_186] : memref<2x8x128xf32, #tpu.memory_space<vmem>>, vector<1x8x128xf32>
    %464 = vector.shape_cast %463 : vector<1x8x128xf32> to vector<8x128xf32>
    %465 = vector.shape_cast %451 : vector<8x128xf32> to vector<1x8x128xf32>
    tpu.vector_store %arg9[%c0_184, %c0_185, %c0_186], %465 {strides = array<i32>} : memref<2x8x128xf32, #tpu.memory_space<vmem>>, vector<1x8x128xf32>,
    %c0_187 = arith.constant 0 : index
    %c0_188 = arith.constant 0 : index
    %c0_189 = arith.constant 0 : index
    %466 = vector.load %arg10[%c0_187, %c0_188, %c0_189] : memref<2x8x128xf32, #tpu.memory_space<vmem>>, vector<1x8x128xf32>
    %467 = vector.shape_cast %466 : vector<1x8x128xf32> to vector<8x128xf32>
    %468 = vector.shape_cast %452 : vector<8x128xf32> to vector<1x8x128xf32>
    tpu.vector_store %arg10[%c0_187, %c0_188, %c0_189], %468 {strides = array<i32>} : memref<2x8x128xf32, #tpu.memory_space<vmem>>, vector<1x8x128xf32>,
    %c1_190 = arith.constant 1 : index
    %c0_191 = arith.constant 0 : index
    %c0_192 = arith.constant 0 : index
    %469 = vector.load %arg9[%c1_190, %c0_191, %c0_192] : memref<2x8x128xf32, #tpu.memory_space<vmem>>, vector<1x8x128xf32>
    %470 = vector.shape_cast %469 : vector<1x8x128xf32> to vector<8x128xf32>
    %471 = vector.shape_cast %453 : vector<8x128xf32> to vector<1x8x128xf32>
    tpu.vector_store %arg9[%c1_190, %c0_191, %c0_192], %471 {strides = array<i32>} : memref<2x8x128xf32, #tpu.memory_space<vmem>>, vector<1x8x128xf32>,
    %c1_193 = arith.constant 1 : index
    %c0_194 = arith.constant 0 : index
    %c0_195 = arith.constant 0 : index
    %472 = vector.load %arg10[%c1_193, %c0_194, %c0_195] : memref<2x8x128xf32, #tpu.memory_space<vmem>>, vector<1x8x128xf32>
    %473 = vector.shape_cast %472 : vector<1x8x128xf32> to vector<8x128xf32>
    %474 = vector.shape_cast %454 : vector<8x128xf32> to vector<1x8x128xf32>
    tpu.vector_store %arg10[%c1_193, %c0_194, %c0_195], %474 {strides = array<i32>} : memref<2x8x128xf32, #tpu.memory_space<vmem>>, vector<1x8x128xf32>,
    %c2_i32_196 = arith.constant 2 : i32
    %475 = arith.cmpi eq, %arg0, %c2_i32_196 : i32
    %476 = arith.extui %475 : i1 to i32
    %c0_i32_197 = arith.constant 0 : i32
    %477 = arith.cmpi ne, %476, %c0_i32_197 : i32
    scf.if %477 {
      %c0_198 = arith.constant 0 : index
      %c0_199 = arith.constant 0 : index
      %478 = vector.load %arg7[%c0_198, %c0_199] : memref<8x128xf32, #tpu.memory_space<vmem>>, vector<8x128xf32>
      tpu.vector_store %arg7[%c0_198, %c0_199], %451 {strides = array<i32>} : memref<8x128xf32, #tpu.memory_space<vmem>>, vector<8x128xf32>,
      %c0_200 = arith.constant 0 : index
      %c0_201 = arith.constant 0 : index
      %479 = vector.load %arg8[%c0_200, %c0_201] : memref<8x128xf32, #tpu.memory_space<vmem>>, vector<8x128xf32>
      tpu.vector_store %arg8[%c0_200, %c0_201], %453 {strides = array<i32>} : memref<8x128xf32, #tpu.memory_space<vmem>>, vector<8x128xf32>,
    } else {
    }
    return
  }
  func.func @transform_0(%arg0: i32) -> (i32, i32, i32, i32) {
    %c0_i32 = arith.constant 0 : i32
    %c0_i32_0 = arith.constant 0 : i32
    %c0_i32_1 = arith.constant 0 : i32
    %c0_i32_2 = arith.constant 0 : i32
    return %c0_i32, %arg0, %c0_i32_0, %c0_i32_1 : i32, i32, i32, i32
  }
  func.func @transform_1(%arg0: i32) -> (i32, i32, i32, i32) {
    %c2_i32 = arith.constant 2 : i32
    %0 = arith.subi %c2_i32, %arg0 : i32
    %c1_i32 = arith.constant 1 : i32
    %c0_i32 = arith.constant 0 : i32
    %c0_i32_0 = arith.constant 0 : i32
    %c0_i32_1 = arith.constant 0 : i32
    return %c1_i32, %0, %c0_i32, %c0_i32_0 : i32, i32, i32, i32
  }
  func.func @transform_2(%arg0: i32) -> (i32, i32, i32) {
    %c0_i32 = arith.constant 0 : i32
    %c0_i32_0 = arith.constant 0 : i32
    %c0_i32_1 = arith.constant 0 : i32
    %c0_i32_2 = arith.constant 0 : i32
    return %c0_i32, %c0_i32_0, %c0_i32_1 : i32, i32, i32
  }
  func.func @transform_3(%arg0: i32) -> (i32, i32, i32) {
    %c1_i32 = arith.constant 1 : i32
    %c0_i32 = arith.constant 0 : i32
    %c0_i32_0 = arith.constant 0 : i32
    %c0_i32_1 = arith.constant 0 : i32
    return %c1_i32, %c0_i32, %c0_i32_0 : i32, i32, i32
  }
  func.func @transform_4(%arg0: i32) -> (i32, i32, i32) {
    %c0_i32 = arith.constant 0 : i32
    %c0_i32_0 = arith.constant 0 : i32
    %c0_i32_1 = arith.constant 0 : i32
    return %arg0, %c0_i32, %c0_i32_0 : i32, i32, i32
  }
  func.func @transform_5(%arg0: i32) -> (i32, i32, i32) {
    %c2_i32 = arith.constant 2 : i32
    %0 = arith.subi %c2_i32, %arg0 : i32
    %c0_i32 = arith.constant 0 : i32
    %c0_i32_0 = arith.constant 0 : i32
    %c0_i32_1 = arith.constant 0 : i32
    return %0, %c0_i32, %c0_i32_0 : i32, i32, i32
  }
  func.func @transform_6(%arg0: i32) -> (i32, i32) {
    %c0_i32 = arith.constant 0 : i32
    %c0_i32_0 = arith.constant 0 : i32
    %c0_i32_1 = arith.constant 0 : i32
    return %c0_i32, %c0_i32_0 : i32, i32
  }
  func.func @transform_7(%arg0: i32) -> (i32, i32) {
    %c0_i32 = arith.constant 0 : i32
    %c0_i32_0 = arith.constant 0 : i32
    %c0_i32_1 = arith.constant 0 : i32
    return %c0_i32, %c0_i32_0 : i32, i32
  }
}

</mosaic_0001>

<llo_original>
// kernel: protein_lstm_encoder.3
$region0: #{protein_lstm_encoder.3}
  #allocation0 [shape = 'u32[]', space=smem, size = 0x4, offset = 0x4, fixed_abs, tag = 'smem constant byte address 0x4 - core index']
  #allocation1 [shape = 'u32[144,128]{1,0:T(1,128)}', space=vmem, size = 0x12000, scoped, tag = 'internal scratch']
  #allocation2 [shape = 'f32[2,8,128]{2,1,0:T(8,128)}', space=vmem, size = 0x2000, scoped, tag = 'scratch operand']
  #allocation3 [shape = 'f32[2,8,128]{2,1,0:T(8,128)}', space=vmem, size = 0x2000, scoped, tag = 'scratch operand']
  %s0 = inlined_call_operand.vmem [shape: f32[2,15,8,512], index: 0, kind: input, shape index: {}, may-alias: {0,1}]
  %s1 = inlined_call_operand.vmem [shape: f32[2,15,8,512], index: 1, kind: input, shape index: {}, may-alias: {0,1}]
  %s2 = inlined_call_operand.vmem [shape: f32[2,128,512], index: 2, kind: input, shape index: {}, may-alias: {2,3}]
  %s3 = inlined_call_operand.vmem [shape: f32[2,128,512], index: 3, kind: input, shape index: {}, may-alias: {2,3}]
  %s4 = inlined_call_operand.vmem [shape: f32[15,8,128], index: 4, kind: output, shape index: {0}]
  %s5 = inlined_call_operand.vmem [shape: f32[15,8,128], index: 5, kind: output, shape index: {1}]
  %s6 = inlined_call_operand.vmem [shape: f32[8,128], index: 6, kind: output, shape index: {2}]
  %s7 = inlined_call_operand.vmem [shape: f32[8,128], index: 7, kind: output, shape index: {3}]
  %8 = xla_tuple %s4, %s5, %s6, %s7
  %s9 = sld [smem:[#allocation0]]
  $region81: #{protein_lstm_encoder.3} parent=0
    _
  %s11 = ssub.s32 1, %s9
  %s12 = scalar_select 0, %s11, %s9
  loop: start=0, step=1, limit=5
  $region2: #{protein_lstm_encoder.3} parent=0 // loop_pre_header
    _
  $region3: #{protein_lstm_encoder.3} parent=0 // loop_header
    %s14 = sphi 0, %s18
    %p15 = scmp.ge.s32.totalorder %s14, 5
    %s24 = sphi 0, %s26
    %s27 = sphi 0, %s24
    %s28 = sphi 0, %s27
    %s44 = sphi 0, %s28
    %s52 = sphi 0, %s54
    %s55 = sphi 0, %s52
    %s56 = sphi 0, %s55
    %s72 = sphi 0, %s56
    %s76 = sphi 0, %s76
    %s78 = sphi 0, %s76
    %s79 = sphi 0, %s78
    %s93 = sphi 0, %s79
    %s97 = sphi 0, %s97
    %s99 = sphi 0, %s97
    %s100 = sphi 0, %s99
    %s114 = sphi 0, %s100
    %s120 = sphi 0, %s122
    %s123 = sphi 0, %s120
    %s124 = sphi 0, %s123
    %s140 = sphi 0, %s124
    %s148 = sphi 0, %s150
    %s151 = sphi 0, %s148
    %s152 = sphi 0, %s151
    %s168 = sphi 0, %s152
    %s172 = sphi 0, %s172
    %s174 = sphi 0, %s172
    %s175 = sphi 0, %s174
    %s189 = sphi 0, %s175
    %s193 = sphi 0, %s193
    %s195 = sphi 0, %s193
    %s196 = sphi 0, %s195
    %s210 = sphi 0, %s196
  $region4: #{protein_lstm_encoder.3} parent=0 // loop_header_branch
    %17 = sbr.rel (%p15) target = $region8
  $region5: #{protein_lstm_encoder.3} parent=0 // loop_body
    %s19 = ssub.s32 %s14, 1
    %s20 = ssub.s32 %s14, 2
    %s21 = sadd.s32 %s14, 1
    %s22 = ssub.s32 %s14, %s21
    %p23 = scmp.eq.s32.totalorder %s22, 0
    %s25 = sadd.s32 %s24, 1
    %s26 = scalar_select %p23, %s24, %s25
    %p29 = pneg %p23
    %p30 = scmp.eq.s32.totalorder %s14, 2
    %p31 = por %p29, %p30
    %p32 = scmp.ne.s32.totalorder %s24, %s27
    %p33 = scmp.eq.s32.totalorder %s14, 0
    %p34 = por %p32, %p33
    %p35 = scmp.ne.s32.totalorder %s24, %s27
    %p36 = scmp.eq.s32.totalorder %s19, 2
    %p37 = por %p35, %p36
    %p38 = scmp.ne.s32.totalorder %s27, %s28
    %p39 = scmp.eq.s32.totalorder %s19, 0
    %p40 = por %p38, %p39
    %p41 = scmp.ne.s32.totalorder %s27, %s28
    %p42 = scmp.eq.s32.totalorder %s20, 2
    %p43 = por %p41, %p42
    %p45 = scmp.ne.s32.totalorder %s28, %s44
    %p46 = scmp.eq.s32.totalorder %s20, 0
    %p47 = por %p45, %p46
    %s48 = ssub.s32 2, %s14
    %s49 = ssub.s32 2, %s21
    %s50 = ssub.s32 %s48, %s49
    %p51 = scmp.eq.s32.totalorder %s50, 0
    %s53 = sadd.s32 %s52, 1
    %s54 = scalar_select %p51, %s52, %s53
    %p57 = pneg %p51
    %p58 = scmp.eq.s32.totalorder %s14, 2
    %p59 = por %p57, %p58
    %p60 = scmp.ne.s32.totalorder %s52, %s55
    %p61 = scmp.eq.s32.totalorder %s14, 0
    %p62 = por %p60, %p61
    %p63 = scmp.ne.s32.totalorder %s52, %s55
    %p64 = scmp.eq.s32.totalorder %s19, 2
    %p65 = por %p63, %p64
    %p66 = scmp.ne.s32.totalorder %s55, %s56
    %p67 = scmp.eq.s32.totalorder %s19, 0
    %p68 = por %p66, %p67
    %p69 = scmp.ne.s32.totalorder %s55, %s56
    %p70 = scmp.eq.s32.totalorder %s20, 2
    %p71 = por %p69, %p70
    %p73 = scmp.ne.s32.totalorder %s56, %s72
    %p74 = scmp.eq.s32.totalorder %s20, 0
    %p75 = por %p73, %p74
    %s77 = sadd.s32 %s76, 1
    %p80 = scmp.eq.s32.totalorder %s14, 2
    %p81 = scmp.ne.s32.totalorder %s76, %s78
    %p82 = scmp.eq.s32.totalorder %s14, 0
    %p83 = por %p81, %p82
    %p84 = scmp.ne.s32.totalorder %s76, %s78
    %p85 = scmp.eq.s32.totalorder %s19, 2
    %p86 = por %p84, %p85
    %p87 = scmp.ne.s32.totalorder %s78, %s79
    %p88 = scmp.eq.s32.totalorder %s19, 0
    %p89 = por %p87, %p88
    %p90 = scmp.ne.s32.totalorder %s78, %s79
    %p91 = scmp.eq.s32.totalorder %s20, 2
    %p92 = por %p90, %p91
    %p94 = scmp.ne.s32.totalorder %s79, %s93
    %p95 = scmp.eq.s32.totalorder %s20, 0
    %p96 = por %p94, %p95
    %s98 = sadd.s32 %s97, 1
    %p101 = scmp.eq.s32.totalorder %s14, 2
    %p102 = scmp.ne.s32.totalorder %s97, %s99
    %p103 = scmp.eq.s32.totalorder %s14, 0
    %p104 = por %p102, %p103
    %p105 = scmp.ne.s32.totalorder %s97, %s99
    %p106 = scmp.eq.s32.totalorder %s19, 2
    %p107 = por %p105, %p106
    %p108 = scmp.ne.s32.totalorder %s99, %s100
    %p109 = scmp.eq.s32.totalorder %s19, 0
    %p110 = por %p108, %p109
    %p111 = scmp.ne.s32.totalorder %s99, %s100
    %p112 = scmp.eq.s32.totalorder %s20, 2
    %p113 = por %p111, %p112
    %p115 = scmp.ne.s32.totalorder %s100, %s114
    %p116 = scmp.eq.s32.totalorder %s20, 0
    %p117 = por %p115, %p116
    %s118 = ssub.s32 %s14, %s21
    %p119 = scmp.eq.s32.totalorder %s118, 0
    %s121 = sadd.s32 %s120, 1
    %s122 = scalar_select %p119, %s120, %s121
    %p125 = pneg %p119
    %p126 = scmp.eq.s32.totalorder %s14, 2
    %p127 = por %p125, %p126
    %p128 = scmp.ne.s32.totalorder %s120, %s123
    %p129 = scmp.eq.s32.totalorder %s14, 0
    %p130 = por %p128, %p129
    %p131 = scmp.ne.s32.totalorder %s120, %s123
    %p132 = scmp.eq.s32.totalorder %s19, 2
    %p133 = por %p131, %p132
    %p134 = scmp.ne.s32.totalorder %s123, %s124
    %p135 = scmp.eq.s32.totalorder %s19, 0
    %p136 = por %p134, %p135
    %p137 = scmp.ne.s32.totalorder %s123, %s124
    %p138 = scmp.eq.s32.totalorder %s20, 2
    %p139 = por %p137, %p138
    %p141 = scmp.ne.s32.totalorder %s124, %s140
    %p142 = scmp.eq.s32.totalorder %s20, 0
    %p143 = por %p141, %p142
    %s144 = ssub.s32 2, %s14
    %s145 = ssub.s32 2, %s21
    %s146 = ssub.s32 %s144, %s145
    %p147 = scmp.eq.s32.totalorder %s146, 0
    %s149 = sadd.s32 %s148, 1
    %s150 = scalar_select %p147, %s148, %s149
    %p153 = pneg %p147
    %p154 = scmp.eq.s32.totalorder %s14, 2
    %p155 = por %p153, %p154
    %p156 = scmp.ne.s32.totalorder %s148, %s151
    %p157 = scmp.eq.s32.totalorder %s14, 0
    %p158 = por %p156, %p157
    %p159 = scmp.ne.s32.totalorder %s148, %s151
    %p160 = scmp.eq.s32.totalorder %s19, 2
    %p161 = por %p159, %p160
    %p162 = scmp.ne.s32.totalorder %s151, %s152
    %p163 = scmp.eq.s32.totalorder %s19, 0
    %p164 = por %p162, %p163
    %p165 = scmp.ne.s32.totalorder %s151, %s152
    %p166 = scmp.eq.s32.totalorder %s20, 2
    %p167 = por %p165, %p166
    %p169 = scmp.ne.s32.totalorder %s152, %s168
    %p170 = scmp.eq.s32.totalorder %s20, 0
    %p171 = por %p169, %p170
    %s173 = sadd.s32 %s172, 1
    %p176 = scmp.eq.s32.totalorder %s14, 2
    %p177 = scmp.ne.s32.totalorder %s172, %s174
    %p178 = scmp.eq.s32.totalorder %s14, 0
    %p179 = por %p177, %p178
    %p180 = scmp.ne.s32.totalorder %s172, %s174
    %p181 = scmp.eq.s32.totalorder %s19, 2
    %p182 = por %p180, %p181
    %p183 = scmp.ne.s32.totalorder %s174, %s175
    %p184 = scmp.eq.s32.totalorder %s19, 0
    %p185 = por %p183, %p184
    %p186 = scmp.ne.s32.totalorder %s174, %s175
    %p187 = scmp.eq.s32.totalorder %s20, 2
    %p188 = por %p186, %p187
    %p190 = scmp.ne.s32.totalorder %s175, %s189
    %p191 = scmp.eq.s32.totalorder %s20, 0
    %p192 = por %p190, %p191
    %s194 = sadd.s32 %s193, 1
    %p197 = scmp.eq.s32.totalorder %s14, 2
    %p198 = scmp.ne.s32.totalorder %s193, %s195
    %p199 = scmp.eq.s32.totalorder %s14, 0
    %p200 = por %p198, %p199
    %p201 = scmp.ne.s32.totalorder %s193, %s195
    %p202 = scmp.eq.s32.totalorder %s19, 2
    %p203 = por %p201, %p202
    %p204 = scmp.ne.s32.totalorder %s195, %s196
    %p205 = scmp.eq.s32.totalorder %s19, 0
    %p206 = por %p204, %p205
    %p207 = scmp.ne.s32.totalorder %s195, %s196
    %p208 = scmp.eq.s32.totalorder %s20, 2
    %p209 = por %p207, %p208
    %p211 = scmp.ne.s32.totalorder %s196, %s210
    %p212 = scmp.eq.s32.totalorder %s20, 0
    %p213 = por %p211, %p212
    %p214 = scmp.le.s32.totalorder 1, %s14
    %p215 = scmp.lt.s32.totalorder %s14, 4
    %p216 = pnand %p214, %p215
    %p217 = pneg %p216
    // Predicated region
    $region9: #{protein_lstm_encoder.3} parent=5 // pred_check
      _
    $region10: #{protein_lstm_encoder.3} parent=5 // pred_check_branch
      %219 = sbr.rel (%p216) target = $region12
    $region11: #{protein_lstm_encoder.3} parent=5 // pred_region
      %s220 = ssub.s32 %s14, 1
      // Predicated region
      $region13: #{protein_lstm_encoder.3} parent=11 // pred_check
        %p221 = pneg %p89
      $region14: #{protein_lstm_encoder.3} parent=11 // pred_check_branch
        %223 = sbr.rel (%p221) target = $region16
      $region15: #{protein_lstm_encoder.3} parent=11 // pred_region
        _
      $region16: #{protein_lstm_encoder.3} parent=11 // pred_fallthru
        _
      // Predicated region
      $region17: #{protein_lstm_encoder.3} parent=11 // pred_check
        %p224 = pneg %p110
      $region18: #{protein_lstm_encoder.3} parent=11 // pred_check_branch
        %226 = sbr.rel (%p224) target = $region20
      $region19: #{protein_lstm_encoder.3} parent=11 // pred_region
        %s227 = scalar_lea.vmem %s3, 512
      $region20: #{protein_lstm_encoder.3} parent=11 // pred_fallthru
        _
    $region12: #{protein_lstm_encoder.3} parent=5 // pred_fallthru
      _
    %p228 = scmp.lt.s32.totalorder %s14, 3
    // Predicated region
    $region21: #{protein_lstm_encoder.3} parent=5 // pred_check
      %p229 = pneg %p228
    $region22: #{protein_lstm_encoder.3} parent=5 // pred_check_branch
      %231 = sbr.rel (%p229) target = $region24
    $region23: #{protein_lstm_encoder.3} parent=5 // pred_region
      // Predicated region
      $region25: #{protein_lstm_encoder.3} parent=23 // pred_check
        %p232 = pneg %p34
      $region26: #{protein_lstm_encoder.3} parent=23 // pred_check_branch
        %234 = sbr.rel (%p232) target = $region28
      $region27: #{protein_lstm_encoder.3} parent=23 // pred_region
        %s235 = smul.u32 5, %s14
        %p236 = scmp.lt.s32.totalorder %s235, 14
        %s237 = scalar_select %p236, %s235, 14
        %s238 = smul.addr %s237, 4
        %s239 = smul.addr %s238, 8
        %s240 = scalar_lea.vmem %s0, %s239
        %s241 = smul.u32 5, %s14
      $region28: #{protein_lstm_encoder.3} parent=23 // pred_fallthru
        _
      // Predicated region
      $region29: #{protein_lstm_encoder.3} parent=23 // pred_check
        %p242 = pneg %p62
      $region30: #{protein_lstm_encoder.3} parent=23 // pred_check_branch
        %244 = sbr.rel (%p242) target = $region32
      $region31: #{protein_lstm_encoder.3} parent=23 // pred_region
        %s245 = ssub.s32 2, %s14
        %s246 = smul.u32 5, %s245
        %p247 = scmp.lt.s32.totalorder %s246, 14
        %s248 = scalar_select %p247, %s246, 14
        %s249 = smul.addr %s248, 4
        %s250 = sadd.s32 %s249, 60
        %s251 = smul.addr %s250, 8
        %s252 = scalar_lea.vmem %s1, %s251
        %s253 = ssub.s32 2, %s14
        %s254 = smul.u32 5, %s253
      $region32: #{protein_lstm_encoder.3} parent=23 // pred_fallthru
        _
    $region24: #{protein_lstm_encoder.3} parent=5 // pred_fallthru
      _
    %p255 = scmp.le.s32.totalorder 1, %s14
    %p256 = scmp.lt.s32.totalorder %s14, 4
    %p257 = pnand %p255, %p256
    %p258 = pneg %p257
    // Predicated region
    $region33: #{protein_lstm_encoder.3} parent=5 // pred_check
      _
    $region34: #{protein_lstm_encoder.3} parent=5 // pred_check_branch
      %260 = sbr.rel (%p257) target = $region36
    $region35: #{protein_lstm_encoder.3} parent=5 // pred_region
      %s261 = ssub.s32 %s14, 1
      %s262 = smul.u32 5, %s19
      %p263 = scmp.lt.s32.totalorder %s262, 14
      %s264 = scalar_select %p263, %s262, 14
      %s265 = smul.addr %s264, 4
      %s266 = smul.addr %s265, 8
      %s267 = scalar_lea.vmem %s0, %s266
      %p268 = pneg %p40
      %p269 = pneg %p37
      %s270 = ssub.s32 2, %s19
      %s271 = smul.u32 5, %s270
      %p272 = scmp.lt.s32.totalorder %s271, 14
      %s273 = scalar_select %p272, %s271, 14
      %s274 = smul.addr %s273, 4
      %s275 = sadd.s32 %s274, 60
      %s276 = smul.addr %s275, 8
      %s277 = scalar_lea.vmem %s1, %s276
      %p278 = pneg %p68
      %p279 = pneg %p65
      %p280 = pneg %p89
      %p281 = pneg %p86
      %s282 = scalar_lea.vmem %s3, 512
      %p283 = pneg %p110
      %p284 = pneg %p107
      %p285 = pneg %p136
      %p286 = pneg %p133
      %s287 = smul.u32 5, %s19
      %p288 = scmp.lt.s32.totalorder %s287, 14
      %s289 = scalar_select %p288, %s287, 14
      %s290 = smul.addr %s289, 8
      %s291 = scalar_lea.vmem %s4, %s290
      %p292 = pneg %p164
      %p293 = pneg %p161
      %s294 = ssub.s32 2, %s19
      %s295 = smul.u32 5, %s294
      %p296 = scmp.lt.s32.totalorder %s295, 14
      %s297 = scalar_select %p296, %s295, 14
      %s298 = smul.addr %s297, 8
      %s299 = scalar_lea.vmem %s5, %s298
      %p300 = pneg %p185
      %p301 = pneg %p182
      %p302 = pneg %p206
      %p303 = pneg %p203
      %s304 = smul.u32 5, %s19
      %p305 = scmp.lt.s32.totalorder %s304, 14
      %s306 = scalar_select %p305, %s304, 14
      %s307 = smul.addr %s306, 4
      %s308 = smul.addr %s307, 8
      %s309 = scalar_lea.vmem %s0, %s308
      %s310 = smul.u32 5, %s19
      %s311 = ssub.s32 2, %s19
      %s312 = smul.u32 5, %s311
      %p313 = scmp.lt.s32.totalorder %s312, 14
      %s314 = scalar_select %p313, %s312, 14
      %s315 = smul.addr %s314, 4
      %s316 = sadd.s32 %s315, 60
      %s317 = smul.addr %s316, 8
      %s318 = scalar_lea.vmem %s1, %s317
      %s319 = ssub.s32 2, %s19
      %s320 = smul.u32 5, %s319
      %s321 = scalar_lea.vmem %s3, 512
      %s322 = smul.u32 5, %s19
      %p323 = scmp.lt.s32.totalorder %s322, 14
      %s324 = scalar_select %p323, %s322, 14
      %s325 = smul.addr %s324, 8
      %s326 = scalar_lea.vmem %s4, %s325
      %s327 = smul.u32 5, %s19
      %s328 = ssub.s32 2, %s19
      %s329 = smul.u32 5, %s328
      %p330 = scmp.lt.s32.totalorder %s329, 14
      %s331 = scalar_select %p330, %s329, 14
      %s332 = smul.addr %s331, 8
      %s333 = scalar_lea.vmem %s5, %s332
      %s334 = ssub.s32 2, %s19
      %s335 = smul.u32 5, %s334
      %p336 = scmp.eq.s32.totalorder %s19, 0
      // Predicated region
      $region37: #{protein_lstm_encoder.3} parent=35 // pred_check
        %p337 = pneg %p336
      $region38: #{protein_lstm_encoder.3} parent=35 // pred_check_branch
        %339 = sbr.rel (%p337) target = $region40
      $region39: #{protein_lstm_encoder.3} parent=35 // pred_region
        %340 = vst [vmem:[#allocation2] sm:$0xff] 0.0
        %341 = vst [vmem:[#allocation2 + $0x8] sm:$0xff] 0.0
        %342 = vst [vmem:[#allocation3] sm:$0xff] 0.0
        %343 = vst [vmem:[#allocation3 + $0x8] sm:$0xff] 0.0
      $region40: #{protein_lstm_encoder.3} parent=35 // pred_fallthru
        _
      %v344 = vld [vmem:[%s2] sm:$0xff]
      %v345 = vld [vmem:[%s2 + $0x8] sm:$0xff]
      %v346 = vld [vmem:[%s2 + $0x10] sm:$0xff]
      %v347 = vld [vmem:[%s2 + $0x18] sm:$0xff]
      %v348 = vld [vmem:[%s2 + $0x20] sm:$0xff]
      %v349 = vld [vmem:[%s2 + $0x28] sm:$0xff]
      %v350 = vld [vmem:[%s2 + $0x30] sm:$0xff]
      %v351 = vld [vmem:[%s2 + $0x38] sm:$0xff]
      %v352 = vld [vmem:[%s2 + $0x40] sm:$0xff]
      %v353 = vld [vmem:[%s2 + $0x48] sm:$0xff]
      %v354 = vld [vmem:[%s2 + $0x50] sm:$0xff]
      %v355 = vld [vmem:[%s2 + $0x58] sm:$0xff]
      %v356 = vld [vmem:[%s2 + $0x60] sm:$0xff]
      %v357 = vld [vmem:[%s2 + $0x68] sm:$0xff]
      %v358 = vld [vmem:[%s2 + $0x70] sm:$0xff]
      %v359 = vld [vmem:[%s2 + $0x78] sm:$0xff]
      %v360 = vld [vmem:[%s2 + $0x80] sm:$0xff]
      %v361 = vld [vmem:[%s2 + $0x88] sm:$0xff]
      %v362 = vld [vmem:[%s2 + $0x90] sm:$0xff]
      %v363 = vld [vmem:[%s2 + $0x98] sm:$0xff]
      %v364 = vld [vmem:[%s2 + $0xa0] sm:$0xff]
      %v365 = vld [vmem:[%s2 + $0xa8] sm:$0xff]
      %v366 = vld [vmem:[%s2 + $0xb0] sm:$0xff]
      %v367 = vld [vmem:[%s2 + $0xb8] sm:$0xff]
      %v368 = vld [vmem:[%s2 + $0xc0] sm:$0xff]
      %v369 = vld [vmem:[%s2 + $0xc8] sm:$0xff]
      %v370 = vld [vmem:[%s2 + $0xd0] sm:$0xff]
      %v371 = vld [vmem:[%s2 + $0xd8] sm:$0xff]
      %v372 = vld [vmem:[%s2 + $0xe0] sm:$0xff]
      %v373 = vld [vmem:[%s2 + $0xe8] sm:$0xff]
      %v374 = vld [vmem:[%s2 + $0xf0] sm:$0xff]
      %v375 = vld [vmem:[%s2 + $0xf8] sm:$0xff]
      %v376 = vld [vmem:[%s2 + $0x100] sm:$0xff]
      %v377 = vld [vmem:[%s2 + $0x108] sm:$0xff]
      %v378 = vld [vmem:[%s2 + $0x110] sm:$0xff]
      %v379 = vld [vmem:[%s2 + $0x118] sm:$0xff]
      %v380 = vld [vmem:[%s2 + $0x120] sm:$0xff]
      %v381 = vld [vmem:[%s2 + $0x128] sm:$0xff]
      %v382 = vld [vmem:[%s2 + $0x130] sm:$0xff]
      %v383 = vld [vmem:[%s2 + $0x138] sm:$0xff]
      %v384 = vld [vmem:[%s2 + $0x140] sm:$0xff]
      %v385 = vld [vmem:[%s2 + $0x148] sm:$0xff]
      %v386 = vld [vmem:[%s2 + $0x150] sm:$0xff]
      %v387 = vld [vmem:[%s2 + $0x158] sm:$0xff]
      %v388 = vld [vmem:[%s2 + $0x160] sm:$0xff]
      %v389 = vld [vmem:[%s2 + $0x168] sm:$0xff]
      %v390 = vld [vmem:[%s2 + $0x170] sm:$0xff]
      %v391 = vld [vmem:[%s2 + $0x178] sm:$0xff]
      %v392 = vld [vmem:[%s2 + $0x180] sm:$0xff]
      %v393 = vld [vmem:[%s2 + $0x188] sm:$0xff]
      %v394 = vld [vmem:[%s2 + $0x190] sm:$0xff]
      %v395 = vld [vmem:[%s2 + $0x198] sm:$0xff]
      %v396 = vld [vmem:[%s2 + $0x1a0] sm:$0xff]
      %v397 = vld [vmem:[%s2 + $0x1a8] sm:$0xff]
      %v398 = vld [vmem:[%s2 + $0x1b0] sm:$0xff]
      %v399 = vld [vmem:[%s2 + $0x1b8] sm:$0xff]
      %v400 = vld [vmem:[%s2 + $0x1c0] sm:$0xff]
      %v401 = vld [vmem:[%s2 + $0x1c8] sm:$0xff]
      %v402 = vld [vmem:[%s2 + $0x1d0] sm:$0xff]
      %v403 = vld [vmem:[%s2 + $0x1d8] sm:$0xff]
      %v404 = vld [vmem:[%s2 + $0x1e0] sm:$0xff]
      %v405 = vld [vmem:[%s2 + $0x1e8] sm:$0xff]
      %v406 = vld [vmem:[%s2 + $0x1f0] sm:$0xff]
      %v407 = vld [vmem:[%s2 + $0x1f8] sm:$0xff]
      %v408 = vld [vmem:[%s321] sm:$0xff]
      %v409 = vld [vmem:[%s321 + $0x8] sm:$0xff]
      %v410 = vld [vmem:[%s321 + $0x10] sm:$0xff]
      %v411 = vld [vmem:[%s321 + $0x18] sm:$0xff]
      %v412 = vld [vmem:[%s321 + $0x20] sm:$0xff]
      %v413 = vld [vmem:[%s321 + $0x28] sm:$0xff]
      %v414 = vld [vmem:[%s321 + $0x30] sm:$0xff]
      %v415 = vld [vmem:[%s321 + $0x38] sm:$0xff]
      %v416 = vld [vmem:[%s321 + $0x40] sm:$0xff]
      %v417 = vld [vmem:[%s321 + $0x48] sm:$0xff]
      %v418 = vld [vmem:[%s321 + $0x50] sm:$0xff]
      %v419 = vld [vmem:[%s321 + $0x58] sm:$0xff]
      %v420 = vld [vmem:[%s321 + $0x60] sm:$0xff]
      %v421 = vld [vmem:[%s321 + $0x68] sm:$0xff]
      %v422 = vld [vmem:[%s321 + $0x70] sm:$0xff]
      %v423 = vld [vmem:[%s321 + $0x78] sm:$0xff]
      %v424 = vld [vmem:[%s321 + $0x80] sm:$0xff]
      %v425 = vld [vmem:[%s321 + $0x88] sm:$0xff]
      %v426 = vld [vmem:[%s321 + $0x90] sm:$0xff]
      %v427 = vld [vmem:[%s321 + $0x98] sm:$0xff]
      %v428 = vld [vmem:[%s321 + $0xa0] sm:$0xff]
      %v429 = vld [vmem:[%s321 + $0xa8] sm:$0xff]
      %v430 = vld [vmem:[%s321 + $0xb0] sm:$0xff]
      %v431 = vld [vmem:[%s321 + $0xb8] sm:$0xff]
      %v432 = vld [vmem:[%s321 + $0xc0] sm:$0xff]
      %v433 = vld [vmem:[%s321 + $0xc8] sm:$0xff]
      %v434 = vld [vmem:[%s321 + $0xd0] sm:$0xff]
      %v435 = vld [vmem:[%s321 + $0xd8] sm:$0xff]
      %v436 = vld [vmem:[%s321 + $0xe0] sm:$0xff]
      %v437 = vld [vmem:[%s321 + $0xe8] sm:$0xff]
      %v438 = vld [vmem:[%s321 + $0xf0] sm:$0xff]
      %v439 = vld [vmem:[%s321 + $0xf8] sm:$0xff]
      %v440 = vld [vmem:[%s321 + $0x100] sm:$0xff]
      %v441 = vld [vmem:[%s321 + $0x108] sm:$0xff]
      %v442 = vld [vmem:[%s321 + $0x110] sm:$0xff]
      %v443 = vld [vmem:[%s321 + $0x118] sm:$0xff]
      %v444 = vld [vmem:[%s321 + $0x120] sm:$0xff]
      %v445 = vld [vmem:[%s321 + $0x128] sm:$0xff]
      %v446 = vld [vmem:[%s321 + $0x130] sm:$0xff]
      %v447 = vld [vmem:[%s321 + $0x138] sm:$0xff]
      %v448 = vld [vmem:[%s321 + $0x140] sm:$0xff]
      %v449 = vld [vmem:[%s321 + $0x148] sm:$0xff]
      %v450 = vld [vmem:[%s321 + $0x150] sm:$0xff]
      %v451 = vld [vmem:[%s321 + $0x158] sm:$0xff]
      %v452 = vld [vmem:[%s321 + $0x160] sm:$0xff]
      %v453 = vld [vmem:[%s321 + $0x168] sm:$0xff]
      %v454 = vld [vmem:[%s321 + $0x170] sm:$0xff]
      %v455 = vld [vmem:[%s321 + $0x178] sm:$0xff]
      %v456 = vld [vmem:[%s321 + $0x180] sm:$0xff]
      %v457 = vld [vmem:[%s321 + $0x188] sm:$0xff]
      %v458 = vld [vmem:[%s321 + $0x190] sm:$0xff]
      %v459 = vld [vmem:[%s321 + $0x198] sm:$0xff]
      %v460 = vld [vmem:[%s321 + $0x1a0] sm:$0xff]
      %v461 = vld [vmem:[%s321 + $0x1a8] sm:$0xff]
      %v462 = vld [vmem:[%s321 + $0x1b0] sm:$0xff]
      %v463 = vld [vmem:[%s321 + $0x1b8] sm:$0xff]
      %v464 = vld [vmem:[%s321 + $0x1c0] sm:$0xff]
      %v465 = vld [vmem:[%s321 + $0x1c8] sm:$0xff]
      %v466 = vld [vmem:[%s321 + $0x1d0] sm:$0xff]
      %v467 = vld [vmem:[%s321 + $0x1d8] sm:$0xff]
      %v468 = vld [vmem:[%s321 + $0x1e0] sm:$0xff]
      %v469 = vld [vmem:[%s321 + $0x1e8] sm:$0xff]
      %v470 = vld [vmem:[%s321 + $0x1f0] sm:$0xff]
      %v471 = vld [vmem:[%s321 + $0x1f8] sm:$0xff]
      %s472 = smul.u32 %s19, 5
      %s473 = ssub.s32 2, %s19
      %s474 = smul.u32 %s473, 5
      %v475 = vld [vmem:[#allocation2] sm:$0xff]
      %v476 = vld [vmem:[#allocation3] sm:$0xff]
      %s477 = scalar_lea.vmem [#allocation2], 8
      %v478 = vld [vmem:[%s477] sm:$0xff]
      %s479 = scalar_lea.vmem [#allocation3], 8
      %v480 = vld [vmem:[%s479] sm:$0xff]
      %p481 = scmp.lt.s32.totalorder %s472, 12
      %s482 = sadd.s32 %s474, 4
      %p483 = scmp.lt.s32.totalorder %s482, 12
      %v484 = vld [vmem:[%s309] sm:$0xff]
      %v485 = vld [vmem:[%s309 + $0x8] sm:$0xff]
      %v486 = vld [vmem:[%s309 + $0x10] sm:$0xff]
      %v487 = vld [vmem:[%s309 + $0x18] sm:$0xff]
      %488 = vmatprep.subr.mxu0 %v345
      %489 = vmatpush1.msra.mxu0 %v344
      %490 = vmatprep.subr.mxu0 %v349
      %491 = vmatpush1.msra.mxu0 %v348
      %492 = vmatprep.subr.mxu0 %v353
      %493 = vmatpush1.msra.mxu0 %v352
      %494 = vmatprep.subr.mxu0 %v357
      %495 = vmatpush1.msra.mxu0 %v356
      %496 = vmatprep.subr.mxu0 %v361
      %497 = vmatpush1.msra.mxu0 %v360
      %498 = vmatprep.subr.mxu0 %v365
      %499 = vmatpush1.msra.mxu0 %v364
      %500 = vmatprep.subr.mxu0 %v369
      %501 = vmatpush1.msra.mxu0 %v368
      %502 = vmatprep.subr.mxu0 %v373
      %503 = vmatpush1.msra.mxu0 %v372
      %504 = vmatprep.subr.mxu0 %v377
      %505 = vmatpush1.msra.mxu0 %v376
      %506 = vmatprep.subr.mxu0 %v381
      %507 = vmatpush1.msra.mxu0 %v380
      %508 = vmatprep.subr.mxu0 %v385
      %509 = vmatpush1.msra.mxu0 %v384
      %510 = vmatprep.subr.mxu0 %v389
      %511 = vmatpush1.msra.mxu0 %v388
      %512 = vmatprep.subr.mxu0 %v393
      %513 = vmatpush1.msra.mxu0 %v392
      %514 = vmatprep.subr.mxu0 %v397
      %515 = vmatpush1.msra.mxu0 %v396
      %516 = vmatprep.subr.mxu0 %v401
      %517 = vmatpush1.msra.mxu0 %v400
      %518 = vmatprep.subr.mxu0 %v405
      %519 = vmatpush1.msra.mxu0 %v404
      %520 = vmatprep.subr.mxu0 0.0
      %521 = vmatpush1.msra.mxu0 0.0
      %522 = vmatprep.subr.mxu0 0.0
      %523 = vmatpush1.msra.mxu0 0.0
      %524 = vmatprep.subr.mxu0 0.0
      %525 = vmatpush1.msra.mxu0 0.0
      %526 = vmatprep.subr.mxu0 0.0
      %527 = vmatpush1.msra.mxu0 0.0
      %528 = vmatprep.subr.mxu0 0.0
      %529 = vmatpush1.msra.mxu0 0.0
      %530 = vmatprep.subr.mxu0 0.0
      %531 = vmatpush1.msra.mxu0 0.0
      %532 = vmatprep.subr.mxu0 0.0
      %533 = vmatpush1.msra.mxu0 0.0
      %534 = vmatprep.subr.mxu0 0.0
      %535 = vmatpush1.msra.mxu0 0.0
      %536 = vmatprep.subr.mxu0 0.0
      %537 = vmatpush1.msra.mxu0 0.0
      %538 = vmatprep.subr.mxu0 0.0
      %539 = vmatpush1.msra.mxu0 0.0
      %540 = vmatprep.subr.mxu0 0.0
      %541 = vmatpush1.msra.mxu0 0.0
      %542 = vmatprep.subr.mxu0 0.0
      %543 = vmatpush1.msra.mxu0 0.0
      %544 = vmatprep.subr.mxu0 0.0
      %545 = vmatpush1.msra.mxu0 0.0
      %546 = vmatprep.subr.mxu0 0.0
      %547 = vmatpush1.msra.mxu0 0.0
      %548 = vmatprep.subr.mxu0 0.0
      %549 = vmatpush1.msra.mxu0 0.0
      %550 = vmatprep.subr.mxu0 0.0
      %551 = vmatpush1.msra.mxu0 0.0
      %552 = vmatprep.mubr.f32.mxu0 0.0
      %553 = vmatmul.mubr.f32.gmra.mrb[0].mxu0 %v475
      %v554 = vpop.f32.mrb[0].mxu0
      %v555 = vadd.f32 %v484, %v554
      %v556 = vpop.f32.mrb[0].mxu0
      %v557 = vadd.f32 %v485, %v556
      %558 = vdwg.mxu0
      %559 = vmatprep.subr.mxu0 %v347
      %560 = vmatpush1.msra.mxu0 %v346
      %561 = vmatprep.subr.mxu0 %v351
      %562 = vmatpush1.msra.mxu0 %v350
      %563 = vmatprep.subr.mxu0 %v355
      %564 = vmatpush1.msra.mxu0 %v354
      %565 = vmatprep.subr.mxu0 %v359
      %566 = vmatpush1.msra.mxu0 %v358
      %567 = vmatprep.subr.mxu0 %v363
      %568 = vmatpush1.msra.mxu0 %v362
      %569 = vmatprep.subr.mxu0 %v367
      %570 = vmatpush1.msra.mxu0 %v366
      %571 = vmatprep.subr.mxu0 %v371
      %572 = vmatpush1.msra.mxu0 %v370
      %573 = vmatprep.subr.mxu0 %v375
      %574 = vmatpush1.msra.mxu0 %v374
      %575 = vmatprep.subr.mxu0 %v379
      %576 = vmatpush1.msra.mxu0 %v378
      %577 = vmatprep.subr.mxu0 %v383
      %578 = vmatpush1.msra.mxu0 %v382
      %579 = vmatprep.subr.mxu0 %v387
      %580 = vmatpush1.msra.mxu0 %v386
      %581 = vmatprep.subr.mxu0 %v391
      %582 = vmatpush1.msra.mxu0 %v390
      %583 = vmatprep.subr.mxu0 %v395
      %584 = vmatpush1.msra.mxu0 %v394
      %585 = vmatprep.subr.mxu0 %v399
      %586 = vmatpush1.msra.mxu0 %v398
      %587 = vmatprep.subr.mxu0 %v403
      %588 = vmatpush1.msra.mxu0 %v402
      %589 = vmatprep.subr.mxu0 %v407
      %590 = vmatpush1.msra.mxu0 %v406
      %591 = vmatprep.subr.mxu0 0.0
      %592 = vmatpush1.msra.mxu0 0.0
      %593 = vmatprep.subr.mxu0 0.0
      %594 = vmatpush1.msra.mxu0 0.0
      %595 = vmatprep.subr.mxu0 0.0
      %596 = vmatpush1.msra.mxu0 0.0
      %597 = vmatprep.subr.mxu0 0.0
      %598 = vmatpush1.msra.mxu0 0.0
      %599 = vmatprep.subr.mxu0 0.0
      %600 = vmatpush1.msra.mxu0 0.0
      %601 = vmatprep.subr.mxu0 0.0
      %602 = vmatpush1.msra.mxu0 0.0
      %603 = vmatprep.subr.mxu0 0.0
      %604 = vmatpush1.msra.mxu0 0.0
      %605 = vmatprep.subr.mxu0 0.0
      %606 = vmatpush1.msra.mxu0 0.0
      %607 = vmatprep.subr.mxu0 0.0
      %608 = vmatpush1.msra.mxu0 0.0
      %609 = vmatprep.subr.mxu0 0.0
      %610 = vmatpush1.msra.mxu0 0.0
      %611 = vmatprep.subr.mxu0 0.0
      %612 = vmatpush1.msra.mxu0 0.0
      %613 = vmatprep.subr.mxu0 0.0
      %614 = vmatpush1.msra.mxu0 0.0
      %615 = vmatprep.subr.mxu0 0.0
      %616 = vmatpush1.msra.mxu0 0.0
      %617 = vmatprep.subr.mxu0 0.0
      %618 = vmatpush1.msra.mxu0 0.0
      %619 = vmatprep.subr.mxu0 0.0
      %620 = vmatpush1.msra.mxu0 0.0
      %621 = vmatprep.subr.mxu0 0.0
      %622 = vmatpush1.msra.mxu0 0.0
      %623 = vmatprep.mubr.f32.mxu0 0.0
      %624 = vmatmul.mubr.f32.gmra.mrb[0].mxu0 %v475
      %v625 = vpop.f32.mrb[0].mxu0
      %v626 = vadd.f32 %v486, %v625
      %v627 = vpop.f32.mrb[0].mxu0
      %v628 = vadd.f32 %v487, %v627
      %629 = vdwg.mxu0
      %s630 = scalar_lea.vmem %s318, 128
      %v631 = vld [vmem:[%s630] sm:$0xff]
      %v632 = vld [vmem:[%s630 + $0x8] sm:$0xff]
      %v633 = vld [vmem:[%s630 + $0x10] sm:$0xff]
      %v634 = vld [vmem:[%s630 + $0x18] sm:$0xff]
      %635 = vmatprep.subr.mxu0 %v409
      %636 = vmatpush1.msra.mxu0 %v408
      %637 = vmatprep.subr.mxu0 %v413
      %638 = vmatpush1.msra.mxu0 %v412
      %639 = vmatprep.subr.mxu0 %v417
      %640 = vmatpush1.msra.mxu0 %v416
      %641 = vmatprep.subr.mxu0 %v421
      %642 = vmatpush1.msra.mxu0 %v420
      %643 = vmatprep.subr.mxu0 %v425
      %644 = vmatpush1.msra.mxu0 %v424
      %645 = vmatprep.subr.mxu0 %v429
      %646 = vmatpush1.msra.mxu0 %v428
      %647 = vmatprep.subr.mxu0 %v433
      %648 = vmatpush1.msra.mxu0 %v432
      %649 = vmatprep.subr.mxu0 %v437
      %650 = vmatpush1.msra.mxu0 %v436
      %651 = vmatprep.subr.mxu0 %v441
      %652 = vmatpush1.msra.mxu0 %v440
      %653 = vmatprep.subr.mxu0 %v445
      %654 = vmatpush1.msra.mxu0 %v444
      %655 = vmatprep.subr.mxu0 %v449
      %656 = vmatpush1.msra.mxu0 %v448
      %657 = vmatprep.subr.mxu0 %v453
      %658 = vmatpush1.msra.mxu0 %v452
      %659 = vmatprep.subr.mxu0 %v457
      %660 = vmatpush1.msra.mxu0 %v456
      %661 = vmatprep.subr.mxu0 %v461
      %662 = vmatpush1.msra.mxu0 %v460
      %663 = vmatprep.subr.mxu0 %v465
      %664 = vmatpush1.msra.mxu0 %v464
      %665 = vmatprep.subr.mxu0 %v469
      %666 = vmatpush1.msra.mxu0 %v468
      %667 = vmatprep.subr.mxu0 0.0
      %668 = vmatpush1.msra.mxu0 0.0
      %669 = vmatprep.subr.mxu0 0.0
      %670 = vmatpush1.msra.mxu0 0.0
      %671 = vmatprep.subr.mxu0 0.0
      %672 = vmatpush1.msra.mxu0 0.0
      %673 = vmatprep.subr.mxu0 0.0
      %674 = vmatpush1.msra.mxu0 0.0
      %675 = vmatprep.subr.mxu0 0.0
      %676 = vmatpush1.msra.mxu0 0.0
      %677 = vmatprep.subr.mxu0 0.0
      %678 = vmatpush1.msra.mxu0 0.0
      %679 = vmatprep.subr.mxu0 0.0
      %680 = vmatpush1.msra.mxu0 0.0
      %681 = vmatprep.subr.mxu0 0.0
      %682 = vmatpush1.msra.mxu0 0.0
      %683 = vmatprep.subr.mxu0 0.0
      %684 = vmatpush1.msra.mxu0 0.0
      %685 = vmatprep.subr.mxu0 0.0
      %686 = vmatpush1.msra.mxu0 0.0
      %687 = vmatprep.subr.mxu0 0.0
      %688 = vmatpush1.msra.mxu0 0.0
      %689 = vmatprep.subr.mxu0 0.0
      %690 = vmatpush1.msra.mxu0 0.0
      %691 = vmatprep.subr.mxu0 0.0
      %692 = vmatpush1.msra.mxu0 0.0
      %693 = vmatprep.subr.mxu0 0.0
      %694 = vmatpush1.msra.mxu0 0.0
      %695 = vmatprep.subr.mxu0 0.0
      %696 = vmatpush1.msra.mxu0 0.0
      %697 = vmatprep.subr.mxu0 0.0
      %698 = vmatpush1.msra.mxu0 0.0
      %699 = vmatprep.mubr.f32.mxu0 0.0
      %700 = vmatmul.mubr.f32.gmra.mrb[0].mxu0 %v478
      %v701 = vpop.f32.mrb[0].mxu0
      %v702 = vadd.f32 %v631, %v701
      %v703 = vpop.f32.mrb[0].mxu0
      %v704 = vadd.f32 %v632, %v703
      %705 = vdwg.mxu0
      %706 = vmatprep.subr.mxu0 %v411
      %707 = vmatpush1.msra.mxu0 %v410
      %708 = vmatprep.subr.mxu0 %v415
      %709 = vmatpush1.msra.mxu0 %v414
      %710 = vmatprep.subr.mxu0 %v419
      %711 = vmatpush1.msra.mxu0 %v418
      %712 = vmatprep.subr.mxu0 %v423
      %713 = vmatpush1.msra.mxu0 %v422
      %714 = vmatprep.subr.mxu0 %v427
      %715 = vmatpush1.msra.mxu0 %v426
      %716 = vmatprep.subr.mxu0 %v431
      %717 = vmatpush1.msra.mxu0 %v430
      %718 = vmatprep.subr.mxu0 %v435
      %719 = vmatpush1.msra.mxu0 %v434
      %720 = vmatprep.subr.mxu0 %v439
      %721 = vmatpush1.msra.mxu0 %v438
      %722 = vmatprep.subr.mxu0 %v443
      %723 = vmatpush1.msra.mxu0 %v442
      %724 = vmatprep.subr.mxu0 %v447
      %725 = vmatpush1.msra.mxu0 %v446
      %726 = vmatprep.subr.mxu0 %v451
      %727 = vmatpush1.msra.mxu0 %v450
      %728 = vmatprep.subr.mxu0 %v455
      %729 = vmatpush1.msra.mxu0 %v454
      %730 = vmatprep.subr.mxu0 %v459
      %731 = vmatpush1.msra.mxu0 %v458
      %732 = vmatprep.subr.mxu0 %v463
      %733 = vmatpush1.msra.mxu0 %v462
      %734 = vmatprep.subr.mxu0 %v467
      %735 = vmatpush1.msra.mxu0 %v466
      %736 = vmatprep.subr.mxu0 %v471
      %737 = vmatpush1.msra.mxu0 %v470
      %738 = vmatprep.subr.mxu0 0.0
      %739 = vmatpush1.msra.mxu0 0.0
      %740 = vmatprep.subr.mxu0 0.0
      %741 = vmatpush1.msra.mxu0 0.0
      %742 = vmatprep.subr.mxu0 0.0
      %743 = vmatpush1.msra.mxu0 0.0
      %744 = vmatprep.subr.mxu0 0.0
      %745 = vmatpush1.msra.mxu0 0.0
      %746 = vmatprep.subr.mxu0 0.0
      %747 = vmatpush1.msra.mxu0 0.0
      %748 = vmatprep.subr.mxu0 0.0
      %749 = vmatpush1.msra.mxu0 0.0
      %750 = vmatprep.subr.mxu0 0.0
      %751 = vmatpush1.msra.mxu0 0.0
      %752 = vmatprep.subr.mxu0 0.0
      %753 = vmatpush1.msra.mxu0 0.0
      %754 = vmatprep.subr.mxu0 0.0
      %755 = vmatpush1.msra.mxu0 0.0
      %756 = vmatprep.subr.mxu0 0.0
      %757 = vmatpush1.msra.mxu0 0.0
      %758 = vmatprep.subr.mxu0 0.0
      %759 = vmatpush1.msra.mxu0 0.0
      %760 = vmatprep.subr.mxu0 0.0
      %761 = vmatpush1.msra.mxu0 0.0
      %762 = vmatprep.subr.mxu0 0.0
      %763 = vmatpush1.msra.mxu0 0.0
      %764 = vmatprep.subr.mxu0 0.0
      %765 = vmatpush1.msra.mxu0 0.0
      %766 = vmatprep.subr.mxu0 0.0
      %767 = vmatpush1.msra.mxu0 0.0
      %768 = vmatprep.subr.mxu0 0.0
      %769 = vmatpush1.msra.mxu0 0.0
      %770 = vmatprep.mubr.f32.mxu0 0.0
      %771 = vmatmul.mubr.f32.gmra.mrb[0].mxu0 %v478
      %v772 = vpop.f32.mrb[0].mxu0
      %v773 = vadd.f32 %v633, %v772
      %v774 = vpop.f32.mrb[0].mxu0
      %v775 = vadd.f32 %v634, %v774
      %776 = vdwg.mxu0
      %v777 = vmul.f32 %v555, 0.5
      %v778 = vtanh.pop %v777
      %v779 = vmul.f32 %v778, 0.5
      %v780 = vadd.f32 %v779, 0.5
      %v781 = vmul.f32 %v557, 0.5
      %v782 = vtanh.pop %v781
      %v783 = vmul.f32 %v782, 0.5
      %v784 = vadd.f32 %v783, 0.5
      %v785 = vtanh.pop %v626
      %v786 = vmul.f32 %v628, 0.5
      %v787 = vtanh.pop %v786
      %v788 = vmul.f32 %v787, 0.5
      %v789 = vadd.f32 %v788, 0.5
      %v790 = vmul.f32 %v784, %v476
      %v791 = vmul.f32 %v780, %v785
      %v792 = vadd.f32 %v790, %v791
      %v793 = vtanh.pop %v792
      %v794 = vmul.f32 %v789, %v793
      %v795 = vmul.f32 %v702, 0.5
      %v796 = vtanh.pop %v795
      %v797 = vmul.f32 %v796, 0.5
      %v798 = vadd.f32 %v797, 0.5
      %v799 = vmul.f32 %v704, 0.5
      %v800 = vtanh.pop %v799
      %v801 = vmul.f32 %v800, 0.5
      %v802 = vadd.f32 %v801, 0.5
      %v803 = vtanh.pop %v773
      %v804 = vmul.f32 %v775, 0.5
      %v805 = vtanh.pop %v804
      %v806 = vmul.f32 %v805, 0.5
      %v807 = vadd.f32 %v806, 0.5
      %v808 = vmul.f32 %v802, %v480
      %v809 = vmul.f32 %v798, %v803
      %v810 = vadd.f32 %v808, %v809
      %v811 = vtanh.pop %v810
      %v812 = vmul.f32 %v807, %v811
      %s813 = scalar_select %p481, 1, 0
      %v814 = vstv %s813
      %vm815 = vcmp.eq.s32.totalorder %v814, 1
      %v816 = vsel %vm815, %v794, %v475
      %v817 = vsel %vm815, %v792, %v476
      %s818 = scalar_select %p483, 1, 0
      %v819 = vstv %s818
      %vm820 = vcmp.eq.s32.totalorder %v819, 1
      %v821 = vsel %vm820, %v812, %v478
      %v822 = vsel %vm820, %v810, %v480
      %823 = vst [vmem:[%s326] sm:$0xff] %v816
      %s824 = scalar_lea.vmem %s333, 32
      %825 = vst [vmem:[%s824] sm:$0xff] %v821
      %s826 = sadd.s32 %s472, 1
      %p827 = scmp.lt.s32.totalorder %s826, 12
      %s828 = sadd.s32 %s474, 3
      %p829 = scmp.lt.s32.totalorder %s828, 12
      %s830 = scalar_lea.vmem %s309, 32
      %v831 = vld [vmem:[%s830] sm:$0xff]
      %v832 = vld [vmem:[%s830 + $0x8] sm:$0xff]
      %v833 = vld [vmem:[%s830 + $0x10] sm:$0xff]
      %v834 = vld [vmem:[%s830 + $0x18] sm:$0xff]
      %835 = vmatprep.subr.mxu0 %v345
      %836 = vmatpush1.msra.mxu0 %v344
      %837 = vmatprep.subr.mxu0 %v349
      %838 = vmatpush1.msra.mxu0 %v348
      %839 = vmatprep.subr.mxu0 %v353
      %840 = vmatpush1.msra.mxu0 %v352
      %841 = vmatprep.subr.mxu0 %v357
      %842 = vmatpush1.msra.mxu0 %v356
      %843 = vmatprep.subr.mxu0 %v361
      %844 = vmatpush1.msra.mxu0 %v360
      %845 = vmatprep.subr.mxu0 %v365
      %846 = vmatpush1.msra.mxu0 %v364
      %847 = vmatprep.subr.mxu0 %v369
      %848 = vmatpush1.msra.mxu0 %v368
      %849 = vmatprep.subr.mxu0 %v373
      %850 = vmatpush1.msra.mxu0 %v372
      %851 = vmatprep.subr.mxu0 %v377
      %852 = vmatpush1.msra.mxu0 %v376
      %853 = vmatprep.subr.mxu0 %v381
      %854 = vmatpush1.msra.mxu0 %v380
      %855 = vmatprep.subr.mxu0 %v385
      %856 = vmatpush1.msra.mxu0 %v384
      %857 = vmatprep.subr.mxu0 %v389
      %858 = vmatpush1.msra.mxu0 %v388
      %859 = vmatprep.subr.mxu0 %v393
      %860 = vmatpush1.msra.mxu0 %v392
      %861 = vmatprep.subr.mxu0 %v397
      %862 = vmatpush1.msra.mxu0 %v396
      %863 = vmatprep.subr.mxu0 %v401
      %864 = vmatpush1.msra.mxu0 %v400
      %865 = vmatprep.subr.mxu0 %v405
      %866 = vmatpush1.msra.mxu0 %v404
      %867 = vmatprep.subr.mxu0 0.0
      %868 = vmatpush1.msra.mxu0 0.0
      %869 = vmatprep.subr.mxu0 0.0
      %870 = vmatpush1.msra.mxu0 0.0
      %871 = vmatprep.subr.mxu0 0.0
      %872 = vmatpush1.msra.mxu0 0.0
      %873 = vmatprep.subr.mxu0 0.0
      %874 = vmatpush1.msra.mxu0 0.0
      %875 = vmatprep.subr.mxu0 0.0
      %876 = vmatpush1.msra.mxu0 0.0
      %877 = vmatprep.subr.mxu0 0.0
      %878 = vmatpush1.msra.mxu0 0.0
      %879 = vmatprep.subr.mxu0 0.0
      %880 = vmatpush1.msra.mxu0 0.0
      %881 = vmatprep.subr.mxu0 0.0
      %882 = vmatpush1.msra.mxu0 0.0
      %883 = vmatprep.subr.mxu0 0.0
      %884 = vmatpush1.msra.mxu0 0.0
      %885 = vmatprep.subr.mxu0 0.0
      %886 = vmatpush1.msra.mxu0 0.0
      %887 = vmatprep.subr.mxu0 0.0
      %888 = vmatpush1.msra.mxu0 0.0
      %889 = vmatprep.subr.mxu0 0.0
      %890 = vmatpush1.msra.mxu0 0.0
      %891 = vmatprep.subr.mxu0 0.0
      %892 = vmatpush1.msra.mxu0 0.0
      %893 = vmatprep.subr.mxu0 0.0
      %894 = vmatpush1.msra.mxu0 0.0
      %895 = vmatprep.subr.mxu0 0.0
      %896 = vmatpush1.msra.mxu0 0.0
      %897 = vmatprep.subr.mxu0 0.0
      %898 = vmatpush1.msra.mxu0 0.0
      %899 = vmatprep.mubr.f32.mxu0 0.0
      %900 = vmatmul.mubr.f32.gmra.mrb[0].mxu0 %v816
      %v901 = vpop.f32.mrb[0].mxu0
      %v902 = vadd.f32 %v831, %v901
      %v903 = vpop.f32.mrb[0].mxu0
      %v904 = vadd.f32 %v832, %v903
      %905 = vdwg.mxu0
      %906 = vmatprep.subr.mxu0 %v347
      %907 = vmatpush1.msra.mxu0 %v346
      %908 = vmatprep.subr.mxu0 %v351
      %909 = vmatpush1.msra.mxu0 %v350
      %910 = vmatprep.subr.mxu0 %v355
      %911 = vmatpush1.msra.mxu0 %v354
      %912 = vmatprep.subr.mxu0 %v359
      %913 = vmatpush1.msra.mxu0 %v358
      %914 = vmatprep.subr.mxu0 %v363
      %915 = vmatpush1.msra.mxu0 %v362
      %916 = vmatprep.subr.mxu0 %v367
      %917 = vmatpush1.msra.mxu0 %v366
      %918 = vmatprep.subr.mxu0 %v371
      %919 = vmatpush1.msra.mxu0 %v370
      %920 = vmatprep.subr.mxu0 %v375
      %921 = vmatpush1.msra.mxu0 %v374
      %922 = vmatprep.subr.mxu0 %v379
      %923 = vmatpush1.msra.mxu0 %v378
      %924 = vmatprep.subr.mxu0 %v383
      %925 = vmatpush1.msra.mxu0 %v382
      %926 = vmatprep.subr.mxu0 %v387
      %927 = vmatpush1.msra.mxu0 %v386
      %928 = vmatprep.subr.mxu0 %v391
      %929 = vmatpush1.msra.mxu0 %v390
      %930 = vmatprep.subr.mxu0 %v395
      %931 = vmatpush1.msra.mxu0 %v394
      %932 = vmatprep.subr.mxu0 %v399
      %933 = vmatpush1.msra.mxu0 %v398
      %934 = vmatprep.subr.mxu0 %v403
      %935 = vmatpush1.msra.mxu0 %v402
      %936 = vmatprep.subr.mxu0 %v407
      %937 = vmatpush1.msra.mxu0 %v406
      %938 = vmatprep.subr.mxu0 0.0
      %939 = vmatpush1.msra.mxu0 0.0
      %940 = vmatprep.subr.mxu0 0.0
      %941 = vmatpush1.msra.mxu0 0.0
      %942 = vmatprep.subr.mxu0 0.0
      %943 = vmatpush1.msra.mxu0 0.0
      %944 = vmatprep.subr.mxu0 0.0
      %945 = vmatpush1.msra.mxu0 0.0
      %946 = vmatprep.subr.mxu0 0.0
      %947 = vmatpush1.msra.mxu0 0.0
      %948 = vmatprep.subr.mxu0 0.0
      %949 = vmatpush1.msra.mxu0 0.0
      %950 = vmatprep.subr.mxu0 0.0
      %951 = vmatpush1.msra.mxu0 0.0
      %952 = vmatprep.subr.mxu0 0.0
      %953 = vmatpush1.msra.mxu0 0.0
      %954 = vmatprep.subr.mxu0 0.0
      %955 = vmatpush1.msra.mxu0 0.0
      %956 = vmatprep.subr.mxu0 0.0
      %957 = vmatpush1.msra.mxu0 0.0
      %958 = vmatprep.subr.mxu0 0.0
      %959 = vmatpush1.msra.mxu0 0.0
      %960 = vmatprep.subr.mxu0 0.0
      %961 = vmatpush1.msra.mxu0 0.0
      %962 = vmatprep.subr.mxu0 0.0
      %963 = vmatpush1.msra.mxu0 0.0
      %964 = vmatprep.subr.mxu0 0.0
      %965 = vmatpush1.msra.mxu0 0.0
      %966 = vmatprep.subr.mxu0 0.0
      %967 = vmatpush1.msra.mxu0 0.0
      %968 = vmatprep.subr.mxu0 0.0
      %969 = vmatpush1.msra.mxu0 0.0
      %970 = vmatprep.mubr.f32.mxu0 0.0
      %971 = vmatmul.mubr.f32.gmra.mrb[0].mxu0 %v816
      %v972 = vpop.f32.mrb[0].mxu0
      %v973 = vadd.f32 %v833, %v972
      %v974 = vpop.f32.mrb[0].mxu0
      %v975 = vadd.f32 %v834, %v974
      %976 = vdwg.mxu0
      %s977 = scalar_lea.vmem %s318, 96
      %v978 = vld [vmem:[%s977] sm:$0xff]
      %v979 = vld [vmem:[%s977 + $0x8] sm:$0xff]
      %v980 = vld [vmem:[%s977 + $0x10] sm:$0xff]
      %v981 = vld [vmem:[%s977 + $0x18] sm:$0xff]
      %982 = vmatprep.subr.mxu0 %v409
      %983 = vmatpush1.msra.mxu0 %v408
      %984 = vmatprep.subr.mxu0 %v413
      %985 = vmatpush1.msra.mxu0 %v412
      %986 = vmatprep.subr.mxu0 %v417
      %987 = vmatpush1.msra.mxu0 %v416
      %988 = vmatprep.subr.mxu0 %v421
      %989 = vmatpush1.msra.mxu0 %v420
      %990 = vmatprep.subr.mxu0 %v425
      %991 = vmatpush1.msra.mxu0 %v424
      %992 = vmatprep.subr.mxu0 %v429
      %993 = vmatpush1.msra.mxu0 %v428
      %994 = vmatprep.subr.mxu0 %v433
      %995 = vmatpush1.msra.mxu0 %v432
      %996 = vmatprep.subr.mxu0 %v437
      %997 = vmatpush1.msra.mxu0 %v436
      %998 = vmatprep.subr.mxu0 %v441
      %999 = vmatpush1.msra.mxu0 %v440
      %1000 = vmatprep.subr.mxu0 %v445
      %1001 = vmatpush1.msra.mxu0 %v444
      %1002 = vmatprep.subr.mxu0 %v449
      %1003 = vmatpush1.msra.mxu0 %v448
      %1004 = vmatprep.subr.mxu0 %v453
      %1005 = vmatpush1.msra.mxu0 %v452
      %1006 = vmatprep.subr.mxu0 %v457
      %1007 = vmatpush1.msra.mxu0 %v456
      %1008 = vmatprep.subr.mxu0 %v461
      %1009 = vmatpush1.msra.mxu0 %v460
      %1010 = vmatprep.subr.mxu0 %v465
      %1011 = vmatpush1.msra.mxu0 %v464
      %1012 = vmatprep.subr.mxu0 %v469
      %1013 = vmatpush1.msra.mxu0 %v468
      %1014 = vmatprep.subr.mxu0 0.0
      %1015 = vmatpush1.msra.mxu0 0.0
      %1016 = vmatprep.subr.mxu0 0.0
      %1017 = vmatpush1.msra.mxu0 0.0
      %1018 = vmatprep.subr.mxu0 0.0
      %1019 = vmatpush1.msra.mxu0 0.0
      %1020 = vmatprep.subr.mxu0 0.0
      %1021 = vmatpush1.msra.mxu0 0.0
      %1022 = vmatprep.subr.mxu0 0.0
      %1023 = vmatpush1.msra.mxu0 0.0
      %1024 = vmatprep.subr.mxu0 0.0
      %1025 = vmatpush1.msra.mxu0 0.0
      %1026 = vmatprep.subr.mxu0 0.0
      %1027 = vmatpush1.msra.mxu0 0.0
      %1028 = vmatprep.subr.mxu0 0.0
      %1029 = vmatpush1.msra.mxu0 0.0
      %1030 = vmatprep.subr.mxu0 0.0
      %1031 = vmatpush1.msra.mxu0 0.0
      %1032 = vmatprep.subr.mxu0 0.0
      %1033 = vmatpush1.msra.mxu0 0.0
      %1034 = vmatprep.subr.mxu0 0.0
      %1035 = vmatpush1.msra.mxu0 0.0
      %1036 = vmatprep.subr.mxu0 0.0
      %1037 = vmatpush1.msra.mxu0 0.0
      %1038 = vmatprep.subr.mxu0 0.0
      %1039 = vmatpush1.msra.mxu0 0.0
      %1040 = vmatprep.subr.mxu0 0.0
      %1041 = vmatpush1.msra.mxu0 0.0
      %1042 = vmatprep.subr.mxu0 0.0
      %1043 = vmatpush1.msra.mxu0 0.0
      %1044 = vmatprep.subr.mxu0 0.0
      %1045 = vmatpush1.msra.mxu0 0.0
      %1046 = vmatprep.mubr.f32.mxu0 0.0
      %1047 = vmatmul.mubr.f32.gmra.mrb[0].mxu0 %v821
      %v1048 = vpop.f32.mrb[0].mxu0
      %v1049 = vadd.f32 %v978, %v1048
      %v1050 = vpop.f32.mrb[0].mxu0
      %v1051 = vadd.f32 %v979, %v1050
      %1052 = vdwg.mxu0
      %1053 = vmatprep.subr.mxu0 %v411
      %1054 = vmatpush1.msra.mxu0 %v410
      %1055 = vmatprep.subr.mxu0 %v415
      %1056 = vmatpush1.msra.mxu0 %v414
      %1057 = vmatprep.subr.mxu0 %v419
      %1058 = vmatpush1.msra.mxu0 %v418
      %1059 = vmatprep.subr.mxu0 %v423
      %1060 = vmatpush1.msra.mxu0 %v422
      %1061 = vmatprep.subr.mxu0 %v427
      %1062 = vmatpush1.msra.mxu0 %v426
      %1063 = vmatprep.subr.mxu0 %v431
      %1064 = vmatpush1.msra.mxu0 %v430
      %1065 = vmatprep.subr.mxu0 %v435
      %1066 = vmatpush1.msra.mxu0 %v434
      %1067 = vmatprep.subr.mxu0 %v439
      %1068 = vmatpush1.msra.mxu0 %v438
      %1069 = vmatprep.subr.mxu0 %v443
      %1070 = vmatpush1.msra.mxu0 %v442
      %1071 = vmatprep.subr.mxu0 %v447
      %1072 = vmatpush1.msra.mxu0 %v446
      %1073 = vmatprep.subr.mxu0 %v451
      %1074 = vmatpush1.msra.mxu0 %v450
      %1075 = vmatprep.subr.mxu0 %v455
      %1076 = vmatpush1.msra.mxu0 %v454
      %1077 = vmatprep.subr.mxu0 %v459
      %1078 = vmatpush1.msra.mxu0 %v458
      %1079 = vmatprep.subr.mxu0 %v463
      %1080 = vmatpush1.msra.mxu0 %v462
      %1081 = vmatprep.subr.mxu0 %v467
      %1082 = vmatpush1.msra.mxu0 %v466
      %1083 = vmatprep.subr.mxu0 %v471
      %1084 = vmatpush1.msra.mxu0 %v470
      %1085 = vmatprep.subr.mxu0 0.0
      %1086 = vmatpush1.msra.mxu0 0.0
      %1087 = vmatprep.subr.mxu0 0.0
      %1088 = vmatpush1.msra.mxu0 0.0
      %1089 = vmatprep.subr.mxu0 0.0
      %1090 = vmatpush1.msra.mxu0 0.0
      %1091 = vmatprep.subr.mxu0 0.0
      %1092 = vmatpush1.msra.mxu0 0.0
      %1093 = vmatprep.subr.mxu0 0.0
      %1094 = vmatpush1.msra.mxu0 0.0
      %1095 = vmatprep.subr.mxu0 0.0
      %1096 = vmatpush1.msra.mxu0 0.0
      %1097 = vmatprep.subr.mxu0 0.0
      %1098 = vmatpush1.msra.mxu0 0.0
      %1099 = vmatprep.subr.mxu0 0.0
      %1100 = vmatpush1.msra.mxu0 0.0
      %1101 = vmatprep.subr.mxu0 0.0
      %1102 = vmatpush1.msra.mxu0 0.0
      %1103 = vmatprep.subr.mxu0 0.0
      %1104 = vmatpush1.msra.mxu0 0.0
      %1105 = vmatprep.subr.mxu0 0.0
      %1106 = vmatpush1.msra.mxu0 0.0
      %1107 = vmatprep.subr.mxu0 0.0
      %1108 = vmatpush1.msra.mxu0 0.0
      %1109 = vmatprep.subr.mxu0 0.0
      %1110 = vmatpush1.msra.mxu0 0.0
      %1111 = vmatprep.subr.mxu0 0.0
      %1112 = vmatpush1.msra.mxu0 0.0
      %1113 = vmatprep.subr.mxu0 0.0
      %1114 = vmatpush1.msra.mxu0 0.0
      %1115 = vmatprep.subr.mxu0 0.0
      %1116 = vmatpush1.msra.mxu0 0.0
      %1117 = vmatprep.mubr.f32.mxu0 0.0
      %1118 = vmatmul.mubr.f32.gmra.mrb[0].mxu0 %v821
      %v1119 = vpop.f32.mrb[0].mxu0
      %v1120 = vadd.f32 %v980, %v1119
      %v1121 = vpop.f32.mrb[0].mxu0
      %v1122 = vadd.f32 %v981, %v1121
      %1123 = vdwg.mxu0
      %v1124 = vmul.f32 %v902, 0.5
      %v1125 = vtanh.pop %v1124
      %v1126 = vmul.f32 %v1125, 0.5
      %v1127 = vadd.f32 %v1126, 0.5
      %v1128 = vmul.f32 %v904, 0.5
      %v1129 = vtanh.pop %v1128
      %v1130 = vmul.f32 %v1129, 0.5
      %v1131 = vadd.f32 %v1130, 0.5
      %v1132 = vtanh.pop %v973
      %v1133 = vmul.f32 %v975, 0.5
      %v1134 = vtanh.pop %v1133
      %v1135 = vmul.f32 %v1134, 0.5
      %v1136 = vadd.f32 %v1135, 0.5
      %v1137 = vmul.f32 %v1131, %v817
      %v1138 = vmul.f32 %v1127, %v1132
      %v1139 = vadd.f32 %v1137, %v1138
      %v1140 = vtanh.pop %v1139
      %v1141 = vmul.f32 %v1136, %v1140
      %v1142 = vmul.f32 %v1049, 0.5
      %v1143 = vtanh.pop %v1142
      %v1144 = vmul.f32 %v1143, 0.5
      %v1145 = vadd.f32 %v1144, 0.5
      %v1146 = vmul.f32 %v1051, 0.5
      %v1147 = vtanh.pop %v1146
      %v1148 = vmul.f32 %v1147, 0.5
      %v1149 = vadd.f32 %v1148, 0.5
      %v1150 = vtanh.pop %v1120
      %v1151 = vmul.f32 %v1122, 0.5
      %v1152 = vtanh.pop %v1151
      %v1153 = vmul.f32 %v1152, 0.5
      %v1154 = vadd.f32 %v1153, 0.5
      %v1155 = vmul.f32 %v1149, %v822
      %v1156 = vmul.f32 %v1145, %v1150
      %v1157 = vadd.f32 %v1155, %v1156
      %v1158 = vtanh.pop %v1157
      %v1159 = vmul.f32 %v1154, %v1158
      %s1160 = scalar_select %p827, 1, 0
      %v1161 = vstv %s1160
      %vm1162 = vcmp.eq.s32.totalorder %v1161, 1
      %v1163 = vsel %vm1162, %v1141, %v816
      %v1164 = vsel %vm1162, %v1139, %v817
      %s1165 = scalar_select %p829, 1, 0
      %v1166 = vstv %s1165
      %vm1167 = vcmp.eq.s32.totalorder %v1166, 1
      %v1168 = vsel %vm1167, %v1159, %v821
      %v1169 = vsel %vm1167, %v1157, %v822
      %s1170 = scalar_lea.vmem %s326, 8
      %1171 = vst [vmem:[%s1170] sm:$0xff] %v1163
      %s1172 = scalar_lea.vmem %s333, 24
      %1173 = vst [vmem:[%s1172] sm:$0xff] %v1168
      %s1174 = sadd.s32 %s472, 2
      %p1175 = scmp.lt.s32.totalorder %s1174, 12
      %s1176 = sadd.s32 %s474, 2
      %p1177 = scmp.lt.s32.totalorder %s1176, 12
      %s1178 = scalar_lea.vmem %s309, 64
      %v1179 = vld [vmem:[%s1178] sm:$0xff]
      %v1180 = vld [vmem:[%s1178 + $0x8] sm:$0xff]
      %v1181 = vld [vmem:[%s1178 + $0x10] sm:$0xff]
      %v1182 = vld [vmem:[%s1178 + $0x18] sm:$0xff]
      %1183 = vmatprep.subr.mxu0 %v345
      %1184 = vmatpush1.msra.mxu0 %v344
      %1185 = vmatprep.subr.mxu0 %v349
      %1186 = vmatpush1.msra.mxu0 %v348
      %1187 = vmatprep.subr.mxu0 %v353
      %1188 = vmatpush1.msra.mxu0 %v352
      %1189 = vmatprep.subr.mxu0 %v357
      %1190 = vmatpush1.msra.mxu0 %v356
      %1191 = vmatprep.subr.mxu0 %v361
      %1192 = vmatpush1.msra.mxu0 %v360
      %1193 = vmatprep.subr.mxu0 %v365
      %1194 = vmatpush1.msra.mxu0 %v364
      %1195 = vmatprep.subr.mxu0 %v369
      %1196 = vmatpush1.msra.mxu0 %v368
      %1197 = vmatprep.subr.mxu0 %v373
      %1198 = vmatpush1.msra.mxu0 %v372
      %1199 = vmatprep.subr.mxu0 %v377
      %1200 = vmatpush1.msra.mxu0 %v376
      %1201 = vmatprep.subr.mxu0 %v381
      %1202 = vmatpush1.msra.mxu0 %v380
      %1203 = vmatprep.subr.mxu0 %v385
      %1204 = vmatpush1.msra.mxu0 %v384
      %1205 = vmatprep.subr.mxu0 %v389
      %1206 = vmatpush1.msra.mxu0 %v388
      %1207 = vmatprep.subr.mxu0 %v393
      %1208 = vmatpush1.msra.mxu0 %v392
      %1209 = vmatprep.subr.mxu0 %v397
      %1210 = vmatpush1.msra.mxu0 %v396
      %1211 = vmatprep.subr.mxu0 %v401
      %1212 = vmatpush1.msra.mxu0 %v400
      %1213 = vmatprep.subr.mxu0 %v405
      %1214 = vmatpush1.msra.mxu0 %v404
      %1215 = vmatprep.subr.mxu0 0.0
      %1216 = vmatpush1.msra.mxu0 0.0
      %1217 = vmatprep.subr.mxu0 0.0
      %1218 = vmatpush1.msra.mxu0 0.0
      %1219 = vmatprep.subr.mxu0 0.0
      %1220 = vmatpush1.msra.mxu0 0.0
      %1221 = vmatprep.subr.mxu0 0.0
      %1222 = vmatpush1.msra.mxu0 0.0
      %1223 = vmatprep.subr.mxu0 0.0
      %1224 = vmatpush1.msra.mxu0 0.0
      %1225 = vmatprep.subr.mxu0 0.0
      %1226 = vmatpush1.msra.mxu0 0.0
      %1227 = vmatprep.subr.mxu0 0.0
      %1228 = vmatpush1.msra.mxu0 0.0
      %1229 = vmatprep.subr.mxu0 0.0
      %1230 = vmatpush1.msra.mxu0 0.0
      %1231 = vmatprep.subr.mxu0 0.0
      %1232 = vmatpush1.msra.mxu0 0.0
      %1233 = vmatprep.subr.mxu0 0.0
      %1234 = vmatpush1.msra.mxu0 0.0
      %1235 = vmatprep.subr.mxu0 0.0
      %1236 = vmatpush1.msra.mxu0 0.0
      %1237 = vmatprep.subr.mxu0 0.0
      %1238 = vmatpush1.msra.mxu0 0.0
      %1239 = vmatprep.subr.mxu0 0.0
      %1240 = vmatpush1.msra.mxu0 0.0
      %1241 = vmatprep.subr.mxu0 0.0
      %1242 = vmatpush1.msra.mxu0 0.0
      %1243 = vmatprep.subr.mxu0 0.0
      %1244 = vmatpush1.msra.mxu0 0.0
      %1245 = vmatprep.subr.mxu0 0.0
      %1246 = vmatpush1.msra.mxu0 0.0
      %1247 = vmatprep.mubr.f32.mxu0 0.0
      %1248 = vmatmul.mubr.f32.gmra.mrb[0].mxu0 %v1163
      %v1249 = vpop.f32.mrb[0].mxu0
      %v1250 = vadd.f32 %v1179, %v1249
      %v1251 = vpop.f32.mrb[0].mxu0
      %v1252 = vadd.f32 %v1180, %v1251
      %1253 = vdwg.mxu0
      %1254 = vmatprep.subr.mxu0 %v347
      %1255 = vmatpush1.msra.mxu0 %v346
      %1256 = vmatprep.subr.mxu0 %v351
      %1257 = vmatpush1.msra.mxu0 %v350
      %1258 = vmatprep.subr.mxu0 %v355
      %1259 = vmatpush1.msra.mxu0 %v354
      %1260 = vmatprep.subr.mxu0 %v359
      %1261 = vmatpush1.msra.mxu0 %v358
      %1262 = vmatprep.subr.mxu0 %v363
      %1263 = vmatpush1.msra.mxu0 %v362
      %1264 = vmatprep.subr.mxu0 %v367
      %1265 = vmatpush1.msra.mxu0 %v366
      %1266 = vmatprep.subr.mxu0 %v371
      %1267 = vmatpush1.msra.mxu0 %v370
      %1268 = vmatprep.subr.mxu0 %v375
      %1269 = vmatpush1.msra.mxu0 %v374
      %1270 = vmatprep.subr.mxu0 %v379
      %1271 = vmatpush1.msra.mxu0 %v378
      %1272 = vmatprep.subr.mxu0 %v383
      %1273 = vmatpush1.msra.mxu0 %v382
      %1274 = vmatprep.subr.mxu0 %v387
      %1275 = vmatpush1.msra.mxu0 %v386
      %1276 = vmatprep.subr.mxu0 %v391
      %1277 = vmatpush1.msra.mxu0 %v390
      %1278 = vmatprep.subr.mxu0 %v395
      %1279 = vmatpush1.msra.mxu0 %v394
      %1280 = vmatprep.subr.mxu0 %v399
      %1281 = vmatpush1.msra.mxu0 %v398
      %1282 = vmatprep.subr.mxu0 %v403
      %1283 = vmatpush1.msra.mxu0 %v402
      %1284 = vmatprep.subr.mxu0 %v407
      %1285 = vmatpush1.msra.mxu0 %v406
      %1286 = vmatprep.subr.mxu0 0.0
      %1287 = vmatpush1.msra.mxu0 0.0
      %1288 = vmatprep.subr.mxu0 0.0
      %1289 = vmatpush1.msra.mxu0 0.0
      %1290 = vmatprep.subr.mxu0 0.0
      %1291 = vmatpush1.msra.mxu0 0.0
      %1292 = vmatprep.subr.mxu0 0.0
      %1293 = vmatpush1.msra.mxu0 0.0
      %1294 = vmatprep.subr.mxu0 0.0
      %1295 = vmatpush1.msra.mxu0 0.0
      %1296 = vmatprep.subr.mxu0 0.0
      %1297 = vmatpush1.msra.mxu0 0.0
      %1298 = vmatprep.subr.mxu0 0.0
      %1299 = vmatpush1.msra.mxu0 0.0
      %1300 = vmatprep.subr.mxu0 0.0
      %1301 = vmatpush1.msra.mxu0 0.0
      %1302 = vmatprep.subr.mxu0 0.0
      %1303 = vmatpush1.msra.mxu0 0.0
      %1304 = vmatprep.subr.mxu0 0.0
      %1305 = vmatpush1.msra.mxu0 0.0
      %1306 = vmatprep.subr.mxu0 0.0
      %1307 = vmatpush1.msra.mxu0 0.0
      %1308 = vmatprep.subr.mxu0 0.0
      %1309 = vmatpush1.msra.mxu0 0.0
      %1310 = vmatprep.subr.mxu0 0.0
      %1311 = vmatpush1.msra.mxu0 0.0
      %1312 = vmatprep.subr.mxu0 0.0
      %1313 = vmatpush1.msra.mxu0 0.0
      %1314 = vmatprep.subr.mxu0 0.0
      %1315 = vmatpush1.msra.mxu0 0.0
      %1316 = vmatprep.subr.mxu0 0.0
      %1317 = vmatpush1.msra.mxu0 0.0
      %1318 = vmatprep.mubr.f32.mxu0 0.0
      %1319 = vmatmul.mubr.f32.gmra.mrb[0].mxu0 %v1163
      %v1320 = vpop.f32.mrb[0].mxu0
      %v1321 = vadd.f32 %v1181, %v1320
      %v1322 = vpop.f32.mrb[0].mxu0
      %v1323 = vadd.f32 %v1182, %v1322
      %1324 = vdwg.mxu0
      %s1325 = scalar_lea.vmem %s318, 64
      %v1326 = vld [vmem:[%s1325] sm:$0xff]
      %v1327 = vld [vmem:[%s1325 + $0x8] sm:$0xff]
      %v1328 = vld [vmem:[%s1325 + $0x10] sm:$0xff]
      %v1329 = vld [vmem:[%s1325 + $0x18] sm:$0xff]
      %1330 = vmatprep.subr.mxu0 %v409
      %1331 = vmatpush1.msra.mxu0 %v408
      %1332 = vmatprep.subr.mxu0 %v413
      %1333 = vmatpush1.msra.mxu0 %v412
      %1334 = vmatprep.subr.mxu0 %v417
      %1335 = vmatpush1.msra.mxu0 %v416
      %1336 = vmatprep.subr.mxu0 %v421
      %1337 = vmatpush1.msra.mxu0 %v420
      %1338 = vmatprep.subr.mxu0 %v425
      %1339 = vmatpush1.msra.mxu0 %v424
      %1340 = vmatprep.subr.mxu0 %v429
      %1341 = vmatpush1.msra.mxu0 %v428
      %1342 = vmatprep.subr.mxu0 %v433
      %1343 = vmatpush1.msra.mxu0 %v432
      %1344 = vmatprep.subr.mxu0 %v437
      %1345 = vmatpush1.msra.mxu0 %v436
      %1346 = vmatprep.subr.mxu0 %v441
      %1347 = vmatpush1.msra.mxu0 %v440
      %1348 = vmatprep.subr.mxu0 %v445
      %1349 = vmatpush1.msra.mxu0 %v444
      %1350 = vmatprep.subr.mxu0 %v449
      %1351 = vmatpush1.msra.mxu0 %v448
      %1352 = vmatprep.subr.mxu0 %v453
      %1353 = vmatpush1.msra.mxu0 %v452
      %1354 = vmatprep.subr.mxu0 %v457
      %1355 = vmatpush1.msra.mxu0 %v456
      %1356 = vmatprep.subr.mxu0 %v461
      %1357 = vmatpush1.msra.mxu0 %v460
      %1358 = vmatprep.subr.mxu0 %v465
      %1359 = vmatpush1.msra.mxu0 %v464
      %1360 = vmatprep.subr.mxu0 %v469
      %1361 = vmatpush1.msra.mxu0 %v468
      %1362 = vmatprep.subr.mxu0 0.0
      %1363 = vmatpush1.msra.mxu0 0.0
      %1364 = vmatprep.subr.mxu0 0.0
      %1365 = vmatpush1.msra.mxu0 0.0
      %1366 = vmatprep.subr.mxu0 0.0
      %1367 = vmatpush1.msra.mxu0 0.0
      %1368 = vmatprep.subr.mxu0 0.0
      %1369 = vmatpush1.msra.mxu0 0.0
      %1370 = vmatprep.subr.mxu0 0.0
      %1371 = vmatpush1.msra.mxu0 0.0
      %1372 = vmatprep.subr.mxu0 0.0
      %1373 = vmatpush1.msra.mxu0 0.0
      %1374 = vmatprep.subr.mxu0 0.0
      %1375 = vmatpush1.msra.mxu0 0.0
      %1376 = vmatprep.subr.mxu0 0.0
      %1377 = vmatpush1.msra.mxu0 0.0
      %1378 = vmatprep.subr.mxu0 0.0
      %1379 = vmatpush1.msra.mxu0 0.0
      %1380 = vmatprep.subr.mxu0 0.0
      %1381 = vmatpush1.msra.mxu0 0.0
      %1382 = vmatprep.subr.mxu0 0.0
      %1383 = vmatpush1.msra.mxu0 0.0
      %1384 = vmatprep.subr.mxu0 0.0
      %1385 = vmatpush1.msra.mxu0 0.0
      %1386 = vmatprep.subr.mxu0 0.0
      %1387 = vmatpush1.msra.mxu0 0.0
      %1388 = vmatprep.subr.mxu0 0.0
      %1389 = vmatpush1.msra.mxu0 0.0
      %1390 = vmatprep.subr.mxu0 0.0
      %1391 = vmatpush1.msra.mxu0 0.0
      %1392 = vmatprep.subr.mxu0 0.0
      %1393 = vmatpush1.msra.mxu0 0.0
      %1394 = vmatprep.mubr.f32.mxu0 0.0
      %1395 = vmatmul.mubr.f32.gmra.mrb[0].mxu0 %v1168
      %v1396 = vpop.f32.mrb[0].mxu0
      %v1397 = vadd.f32 %v1326, %v1396
      %v1398 = vpop.f32.mrb[0].mxu0
      %v1399 = vadd.f32 %v1327, %v1398
      %1400 = vdwg.mxu0
      %1401 = vmatprep.subr.mxu0 %v411
      %1402 = vmatpush1.msra.mxu0 %v410
      %1403 = vmatprep.subr.mxu0 %v415
      %1404 = vmatpush1.msra.mxu0 %v414
      %1405 = vmatprep.subr.mxu0 %v419
      %1406 = vmatpush1.msra.mxu0 %v418
      %1407 = vmatprep.subr.mxu0 %v423
      %1408 = vmatpush1.msra.mxu0 %v422
      %1409 = vmatprep.subr.mxu0 %v427
      %1410 = vmatpush1.msra.mxu0 %v426
      %1411 = vmatprep.subr.mxu0 %v431
      %1412 = vmatpush1.msra.mxu0 %v430
      %1413 = vmatprep.subr.mxu0 %v435
      %1414 = vmatpush1.msra.mxu0 %v434
      %1415 = vmatprep.subr.mxu0 %v439
      %1416 = vmatpush1.msra.mxu0 %v438
      %1417 = vmatprep.subr.mxu0 %v443
      %1418 = vmatpush1.msra.mxu0 %v442
      %1419 = vmatprep.subr.mxu0 %v447
      %1420 = vmatpush1.msra.mxu0 %v446
      %1421 = vmatprep.subr.mxu0 %v451
      %1422 = vmatpush1.msra.mxu0 %v450
      %1423 = vmatprep.subr.mxu0 %v455
      %1424 = vmatpush1.msra.mxu0 %v454
      %1425 = vmatprep.subr.mxu0 %v459
      %1426 = vmatpush1.msra.mxu0 %v458
      %1427 = vmatprep.subr.mxu0 %v463
      %1428 = vmatpush1.msra.mxu0 %v462
      %1429 = vmatprep.subr.mxu0 %v467
      %1430 = vmatpush1.msra.mxu0 %v466
      %1431 = vmatprep.subr.mxu0 %v471
      %1432 = vmatpush1.msra.mxu0 %v470
      %1433 = vmatprep.subr.mxu0 0.0
      %1434 = vmatpush1.msra.mxu0 0.0
      %1435 = vmatprep.subr.mxu0 0.0
      %1436 = vmatpush1.msra.mxu0 0.0
      %1437 = vmatprep.subr.mxu0 0.0
      %1438 = vmatpush1.msra.mxu0 0.0
      %1439 = vmatprep.subr.mxu0 0.0
      %1440 = vmatpush1.msra.mxu0 0.0
      %1441 = vmatprep.subr.mxu0 0.0
      %1442 = vmatpush1.msra.mxu0 0.0
      %1443 = vmatprep.subr.mxu0 0.0
      %1444 = vmatpush1.msra.mxu0 0.0
      %1445 = vmatprep.subr.mxu0 0.0
      %1446 = vmatpush1.msra.mxu0 0.0
      %1447 = vmatprep.subr.mxu0 0.0
      %1448 = vmatpush1.msra.mxu0 0.0
      %1449 = vmatprep.subr.mxu0 0.0
      %1450 = vmatpush1.msra.mxu0 0.0
      %1451 = vmatprep.subr.mxu0 0.0
      %1452 = vmatpush1.msra.mxu0 0.0
      %1453 = vmatprep.subr.mxu0 0.0
      %1454 = vmatpush1.msra.mxu0 0.0
      %1455 = vmatprep.subr.mxu0 0.0
      %1456 = vmatpush1.msra.mxu0 0.0
      %1457 = vmatprep.subr.mxu0 0.0
      %1458 = vmatpush1.msra.mxu0 0.0
      %1459 = vmatprep.subr.mxu0 0.0
      %1460 = vmatpush1.msra.mxu0 0.0
      %1461 = vmatprep.subr.mxu0 0.0
      %1462 = vmatpush1.msra.mxu0 0.0
      %1463 = vmatprep.subr.mxu0 0.0
      %1464 = vmatpush1.msra.mxu0 0.0
      %1465 = vmatprep.mubr.f32.mxu0 0.0
      %1466 = vmatmul.mubr.f32.gmra.mrb[0].mxu0 %v1168
      %v1467 = vpop.f32.mrb[0].mxu0
      %v1468 = vadd.f32 %v1328, %v1467
      %v1469 = vpop.f32.mrb[0].mxu0
      %v1470 = vadd.f32 %v1329, %v1469
      %1471 = vdwg.mxu0
      %v1472 = vmul.f32 %v1250, 0.5
      %v1473 = vtanh.pop %v1472
      %v1474 = vmul.f32 %v1473, 0.5
      %v1475 = vadd.f32 %v1474, 0.5
      %v1476 = vmul.f32 %v1252, 0.5
      %v1477 = vtanh.pop %v1476
      %v1478 = vmul.f32 %v1477, 0.5
      %v1479 = vadd.f32 %v1478, 0.5
      %v1480 = vtanh.pop %v1321
      %v1481 = vmul.f32 %v1323, 0.5
      %v1482 = vtanh.pop %v1481
      %v1483 = vmul.f32 %v1482, 0.5
      %v1484 = vadd.f32 %v1483, 0.5
      %v1485 = vmul.f32 %v1479, %v1164
      %v1486 = vmul.f32 %v1475, %v1480
      %v1487 = vadd.f32 %v1485, %v1486
      %v1488 = vtanh.pop %v1487
      %v1489 = vmul.f32 %v1484, %v1488
      %v1490 = vmul.f32 %v1397, 0.5
      %v1491 = vtanh.pop %v1490
      %v1492 = vmul.f32 %v1491, 0.5
      %v1493 = vadd.f32 %v1492, 0.5
      %v1494 = vmul.f32 %v1399, 0.5
      %v1495 = vtanh.pop %v1494
      %v1496 = vmul.f32 %v1495, 0.5
      %v1497 = vadd.f32 %v1496, 0.5
      %v1498 = vtanh.pop %v1468
      %v1499 = vmul.f32 %v1470, 0.5
      %v1500 = vtanh.pop %v1499
      %v1501 = vmul.f32 %v1500, 0.5
      %v1502 = vadd.f32 %v1501, 0.5
      %v1503 = vmul.f32 %v1497, %v1169
      %v1504 = vmul.f32 %v1493, %v1498
      %v1505 = vadd.f32 %v1503, %v1504
      %v1506 = vtanh.pop %v1505
      %v1507 = vmul.f32 %v1502, %v1506
      %s1508 = scalar_select %p1175, 1, 0
      %v1509 = vstv %s1508
      %vm1510 = vcmp.eq.s32.totalorder %v1509, 1
      %v1511 = vsel %vm1510, %v1489, %v1163
      %v1512 = vsel %vm1510, %v1487, %v1164
      %s1513 = scalar_select %p1177, 1, 0
      %v1514 = vstv %s1513
      %vm1515 = vcmp.eq.s32.totalorder %v1514, 1
      %v1516 = vsel %vm1515, %v1507, %v1168
      %v1517 = vsel %vm1515, %v1505, %v1169
      %s1518 = scalar_lea.vmem %s326, 16
      %1519 = vst [vmem:[%s1518] sm:$0xff] %v1511
      %s1520 = scalar_lea.vmem %s333, 16
      %1521 = vst [vmem:[%s1520] sm:$0xff] %v1516
      %s1522 = sadd.s32 %s472, 3
      %p1523 = scmp.lt.s32.totalorder %s1522, 12
      %s1524 = sadd.s32 %s474, 1
      %p1525 = scmp.lt.s32.totalorder %s1524, 12
      %s1526 = scalar_lea.vmem %s309, 96
      %v1527 = vld [vmem:[%s1526] sm:$0xff]
      %v1528 = vld [vmem:[%s1526 + $0x8] sm:$0xff]
      %v1529 = vld [vmem:[%s1526 + $0x10] sm:$0xff]
      %v1530 = vld [vmem:[%s1526 + $0x18] sm:$0xff]
      %1531 = vmatprep.subr.mxu0 %v345
      %1532 = vmatpush1.msra.mxu0 %v344
      %1533 = vmatprep.subr.mxu0 %v349
      %1534 = vmatpush1.msra.mxu0 %v348
      %1535 = vmatprep.subr.mxu0 %v353
      %1536 = vmatpush1.msra.mxu0 %v352
      %1537 = vmatprep.subr.mxu0 %v357
      %1538 = vmatpush1.msra.mxu0 %v356
      %1539 = vmatprep.subr.mxu0 %v361
      %1540 = vmatpush1.msra.mxu0 %v360
      %1541 = vmatprep.subr.mxu0 %v365
      %1542 = vmatpush1.msra.mxu0 %v364
      %1543 = vmatprep.subr.mxu0 %v369
      %1544 = vmatpush1.msra.mxu0 %v368
      %1545 = vmatprep.subr.mxu0 %v373
      %1546 = vmatpush1.msra.mxu0 %v372
      %1547 = vmatprep.subr.mxu0 %v377
      %1548 = vmatpush1.msra.mxu0 %v376
      %1549 = vmatprep.subr.mxu0 %v381
      %1550 = vmatpush1.msra.mxu0 %v380
      %1551 = vmatprep.subr.mxu0 %v385
      %1552 = vmatpush1.msra.mxu0 %v384
      %1553 = vmatprep.subr.mxu0 %v389
      %1554 = vmatpush1.msra.mxu0 %v388
      %1555 = vmatprep.subr.mxu0 %v393
      %1556 = vmatpush1.msra.mxu0 %v392
      %1557 = vmatprep.subr.mxu0 %v397
      %1558 = vmatpush1.msra.mxu0 %v396
      %1559 = vmatprep.subr.mxu0 %v401
      %1560 = vmatpush1.msra.mxu0 %v400
      %1561 = vmatprep.subr.mxu0 %v405
      %1562 = vmatpush1.msra.mxu0 %v404
      %1563 = vmatprep.subr.mxu0 0.0
      %1564 = vmatpush1.msra.mxu0 0.0
      %1565 = vmatprep.subr.mxu0 0.0
      %1566 = vmatpush1.msra.mxu0 0.0
      %1567 = vmatprep.subr.mxu0 0.0
      %1568 = vmatpush1.msra.mxu0 0.0
      %1569 = vmatprep.subr.mxu0 0.0
      %1570 = vmatpush1.msra.mxu0 0.0
      %1571 = vmatprep.subr.mxu0 0.0
      %1572 = vmatpush1.msra.mxu0 0.0
      %1573 = vmatprep.subr.mxu0 0.0
      %1574 = vmatpush1.msra.mxu0 0.0
      %1575 = vmatprep.subr.mxu0 0.0
      %1576 = vmatpush1.msra.mxu0 0.0
      %1577 = vmatprep.subr.mxu0 0.0
      %1578 = vmatpush1.msra.mxu0 0.0
      %1579 = vmatprep.subr.mxu0 0.0
      %1580 = vmatpush1.msra.mxu0 0.0
      %1581 = vmatprep.subr.mxu0 0.0
      %1582 = vmatpush1.msra.mxu0 0.0
      %1583 = vmatprep.subr.mxu0 0.0
      %1584 = vmatpush1.msra.mxu0 0.0
      %1585 = vmatprep.subr.mxu0 0.0
      %1586 = vmatpush1.msra.mxu0 0.0
      %1587 = vmatprep.subr.mxu0 0.0
      %1588 = vmatpush1.msra.mxu0 0.0
      %1589 = vmatprep.subr.mxu0 0.0
      %1590 = vmatpush1.msra.mxu0 0.0
      %1591 = vmatprep.subr.mxu0 0.0
      %1592 = vmatpush1.msra.mxu0 0.0
      %1593 = vmatprep.subr.mxu0 0.0
      %1594 = vmatpush1.msra.mxu0 0.0
      %1595 = vmatprep.mubr.f32.mxu0 0.0
      %1596 = vmatmul.mubr.f32.gmra.mrb[0].mxu0 %v1511
      %v1597 = vpop.f32.mrb[0].mxu0
      %v1598 = vadd.f32 %v1527, %v1597
      %v1599 = vpop.f32.mrb[0].mxu0
      %v1600 = vadd.f32 %v1528, %v1599
      %1601 = vdwg.mxu0
      %1602 = vmatprep.subr.mxu0 %v347
      %1603 = vmatpush1.msra.mxu0 %v346
      %1604 = vmatprep.subr.mxu0 %v351
      %1605 = vmatpush1.msra.mxu0 %v350
      %1606 = vmatprep.subr.mxu0 %v355
      %1607 = vmatpush1.msra.mxu0 %v354
      %1608 = vmatprep.subr.mxu0 %v359
      %1609 = vmatpush1.msra.mxu0 %v358
      %1610 = vmatprep.subr.mxu0 %v363
      %1611 = vmatpush1.msra.mxu0 %v362
      %1612 = vmatprep.subr.mxu0 %v367
      %1613 = vmatpush1.msra.mxu0 %v366
      %1614 = vmatprep.subr.mxu0 %v371
      %1615 = vmatpush1.msra.mxu0 %v370
      %1616 = vmatprep.subr.mxu0 %v375
      %1617 = vmatpush1.msra.mxu0 %v374
      %1618 = vmatprep.subr.mxu0 %v379
      %1619 = vmatpush1.msra.mxu0 %v378
      %1620 = vmatprep.subr.mxu0 %v383
      %1621 = vmatpush1.msra.mxu0 %v382
      %1622 = vmatprep.subr.mxu0 %v387
      %1623 = vmatpush1.msra.mxu0 %v386
      %1624 = vmatprep.subr.mxu0 %v391
      %1625 = vmatpush1.msra.mxu0 %v390
      %1626 = vmatprep.subr.mxu0 %v395
      %1627 = vmatpush1.msra.mxu0 %v394
      %1628 = vmatprep.subr.mxu0 %v399
      %1629 = vmatpush1.msra.mxu0 %v398
      %1630 = vmatprep.subr.mxu0 %v403
      %1631 = vmatpush1.msra.mxu0 %v402
      %1632 = vmatprep.subr.mxu0 %v407
      %1633 = vmatpush1.msra.mxu0 %v406
      %1634 = vmatprep.subr.mxu0 0.0
      %1635 = vmatpush1.msra.mxu0 0.0
      %1636 = vmatprep.subr.mxu0 0.0
      %1637 = vmatpush1.msra.mxu0 0.0
      %1638 = vmatprep.subr.mxu0 0.0
      %1639 = vmatpush1.msra.mxu0 0.0
      %1640 = vmatprep.subr.mxu0 0.0
      %1641 = vmatpush1.msra.mxu0 0.0
      %1642 = vmatprep.subr.mxu0 0.0
      %1643 = vmatpush1.msra.mxu0 0.0
      %1644 = vmatprep.subr.mxu0 0.0
      %1645 = vmatpush1.msra.mxu0 0.0
      %1646 = vmatprep.subr.mxu0 0.0
      %1647 = vmatpush1.msra.mxu0 0.0
      %1648 = vmatprep.subr.mxu0 0.0
      %1649 = vmatpush1.msra.mxu0 0.0
      %1650 = vmatprep.subr.mxu0 0.0
      %1651 = vmatpush1.msra.mxu0 0.0
      %1652 = vmatprep.subr.mxu0 0.0
      %1653 = vmatpush1.msra.mxu0 0.0
      %1654 = vmatprep.subr.mxu0 0.0
      %1655 = vmatpush1.msra.mxu0 0.0
      %1656 = vmatprep.subr.mxu0 0.0
      %1657 = vmatpush1.msra.mxu0 0.0
      %1658 = vmatprep.subr.mxu0 0.0
      %1659 = vmatpush1.msra.mxu0 0.0
      %1660 = vmatprep.subr.mxu0 0.0
      %1661 = vmatpush1.msra.mxu0 0.0
      %1662 = vmatprep.subr.mxu0 0.0
      %1663 = vmatpush1.msra.mxu0 0.0
      %1664 = vmatprep.subr.mxu0 0.0
      %1665 = vmatpush1.msra.mxu0 0.0
      %1666 = vmatprep.mubr.f32.mxu0 0.0
      %1667 = vmatmul.mubr.f32.gmra.mrb[0].mxu0 %v1511
      %v1668 = vpop.f32.mrb[0].mxu0
      %v1669 = vadd.f32 %v1529, %v1668
      %v1670 = vpop.f32.mrb[0].mxu0
      %v1671 = vadd.f32 %v1530, %v1670
      %1672 = vdwg.mxu0
      %s1673 = scalar_lea.vmem %s318, 32
      %v1674 = vld [vmem:[%s1673] sm:$0xff]
      %v1675 = vld [vmem:[%s1673 + $0x8] sm:$0xff]
      %v1676 = vld [vmem:[%s1673 + $0x10] sm:$0xff]
      %v1677 = vld [vmem:[%s1673 + $0x18] sm:$0xff]
      %1678 = vmatprep.subr.mxu0 %v409
      %1679 = vmatpush1.msra.mxu0 %v408
      %1680 = vmatprep.subr.mxu0 %v413
      %1681 = vmatpush1.msra.mxu0 %v412
      %1682 = vmatprep.subr.mxu0 %v417
      %1683 = vmatpush1.msra.mxu0 %v416
      %1684 = vmatprep.subr.mxu0 %v421
      %1685 = vmatpush1.msra.mxu0 %v420
      %1686 = vmatprep.subr.mxu0 %v425
      %1687 = vmatpush1.msra.mxu0 %v424
      %1688 = vmatprep.subr.mxu0 %v429
      %1689 = vmatpush1.msra.mxu0 %v428
      %1690 = vmatprep.subr.mxu0 %v433
      %1691 = vmatpush1.msra.mxu0 %v432
      %1692 = vmatprep.subr.mxu0 %v437
      %1693 = vmatpush1.msra.mxu0 %v436
      %1694 = vmatprep.subr.mxu0 %v441
      %1695 = vmatpush1.msra.mxu0 %v440
      %1696 = vmatprep.subr.mxu0 %v445
      %1697 = vmatpush1.msra.mxu0 %v444
      %1698 = vmatprep.subr.mxu0 %v449
      %1699 = vmatpush1.msra.mxu0 %v448
      %1700 = vmatprep.subr.mxu0 %v453
      %1701 = vmatpush1.msra.mxu0 %v452
      %1702 = vmatprep.subr.mxu0 %v457
      %1703 = vmatpush1.msra.mxu0 %v456
      %1704 = vmatprep.subr.mxu0 %v461
      %1705 = vmatpush1.msra.mxu0 %v460
      %1706 = vmatprep.subr.mxu0 %v465
      %1707 = vmatpush1.msra.mxu0 %v464
      %1708 = vmatprep.subr.mxu0 %v469
      %1709 = vmatpush1.msra.mxu0 %v468
      %1710 = vmatprep.subr.mxu0 0.0
      %1711 = vmatpush1.msra.mxu0 0.0
      %1712 = vmatprep.subr.mxu0 0.0
      %1713 = vmatpush1.msra.mxu0 0.0
      %1714 = vmatprep.subr.mxu0 0.0
      %1715 = vmatpush1.msra.mxu0 0.0
      %1716 = vmatprep.subr.mxu0 0.0
      %1717 = vmatpush1.msra.mxu0 0.0
      %1718 = vmatprep.subr.mxu0 0.0
      %1719 = vmatpush1.msra.mxu0 0.0
      %1720 = vmatprep.subr.mxu0 0.0
      %1721 = vmatpush1.msra.mxu0 0.0
      %1722 = vmatprep.subr.mxu0 0.0
      %1723 = vmatpush1.msra.mxu0 0.0
      %1724 = vmatprep.subr.mxu0 0.0
      %1725 = vmatpush1.msra.mxu0 0.0
      %1726 = vmatprep.subr.mxu0 0.0
      %1727 = vmatpush1.msra.mxu0 0.0
      %1728 = vmatprep.subr.mxu0 0.0
      %1729 = vmatpush1.msra.mxu0 0.0
      %1730 = vmatprep.subr.mxu0 0.0
      %1731 = vmatpush1.msra.mxu0 0.0
      %1732 = vmatprep.subr.mxu0 0.0
      %1733 = vmatpush1.msra.mxu0 0.0
      %1734 = vmatprep.subr.mxu0 0.0
      %1735 = vmatpush1.msra.mxu0 0.0
      %1736 = vmatprep.subr.mxu0 0.0
      %1737 = vmatpush1.msra.mxu0 0.0
      %1738 = vmatprep.subr.mxu0 0.0
      %1739 = vmatpush1.msra.mxu0 0.0
      %1740 = vmatprep.subr.mxu0 0.0
      %1741 = vmatpush1.msra.mxu0 0.0
      %1742 = vmatprep.mubr.f32.mxu0 0.0
      %1743 = vmatmul.mubr.f32.gmra.mrb[0].mxu0 %v1516
      %v1744 = vpop.f32.mrb[0].mxu0
      %v1745 = vadd.f32 %v1674, %v1744
      %v1746 = vpop.f32.mrb[0].mxu0
      %v1747 = vadd.f32 %v1675, %v1746
      %1748 = vdwg.mxu0
      %1749 = vmatprep.subr.mxu0 %v411
      %1750 = vmatpush1.msra.mxu0 %v410
      %1751 = vmatprep.subr.mxu0 %v415
      %1752 = vmatpush1.msra.mxu0 %v414
      %1753 = vmatprep.subr.mxu0 %v419
      %1754 = vmatpush1.msra.mxu0 %v418
      %1755 = vmatprep.subr.mxu0 %v423
      %1756 = vmatpush1.msra.mxu0 %v422
      %1757 = vmatprep.subr.mxu0 %v427
      %1758 = vmatpush1.msra.mxu0 %v426
      %1759 = vmatprep.subr.mxu0 %v431
      %1760 = vmatpush1.msra.mxu0 %v430
      %1761 = vmatprep.subr.mxu0 %v435
      %1762 = vmatpush1.msra.mxu0 %v434
      %1763 = vmatprep.subr.mxu0 %v439
      %1764 = vmatpush1.msra.mxu0 %v438
      %1765 = vmatprep.subr.mxu0 %v443
      %1766 = vmatpush1.msra.mxu0 %v442
      %1767 = vmatprep.subr.mxu0 %v447
      %1768 = vmatpush1.msra.mxu0 %v446
      %1769 = vmatprep.subr.mxu0 %v451
      %1770 = vmatpush1.msra.mxu0 %v450
      %1771 = vmatprep.subr.mxu0 %v455
      %1772 = vmatpush1.msra.mxu0 %v454
      %1773 = vmatprep.subr.mxu0 %v459
      %1774 = vmatpush1.msra.mxu0 %v458
      %1775 = vmatprep.subr.mxu0 %v463
      %1776 = vmatpush1.msra.mxu0 %v462
      %1777 = vmatprep.subr.mxu0 %v467
      %1778 = vmatpush1.msra.mxu0 %v466
      %1779 = vmatprep.subr.mxu0 %v471
      %1780 = vmatpush1.msra.mxu0 %v470
      %1781 = vmatprep.subr.mxu0 0.0
      %1782 = vmatpush1.msra.mxu0 0.0
      %1783 = vmatprep.subr.mxu0 0.0
      %1784 = vmatpush1.msra.mxu0 0.0
      %1785 = vmatprep.subr.mxu0 0.0
      %1786 = vmatpush1.msra.mxu0 0.0
      %1787 = vmatprep.subr.mxu0 0.0
      %1788 = vmatpush1.msra.mxu0 0.0
      %1789 = vmatprep.subr.mxu0 0.0
      %1790 = vmatpush1.msra.mxu0 0.0
      %1791 = vmatprep.subr.mxu0 0.0
      %1792 = vmatpush1.msra.mxu0 0.0
      %1793 = vmatprep.subr.mxu0 0.0
      %1794 = vmatpush1.msra.mxu0 0.0
      %1795 = vmatprep.subr.mxu0 0.0
      %1796 = vmatpush1.msra.mxu0 0.0
      %1797 = vmatprep.subr.mxu0 0.0
      %1798 = vmatpush1.msra.mxu0 0.0
      %1799 = vmatprep.subr.mxu0 0.0
      %1800 = vmatpush1.msra.mxu0 0.0
      %1801 = vmatprep.subr.mxu0 0.0
      %1802 = vmatpush1.msra.mxu0 0.0
      %1803 = vmatprep.subr.mxu0 0.0
      %1804 = vmatpush1.msra.mxu0 0.0
      %1805 = vmatprep.subr.mxu0 0.0
      %1806 = vmatpush1.msra.mxu0 0.0
      %1807 = vmatprep.subr.mxu0 0.0
      %1808 = vmatpush1.msra.mxu0 0.0
      %1809 = vmatprep.subr.mxu0 0.0
      %1810 = vmatpush1.msra.mxu0 0.0
      %1811 = vmatprep.subr.mxu0 0.0
      %1812 = vmatpush1.msra.mxu0 0.0
      %1813 = vmatprep.mubr.f32.mxu0 0.0
      %1814 = vmatmul.mubr.f32.gmra.mrb[0].mxu0 %v1516
      %v1815 = vpop.f32.mrb[0].mxu0
      %v1816 = vadd.f32 %v1676, %v1815
      %v1817 = vpop.f32.mrb[0].mxu0
      %v1818 = vadd.f32 %v1677, %v1817
      %1819 = vdwg.mxu0
      %v1820 = vmul.f32 %v1598, 0.5
      %v1821 = vtanh.pop %v1820
      %v1822 = vmul.f32 %v1821, 0.5
      %v1823 = vadd.f32 %v1822, 0.5
      %v1824 = vmul.f32 %v1600, 0.5
      %v1825 = vtanh.pop %v1824
      %v1826 = vmul.f32 %v1825, 0.5
      %v1827 = vadd.f32 %v1826, 0.5
      %v1828 = vtanh.pop %v1669
      %v1829 = vmul.f32 %v1671, 0.5
      %v1830 = vtanh.pop %v1829
      %v1831 = vmul.f32 %v1830, 0.5
      %v1832 = vadd.f32 %v1831, 0.5
      %v1833 = vmul.f32 %v1827, %v1512
      %v1834 = vmul.f32 %v1823, %v1828
      %v1835 = vadd.f32 %v1833, %v1834
      %v1836 = vtanh.pop %v1835
      %v1837 = vmul.f32 %v1832, %v1836
      %v1838 = vmul.f32 %v1745, 0.5
      %v1839 = vtanh.pop %v1838
      %v1840 = vmul.f32 %v1839, 0.5
      %v1841 = vadd.f32 %v1840, 0.5
      %v1842 = vmul.f32 %v1747, 0.5
      %v1843 = vtanh.pop %v1842
      %v1844 = vmul.f32 %v1843, 0.5
      %v1845 = vadd.f32 %v1844, 0.5
      %v1846 = vtanh.pop %v1816
      %v1847 = vmul.f32 %v1818, 0.5
      %v1848 = vtanh.pop %v1847
      %v1849 = vmul.f32 %v1848, 0.5
      %v1850 = vadd.f32 %v1849, 0.5
      %v1851 = vmul.f32 %v1845, %v1517
      %v1852 = vmul.f32 %v1841, %v1846
      %v1853 = vadd.f32 %v1851, %v1852
      %v1854 = vtanh.pop %v1853
      %v1855 = vmul.f32 %v1850, %v1854
      %s1856 = scalar_select %p1523, 1, 0
      %v1857 = vstv %s1856
      %vm1858 = vcmp.eq.s32.totalorder %v1857, 1
      %v1859 = vsel %vm1858, %v1837, %v1511
      %v1860 = vsel %vm1858, %v1835, %v1512
      %s1861 = scalar_select %p1525, 1, 0
      %v1862 = vstv %s1861
      %vm1863 = vcmp.eq.s32.totalorder %v1862, 1
      %v1864 = vsel %vm1863, %v1855, %v1516
      %v1865 = vsel %vm1863, %v1853, %v1517
      %s1866 = scalar_lea.vmem %s326, 24
      %1867 = vst [vmem:[%s1866] sm:$0xff] %v1859
      %s1868 = scalar_lea.vmem %s333, 8
      %1869 = vst [vmem:[%s1868] sm:$0xff] %v1864
      %s1870 = sadd.s32 %s472, 4
      %p1871 = scmp.lt.s32.totalorder %s1870, 12
      %p1872 = scmp.lt.s32.totalorder %s474, 12
      %s1873 = scalar_lea.vmem %s309, 128
      %v1874 = vld [vmem:[%s1873] sm:$0xff]
      %v1875 = vld [vmem:[%s1873 + $0x8] sm:$0xff]
      %v1876 = vld [vmem:[%s1873 + $0x10] sm:$0xff]
      %v1877 = vld [vmem:[%s1873 + $0x18] sm:$0xff]
      %1878 = vmatprep.subr.mxu0 %v345
      %1879 = vmatpush1.msra.mxu0 %v344
      %1880 = vmatprep.subr.mxu0 %v349
      %1881 = vmatpush1.msra.mxu0 %v348
      %1882 = vmatprep.subr.mxu0 %v353
      %1883 = vmatpush1.msra.mxu0 %v352
      %1884 = vmatprep.subr.mxu0 %v357
      %1885 = vmatpush1.msra.mxu0 %v356
      %1886 = vmatprep.subr.mxu0 %v361
      %1887 = vmatpush1.msra.mxu0 %v360
      %1888 = vmatprep.subr.mxu0 %v365
      %1889 = vmatpush1.msra.mxu0 %v364
      %1890 = vmatprep.subr.mxu0 %v369
      %1891 = vmatpush1.msra.mxu0 %v368
      %1892 = vmatprep.subr.mxu0 %v373
      %1893 = vmatpush1.msra.mxu0 %v372
      %1894 = vmatprep.subr.mxu0 %v377
      %1895 = vmatpush1.msra.mxu0 %v376
      %1896 = vmatprep.subr.mxu0 %v381
      %1897 = vmatpush1.msra.mxu0 %v380
      %1898 = vmatprep.subr.mxu0 %v385
      %1899 = vmatpush1.msra.mxu0 %v384
      %1900 = vmatprep.subr.mxu0 %v389
      %1901 = vmatpush1.msra.mxu0 %v388
      %1902 = vmatprep.subr.mxu0 %v393
      %1903 = vmatpush1.msra.mxu0 %v392
      %1904 = vmatprep.subr.mxu0 %v397
      %1905 = vmatpush1.msra.mxu0 %v396
      %1906 = vmatprep.subr.mxu0 %v401
      %1907 = vmatpush1.msra.mxu0 %v400
      %1908 = vmatprep.subr.mxu0 %v405
      %1909 = vmatpush1.msra.mxu0 %v404
      %1910 = vmatprep.subr.mxu0 0.0
      %1911 = vmatpush1.msra.mxu0 0.0
      %1912 = vmatprep.subr.mxu0 0.0
      %1913 = vmatpush1.msra.mxu0 0.0
      %1914 = vmatprep.subr.mxu0 0.0
      %1915 = vmatpush1.msra.mxu0 0.0
      %1916 = vmatprep.subr.mxu0 0.0
      %1917 = vmatpush1.msra.mxu0 0.0
      %1918 = vmatprep.subr.mxu0 0.0
      %1919 = vmatpush1.msra.mxu0 0.0
      %1920 = vmatprep.subr.mxu0 0.0
      %1921 = vmatpush1.msra.mxu0 0.0
      %1922 = vmatprep.subr.mxu0 0.0
      %1923 = vmatpush1.msra.mxu0 0.0
      %1924 = vmatprep.subr.mxu0 0.0
      %1925 = vmatpush1.msra.mxu0 0.0
      %1926 = vmatprep.subr.mxu0 0.0
      %1927 = vmatpush1.msra.mxu0 0.0
      %1928 = vmatprep.subr.mxu0 0.0
      %1929 = vmatpush1.msra.mxu0 0.0
      %1930 = vmatprep.subr.mxu0 0.0
      %1931 = vmatpush1.msra.mxu0 0.0
      %1932 = vmatprep.subr.mxu0 0.0
      %1933 = vmatpush1.msra.mxu0 0.0
      %1934 = vmatprep.subr.mxu0 0.0
      %1935 = vmatpush1.msra.mxu0 0.0
      %1936 = vmatprep.subr.mxu0 0.0
      %1937 = vmatpush1.msra.mxu0 0.0
      %1938 = vmatprep.subr.mxu0 0.0
      %1939 = vmatpush1.msra.mxu0 0.0
      %1940 = vmatprep.subr.mxu0 0.0
      %1941 = vmatpush1.msra.mxu0 0.0
      %1942 = vmatprep.mubr.f32.mxu0 0.0
      %1943 = vmatmul.mubr.f32.gmra.mrb[0].mxu0 %v1859
      %v1944 = vpop.f32.mrb[0].mxu0
      %v1945 = vadd.f32 %v1874, %v1944
      %v1946 = vpop.f32.mrb[0].mxu0
      %v1947 = vadd.f32 %v1875, %v1946
      %1948 = vdwg.mxu0
      %1949 = vmatprep.subr.mxu0 %v347
      %1950 = vmatpush1.msra.mxu0 %v346
      %1951 = vmatprep.subr.mxu0 %v351
      %1952 = vmatpush1.msra.mxu0 %v350
      %1953 = vmatprep.subr.mxu0 %v355
      %1954 = vmatpush1.msra.mxu0 %v354
      %1955 = vmatprep.subr.mxu0 %v359
      %1956 = vmatpush1.msra.mxu0 %v358
      %1957 = vmatprep.subr.mxu0 %v363
      %1958 = vmatpush1.msra.mxu0 %v362
      %1959 = vmatprep.subr.mxu0 %v367
      %1960 = vmatpush1.msra.mxu0 %v366
      %1961 = vmatprep.subr.mxu0 %v371
      %1962 = vmatpush1.msra.mxu0 %v370
      %1963 = vmatprep.subr.mxu0 %v375
      %1964 = vmatpush1.msra.mxu0 %v374
      %1965 = vmatprep.subr.mxu0 %v379
      %1966 = vmatpush1.msra.mxu0 %v378
      %1967 = vmatprep.subr.mxu0 %v383
      %1968 = vmatpush1.msra.mxu0 %v382
      %1969 = vmatprep.subr.mxu0 %v387
      %1970 = vmatpush1.msra.mxu0 %v386
      %1971 = vmatprep.subr.mxu0 %v391
      %1972 = vmatpush1.msra.mxu0 %v390
      %1973 = vmatprep.subr.mxu0 %v395
      %1974 = vmatpush1.msra.mxu0 %v394
      %1975 = vmatprep.subr.mxu0 %v399
      %1976 = vmatpush1.msra.mxu0 %v398
      %1977 = vmatprep.subr.mxu0 %v403
      %1978 = vmatpush1.msra.mxu0 %v402
      %1979 = vmatprep.subr.mxu0 %v407
      %1980 = vmatpush1.msra.mxu0 %v406
      %1981 = vmatprep.subr.mxu0 0.0
      %1982 = vmatpush1.msra.mxu0 0.0
      %1983 = vmatprep.subr.mxu0 0.0
      %1984 = vmatpush1.msra.mxu0 0.0
      %1985 = vmatprep.subr.mxu0 0.0
      %1986 = vmatpush1.msra.mxu0 0.0
      %1987 = vmatprep.subr.mxu0 0.0
      %1988 = vmatpush1.msra.mxu0 0.0
      %1989 = vmatprep.subr.mxu0 0.0
      %1990 = vmatpush1.msra.mxu0 0.0
      %1991 = vmatprep.subr.mxu0 0.0
      %1992 = vmatpush1.msra.mxu0 0.0
      %1993 = vmatprep.subr.mxu0 0.0
      %1994 = vmatpush1.msra.mxu0 0.0
      %1995 = vmatprep.subr.mxu0 0.0
      %1996 = vmatpush1.msra.mxu0 0.0
      %1997 = vmatprep.subr.mxu0 0.0
      %1998 = vmatpush1.msra.mxu0 0.0
      %1999 = vmatprep.subr.mxu0 0.0
      %2000 = vmatpush1.msra.mxu0 0.0
      %2001 = vmatprep.subr.mxu0 0.0
      %2002 = vmatpush1.msra.mxu0 0.0
      %2003 = vmatprep.subr.mxu0 0.0
      %2004 = vmatpush1.msra.mxu0 0.0
      %2005 = vmatprep.subr.mxu0 0.0
      %2006 = vmatpush1.msra.mxu0 0.0
      %2007 = vmatprep.subr.mxu0 0.0
      %2008 = vmatpush1.msra.mxu0 0.0
      %2009 = vmatprep.subr.mxu0 0.0
      %2010 = vmatpush1.msra.mxu0 0.0
      %2011 = vmatprep.subr.mxu0 0.0
      %2012 = vmatpush1.msra.mxu0 0.0
      %2013 = vmatprep.mubr.f32.mxu0 0.0
      %2014 = vmatmul.mubr.f32.gmra.mrb[0].mxu0 %v1859
      %v2015 = vpop.f32.mrb[0].mxu0
      %v2016 = vadd.f32 %v1876, %v2015
      %v2017 = vpop.f32.mrb[0].mxu0
      %v2018 = vadd.f32 %v1877, %v2017
      %2019 = vdwg.mxu0
      %v2020 = vld [vmem:[%s318] sm:$0xff]
      %v2021 = vld [vmem:[%s318 + $0x8] sm:$0xff]
      %v2022 = vld [vmem:[%s318 + $0x10] sm:$0xff]
      %v2023 = vld [vmem:[%s318 + $0x18] sm:$0xff]
      %2024 = vmatprep.subr.mxu0 %v409
      %2025 = vmatpush1.msra.mxu0 %v408
      %2026 = vmatprep.subr.mxu0 %v413
      %2027 = vmatpush1.msra.mxu0 %v412
      %2028 = vmatprep.subr.mxu0 %v417
      %2029 = vmatpush1.msra.mxu0 %v416
      %2030 = vmatprep.subr.mxu0 %v421
      %2031 = vmatpush1.msra.mxu0 %v420
      %2032 = vmatprep.subr.mxu0 %v425
      %2033 = vmatpush1.msra.mxu0 %v424
      %2034 = vmatprep.subr.mxu0 %v429
      %2035 = vmatpush1.msra.mxu0 %v428
      %2036 = vmatprep.subr.mxu0 %v433
      %2037 = vmatpush1.msra.mxu0 %v432
      %2038 = vmatprep.subr.mxu0 %v437
      %2039 = vmatpush1.msra.mxu0 %v436
      %2040 = vmatprep.subr.mxu0 %v441
      %2041 = vmatpush1.msra.mxu0 %v440
      %2042 = vmatprep.subr.mxu0 %v445
      %2043 = vmatpush1.msra.mxu0 %v444
      %2044 = vmatprep.subr.mxu0 %v449
      %2045 = vmatpush1.msra.mxu0 %v448
      %2046 = vmatprep.subr.mxu0 %v453
      %2047 = vmatpush1.msra.mxu0 %v452
      %2048 = vmatprep.subr.mxu0 %v457
      %2049 = vmatpush1.msra.mxu0 %v456
      %2050 = vmatprep.subr.mxu0 %v461
      %2051 = vmatpush1.msra.mxu0 %v460
      %2052 = vmatprep.subr.mxu0 %v465
      %2053 = vmatpush1.msra.mxu0 %v464
      %2054 = vmatprep.subr.mxu0 %v469
      %2055 = vmatpush1.msra.mxu0 %v468
      %2056 = vmatprep.subr.mxu0 0.0
      %2057 = vmatpush1.msra.mxu0 0.0
      %2058 = vmatprep.subr.mxu0 0.0
      %2059 = vmatpush1.msra.mxu0 0.0
      %2060 = vmatprep.subr.mxu0 0.0
      %2061 = vmatpush1.msra.mxu0 0.0
      %2062 = vmatprep.subr.mxu0 0.0
      %2063 = vmatpush1.msra.mxu0 0.0
      %2064 = vmatprep.subr.mxu0 0.0
      %2065 = vmatpush1.msra.mxu0 0.0
      %2066 = vmatprep.subr.mxu0 0.0
      %2067 = vmatpush1.msra.mxu0 0.0
      %2068 = vmatprep.subr.mxu0 0.0
      %2069 = vmatpush1.msra.mxu0 0.0
      %2070 = vmatprep.subr.mxu0 0.0
      %2071 = vmatpush1.msra.mxu0 0.0
      %2072 = vmatprep.subr.mxu0 0.0
      %2073 = vmatpush1.msra.mxu0 0.0
      %2074 = vmatprep.subr.mxu0 0.0
      %2075 = vmatpush1.msra.mxu0 0.0
      %2076 = vmatprep.subr.mxu0 0.0
      %2077 = vmatpush1.msra.mxu0 0.0
      %2078 = vmatprep.subr.mxu0 0.0
      %2079 = vmatpush1.msra.mxu0 0.0
      %2080 = vmatprep.subr.mxu0 0.0
      %2081 = vmatpush1.msra.mxu0 0.0
      %2082 = vmatprep.subr.mxu0 0.0
      %2083 = vmatpush1.msra.mxu0 0.0
      %2084 = vmatprep.subr.mxu0 0.0
      %2085 = vmatpush1.msra.mxu0 0.0
      %2086 = vmatprep.subr.mxu0 0.0
      %2087 = vmatpush1.msra.mxu0 0.0
      %2088 = vmatprep.mubr.f32.mxu0 0.0
      %2089 = vmatmul.mubr.f32.gmra.mrb[0].mxu0 %v1864
      %v2090 = vpop.f32.mrb[0].mxu0
      %v2091 = vadd.f32 %v2020, %v2090
      %v2092 = vpop.f32.mrb[0].mxu0
      %v2093 = vadd.f32 %v2021, %v2092
      %2094 = vdwg.mxu0
      %2095 = vmatprep.subr.mxu0 %v411
      %2096 = vmatpush1.msra.mxu0 %v410
      %2097 = vmatprep.subr.mxu0 %v415
      %2098 = vmatpush1.msra.mxu0 %v414
      %2099 = vmatprep.subr.mxu0 %v419
      %2100 = vmatpush1.msra.mxu0 %v418
      %2101 = vmatprep.subr.mxu0 %v423
      %2102 = vmatpush1.msra.mxu0 %v422
      %2103 = vmatprep.subr.mxu0 %v427
      %2104 = vmatpush1.msra.mxu0 %v426
      %2105 = vmatprep.subr.mxu0 %v431
      %2106 = vmatpush1.msra.mxu0 %v430
      %2107 = vmatprep.subr.mxu0 %v435
      %2108 = vmatpush1.msra.mxu0 %v434
      %2109 = vmatprep.subr.mxu0 %v439
      %2110 = vmatpush1.msra.mxu0 %v438
      %2111 = vmatprep.subr.mxu0 %v443
      %2112 = vmatpush1.msra.mxu0 %v442
      %2113 = vmatprep.subr.mxu0 %v447
      %2114 = vmatpush1.msra.mxu0 %v446
      %2115 = vmatprep.subr.mxu0 %v451
      %2116 = vmatpush1.msra.mxu0 %v450
      %2117 = vmatprep.subr.mxu0 %v455
      %2118 = vmatpush1.msra.mxu0 %v454
      %2119 = vmatprep.subr.mxu0 %v459
      %2120 = vmatpush1.msra.mxu0 %v458
      %2121 = vmatprep.subr.mxu0 %v463
      %2122 = vmatpush1.msra.mxu0 %v462
      %2123 = vmatprep.subr.mxu0 %v467
      %2124 = vmatpush1.msra.mxu0 %v466
      %2125 = vmatprep.subr.mxu0 %v471
      %2126 = vmatpush1.msra.mxu0 %v470
      %2127 = vmatprep.subr.mxu0 0.0
      %2128 = vmatpush1.msra.mxu0 0.0
      %2129 = vmatprep.subr.mxu0 0.0
      %2130 = vmatpush1.msra.mxu0 0.0
      %2131 = vmatprep.subr.mxu0 0.0
      %2132 = vmatpush1.msra.mxu0 0.0
      %2133 = vmatprep.subr.mxu0 0.0
      %2134 = vmatpush1.msra.mxu0 0.0
      %2135 = vmatprep.subr.mxu0 0.0
      %2136 = vmatpush1.msra.mxu0 0.0
      %2137 = vmatprep.subr.mxu0 0.0
      %2138 = vmatpush1.msra.mxu0 0.0
      %2139 = vmatprep.subr.mxu0 0.0
      %2140 = vmatpush1.msra.mxu0 0.0
      %2141 = vmatprep.subr.mxu0 0.0
      %2142 = vmatpush1.msra.mxu0 0.0
      %2143 = vmatprep.subr.mxu0 0.0
      %2144 = vmatpush1.msra.mxu0 0.0
      %2145 = vmatprep.subr.mxu0 0.0
      %2146 = vmatpush1.msra.mxu0 0.0
      %2147 = vmatprep.subr.mxu0 0.0
      %2148 = vmatpush1.msra.mxu0 0.0
      %2149 = vmatprep.subr.mxu0 0.0
      %2150 = vmatpush1.msra.mxu0 0.0
      %2151 = vmatprep.subr.mxu0 0.0
      %2152 = vmatpush1.msra.mxu0 0.0
      %2153 = vmatprep.subr.mxu0 0.0
      %2154 = vmatpush1.msra.mxu0 0.0
      %2155 = vmatprep.subr.mxu0 0.0
      %2156 = vmatpush1.msra.mxu0 0.0
      %2157 = vmatprep.subr.mxu0 0.0
      %2158 = vmatpush1.msra.mxu0 0.0
      %2159 = vmatprep.mubr.f32.mxu0 0.0
      %2160 = vmatmul.mubr.f32.gmra.mrb[0].mxu0 %v1864
      %v2161 = vpop.f32.mrb[0].mxu0
      %v2162 = vadd.f32 %v2022, %v2161
      %v2163 = vpop.f32.mrb[0].mxu0
      %v2164 = vadd.f32 %v2023, %v2163
      %2165 = vdwg.mxu0
      %v2166 = vmul.f32 %v1945, 0.5
      %v2167 = vtanh.pop %v2166
      %v2168 = vmul.f32 %v2167, 0.5
      %v2169 = vadd.f32 %v2168, 0.5
      %v2170 = vmul.f32 %v1947, 0.5
      %v2171 = vtanh.pop %v2170
      %v2172 = vmul.f32 %v2171, 0.5
      %v2173 = vadd.f32 %v2172, 0.5
      %v2174 = vtanh.pop %v2016
      %v2175 = vmul.f32 %v2018, 0.5
      %v2176 = vtanh.pop %v2175
      %v2177 = vmul.f32 %v2176, 0.5
      %v2178 = vadd.f32 %v2177, 0.5
      %v2179 = vmul.f32 %v2173, %v1860
      %v2180 = vmul.f32 %v2169, %v2174
      %v2181 = vadd.f32 %v2179, %v2180
      %v2182 = vtanh.pop %v2181
      %v2183 = vmul.f32 %v2178, %v2182
      %v2184 = vmul.f32 %v2091, 0.5
      %v2185 = vtanh.pop %v2184
      %v2186 = vmul.f32 %v2185, 0.5
      %v2187 = vadd.f32 %v2186, 0.5
      %v2188 = vmul.f32 %v2093, 0.5
      %v2189 = vtanh.pop %v2188
      %v2190 = vmul.f32 %v2189, 0.5
      %v2191 = vadd.f32 %v2190, 0.5
      %v2192 = vtanh.pop %v2162
      %v2193 = vmul.f32 %v2164, 0.5
      %v2194 = vtanh.pop %v2193
      %v2195 = vmul.f32 %v2194, 0.5
      %v2196 = vadd.f32 %v2195, 0.5
      %v2197 = vmul.f32 %v2191, %v1865
      %v2198 = vmul.f32 %v2187, %v2192
      %v2199 = vadd.f32 %v2197, %v2198
      %v2200 = vtanh.pop %v2199
      %v2201 = vmul.f32 %v2196, %v2200
      %s2202 = scalar_select %p1871, 1, 0
      %v2203 = vstv %s2202
      %vm2204 = vcmp.eq.s32.totalorder %v2203, 1
      %v2205 = vsel %vm2204, %v2183, %v1859
      %v2206 = vsel %vm2204, %v2181, %v1860
      %s2207 = scalar_select %p1872, 1, 0
      %v2208 = vstv %s2207
      %vm2209 = vcmp.eq.s32.totalorder %v2208, 1
      %v2210 = vsel %vm2209, %v2201, %v1864
      %v2211 = vsel %vm2209, %v2199, %v1865
      %s2212 = scalar_lea.vmem %s326, 32
      %2213 = vst [vmem:[%s2212] sm:$0xff] %v2205
      %2214 = vst [vmem:[%s333] sm:$0xff] %v2210
      %2215 = vst [vmem:[#allocation2] sm:$0xff] %v2205
      %2216 = vst [vmem:[#allocation3] sm:$0xff] %v2206
      %2217 = vst [vmem:[%s477] sm:$0xff] %v2210
      %2218 = vst [vmem:[%s479] sm:$0xff] %v2211
      %p2219 = scmp.eq.s32.totalorder %s19, 2
      // Predicated region
      $region41: #{protein_lstm_encoder.3} parent=35 // pred_check
        %p2220 = pneg %p2219
      $region42: #{protein_lstm_encoder.3} parent=35 // pred_check_branch
        %2222 = sbr.rel (%p2220) target = $region44
      $region43: #{protein_lstm_encoder.3} parent=35 // pred_region
        %2223 = vst [vmem:[%s6] sm:$0xff] %v2205
        %2224 = vst [vmem:[%s7] sm:$0xff] %v2210
      $region44: #{protein_lstm_encoder.3} parent=35 // pred_fallthru
        _
      %s2225 = smul.u32 5, %s19
      %p2226 = scmp.lt.s32.totalorder %s2225, 14
      %s2227 = scalar_select %p2226, %s2225, 14
      %s2228 = smul.addr %s2227, 8
      %s2229 = scalar_lea.vmem %s4, %s2228
      %s2230 = ssub.s32 2, %s19
      %s2231 = smul.u32 5, %s2230
      %p2232 = scmp.lt.s32.totalorder %s2231, 14
      %s2233 = scalar_select %p2232, %s2231, 14
      %s2234 = smul.addr %s2233, 8
      %s2235 = scalar_lea.vmem %s5, %s2234
      // Predicated region
      $region45: #{protein_lstm_encoder.3} parent=35 // pred_check
        %p2236 = pneg %p133
      $region46: #{protein_lstm_encoder.3} parent=35 // pred_check_branch
        %2238 = sbr.rel (%p2236) target = $region48
      $region47: #{protein_lstm_encoder.3} parent=35 // pred_region
        %s2239 = smul.u32 5, %s19
      $region48: #{protein_lstm_encoder.3} parent=35 // pred_fallthru
        _
      // Predicated region
      $region49: #{protein_lstm_encoder.3} parent=35 // pred_check
        %p2240 = pneg %p161
      $region50: #{protein_lstm_encoder.3} parent=35 // pred_check_branch
        %2242 = sbr.rel (%p2240) target = $region52
      $region51: #{protein_lstm_encoder.3} parent=35 // pred_region
        %s2243 = ssub.s32 2, %s19
        %s2244 = smul.u32 5, %s2243
      $region52: #{protein_lstm_encoder.3} parent=35 // pred_fallthru
        _
      // Predicated region
      $region53: #{protein_lstm_encoder.3} parent=35 // pred_check
        %p2245 = pneg %p182
      $region54: #{protein_lstm_encoder.3} parent=35 // pred_check_branch
        %2247 = sbr.rel (%p2245) target = $region56
      $region55: #{protein_lstm_encoder.3} parent=35 // pred_region
        _
      $region56: #{protein_lstm_encoder.3} parent=35 // pred_fallthru
        _
      // Predicated region
      $region57: #{protein_lstm_encoder.3} parent=35 // pred_check
        %p2248 = pneg %p203
      $region58: #{protein_lstm_encoder.3} parent=35 // pred_check_branch
        %2250 = sbr.rel (%p2248) target = $region60
      $region59: #{protein_lstm_encoder.3} parent=35 // pred_region
        _
      $region60: #{protein_lstm_encoder.3} parent=35 // pred_fallthru
        _
      // Predicated region
      $region61: #{protein_lstm_encoder.3} parent=35 // pred_check
        %p2251 = pneg %p182
      $region62: #{protein_lstm_encoder.3} parent=35 // pred_check_branch
        %2253 = sbr.rel (%p2251) target = $region64
      $region63: #{protein_lstm_encoder.3} parent=35 // pred_region
        _
      $region64: #{protein_lstm_encoder.3} parent=35 // pred_fallthru
        _
      // Predicated region
      $region65: #{protein_lstm_encoder.3} parent=35 // pred_check
        %p2254 = pneg %p203
      $region66: #{protein_lstm_encoder.3} parent=35 // pred_check_branch
        %2256 = sbr.rel (%p2254) target = $region68
      $region67: #{protein_lstm_encoder.3} parent=35 // pred_region
        _
      $region68: #{protein_lstm_encoder.3} parent=35 // pred_fallthru
        _
    $region36: #{protein_lstm_encoder.3} parent=5 // pred_fallthru
      _
    %p2257 = scmp.le.s32.totalorder 2, %s14
    // Predicated region
    $region69: #{protein_lstm_encoder.3} parent=5 // pred_check
      %p2258 = pneg %p2257
    $region70: #{protein_lstm_encoder.3} parent=5 // pred_check_branch
      %2260 = sbr.rel (%p2258) target = $region72
    $region71: #{protein_lstm_encoder.3} parent=5 // pred_region
      %s2261 = ssub.s32 %s14, 2
      // Predicated region
      $region73: #{protein_lstm_encoder.3} parent=71 // pred_check
        %p2262 = pneg %p139
      $region74: #{protein_lstm_encoder.3} parent=71 // pred_check_branch
        %2264 = sbr.rel (%p2262) target = $region76
      $region75: #{protein_lstm_encoder.3} parent=71 // pred_region
        %s2265 = smul.u32 5, %s20
        %p2266 = scmp.lt.s32.totalorder %s2265, 14
        %s2267 = scalar_select %p2266, %s2265, 14
        %s2268 = smul.addr %s2267, 8
        %s2269 = scalar_lea.vmem %s4, %s2268
      $region76: #{protein_lstm_encoder.3} parent=71 // pred_fallthru
        _
      // Predicated region
      $region77: #{protein_lstm_encoder.3} parent=71 // pred_check
        %p2270 = pneg %p167
      $region78: #{protein_lstm_encoder.3} parent=71 // pred_check_branch
        %2272 = sbr.rel (%p2270) target = $region80
      $region79: #{protein_lstm_encoder.3} parent=71 // pred_region
        %s2273 = ssub.s32 2, %s20
        %s2274 = smul.u32 5, %s2273
        %p2275 = scmp.lt.s32.totalorder %s2274, 14
        %s2276 = scalar_select %p2275, %s2274, 14
        %s2277 = smul.addr %s2276, 8
        %s2278 = scalar_lea.vmem %s5, %s2277
      $region80: #{protein_lstm_encoder.3} parent=71 // pred_fallthru
        _
    $region72: #{protein_lstm_encoder.3} parent=5 // pred_fallthru
      _
  $region6: #{protein_lstm_encoder.3} parent=0 // loop_footer
    %s18 = sadd.s32 1, %s14
  $region7: #{protein_lstm_encoder.3} parent=0 // loop_footer_branch
    %13 = sbr.rel target = $region3
  $region8: #{protein_lstm_encoder.3} parent=0 // loop_exit
    _

</llo_original>
